<compile_context>
chip_gen: v6e
topology: v6e:2x2x1
jax: 0.10.0
libtpu: 0.0.40
codegen_flags: <defaults>
</compile_context>

<pallas_src>
import functools

import jax
import jax.numpy as jnp
from jax import lax
from jax.experimental import pallas as pl
from jax.experimental.pallas import tpu as pltpu


def _round_up(x, m):
    return ((x + m - 1) // m) * m


# ----------------------------------------------------------------------------
# Kernel: one (batch block, time chunk) step of the bidirectional GRU.
# ----------------------------------------------------------------------------
def gru_block_kernel(
    xf_ref,     # (C, Bb, Fp)   bf16  forward-time chunk k
    xb_ref,     # (C, Bb, Fp)   bf16  backward-time chunk K-1-k
    len_ref,    # (Bb, 1)       int32
    h0_ref,     # (2, Bb, Hp)   f32
    wi_ref,     # (2, Fp, 3Hp)  bf16  BN-folded input weights (dir, in, r|z|n)
    bi_ref,     # (2, 1, 3Hp)   f32   BN-folded input biases
    wh_ref,     # (Hp, 6Hp)     bf16  merged recurrent weights [fwd 3Hp | bwd 3Hp]
    bh_ref,     # (2, 1, 3Hp)   f32
    yf_ref,     # out (C, Bb, Hp) f32  forward outputs, time chunk k
    yb_ref,     # out (C, Bb, Hp) f32  backward outputs, time chunk K-1-k
    hlast_ref,  # out (2, Bb, Hp) f32
    h_sc,       # scratch (2*Bb, Hp)   f32  carried hidden [fwd rows | bwd rows]
    gxf_sc,     # scratch (C, Bb, 3Hp) f32
    gxb_sc,     # scratch (C, Bb, 3Hp) f32
    *, chunk, batch_blk, hidden_pad, seq_len_pad,
):
    C, Bb, Hp, Tp = chunk, batch_blk, hidden_pad, seq_len_pad
    k = pl.program_id(1)

    # carried hidden state: initialise from h0 on the first time chunk
    @pl.when(k == 0)
    def _():
        h_sc[...] = h0_ref[...].reshape(2 * Bb, Hp)

    # ---- hoisted, BN-folded input projection for this chunk (both dirs) ----
    # one (C*Bb, Fp) x (Fp, 3Hp) GEMM per direction; BN already folded into wi/bi
    xf = xf_ref[...].reshape(C * Bb, -1)                     # bf16
    xb = xb_ref[...].reshape(C * Bb, -1)
    gxf_sc[...] = (jnp.dot(xf, wi_ref[0], preferred_element_type=jnp.float32)
                   + bi_ref[0]).reshape(C, Bb, 3 * Hp)
    gxb_sc[...] = (jnp.dot(xb, wi_ref[1], preferred_element_type=jnp.float32)
                   + bi_ref[1]).reshape(C, Bb, 3 * Hp)

    lens = len_ref[...]                                      # (Bb, 1) int32
    wh = wh_ref[...]                                         # (Hp, 6Hp) bf16
    bh_f = bh_ref[0]                                         # (1, 3Hp)
    bh_b = bh_ref[1]
    t0 = k * C                                               # global time of local step 0

    def step(i, h_all):
        # ONE merged MXU op for both directions: (2Bb,Hp) x (Hp,6Hp)
        gh_all = jnp.dot(h_all.astype(jnp.bfloat16), wh,
                         preferred_element_type=jnp.float32)  # (2Bb, 6Hp)
        h_f = h_all[:Bb]
        h_b = h_all[Bb:]
        gh_f = gh_all[:Bb, :3 * Hp] + bh_f                    # fwd diag block
        gh_b = gh_all[Bb:, 3 * Hp:] + bh_b                    # bwd diag block

        # ---- forward direction, global time t = t0 + i ----
        gx = gxf_sc[i]                                        # (Bb, 3Hp)
        r = jax.nn.sigmoid(gx[:, :Hp] + gh_f[:, :Hp])
        z = jax.nn.sigmoid(gx[:, Hp:2 * Hp] + gh_f[:, Hp:2 * Hp])
        n = jnp.tanh(gx[:, 2 * Hp:] + r * gh_f[:, 2 * Hp:])
        hf_new = (1.0 - z) * n + z * h_f
        valid_f = lens > (t0 + i)                             # (Bb,1) bool
        h_f = jnp.where(valid_f, hf_new, h_f)                 # freeze past len
        yf_ref[i] = jnp.where(valid_f, hf_new, 0.0)           # padded -> 0

        # ---- backward direction, global time tb = Tp - 1 - (t0 + i) ----
        tb = Tp - 1 - t0 - i
        gx = gxb_sc[C - 1 - i]
        r = jax.nn.sigmoid(gx[:, :Hp] + gh_b[:, :Hp])
        z = jax.nn.sigmoid(gx[:, Hp:2 * Hp] + gh_b[:, Hp:2 * Hp])
        n = jnp.tanh(gx[:, 2 * Hp:] + r * gh_b[:, 2 * Hp:])
        hb_new = (1.0 - z) * n + z * h_b
        valid_b = lens > tb
        h_b = jnp.where(valid_b, hb_new, h_b)
        yb_ref[C - 1 - i] = jnp.where(valid_b, hb_new, 0.0)

        return jnp.concatenate([h_f, h_b], axis=0)

    # bounded unroll: only one time chunk, the grid provides the outer loop
    h_final = lax.fori_loop(0, C, step, h_sc[...], unroll=True)
    h_sc[...] = h_final

    @pl.when(k == pl.num_programs(1) - 1)
    def _():
        hlast_ref[...] = h_final.reshape(2, Bb, Hp)


# ----------------------------------------------------------------------------
# Wrapper: weight packing, BN fold, padding, pallas_call.
# ----------------------------------------------------------------------------
def _pack_gate_cols(w, in_dim_pad, H, H_pad):
    """torch gate-stacked (3H, in_dim) -> (in_dim_pad, 3*H_pad), gate g in
    columns [g*H_pad, g*H_pad + H) so gate slices stay 128-lane aligned."""
    in_dim = w.shape[1]
    out = jnp.zeros((in_dim_pad, 3 * H_pad), jnp.float32)
    for g in range(3):
        out = out.at[:in_dim, g * H_pad:g * H_pad + H].set(w[g * H:(g + 1) * H, :].T)
    return out


def _pack_gate_bias(b, H, H_pad):
    out = jnp.zeros((1, 3 * H_pad), jnp.float32)
    for g in range(3):
        out = out.at[0, g * H_pad:g * H_pad + H].set(b[g * H:(g + 1) * H])
    return out


def gru_block_forward(x, h_last, lengths, params, *, time_chunk=8, batch_block=None):
    B, T, F = x.shape
    H = h_last.shape[-1]
    eps = 1e-5

    Hp = _round_up(H, 128)                       # lane-dense gate slots / outputs
    Fp = _round_up(F, 128)
    Bb = _round_up(B, 8) if batch_block is None else batch_block   # sublane aligned
    Bp = _round_up(_round_up(B, 8), Bb)
    C = time_chunk
    Tp = _round_up(T, C)
    K = Tp // C
    NB = Bp // Bb

    # --- BatchNorm1d training-mode batch stats over all B*T frames (one pass) --
    xf32 = x.astype(jnp.float32).reshape(B * T, F)
    mean = jnp.mean(xf32, axis=0)
    var = jnp.maximum(jnp.mean(xf32 * xf32, axis=0) - mean * mean, 0.0)  # biased
    scale = params["bn_gamma"] * lax.rsqrt(var + eps)          # (F,)
    shift = params["bn_beta"] - mean * scale                   # (F,)

    # --- fold BN into the input projection, pack gates on 128-aligned slots ---
    wi_list, bi_list = [], []
    for d in range(2):
        w_ih = params["w_ih"][d]                               # (3H, F) torch layout
        b_ih = params["b_ih"][d]                               # (3H,)
        w_fold = w_ih * scale[None, :]                         # gx = (W*s)x + (W@shift + b)
        b_fold = b_ih + w_ih @ shift
        wi_list.append(_pack_gate_cols(w_fold, Fp, H, Hp))
        bi_list.append(_pack_gate_bias(b_fold, H, Hp))
    wi = jnp.stack(wi_list).astype(jnp.bfloat16)               # (2, Fp, 3Hp)
    bi = jnp.stack(bi_list)                                    # (2, 1, 3Hp)
    wh = jnp.concatenate(                                      # merged (Hp, 6Hp)
        [_pack_gate_cols(params["w_hh"][d], Hp, H, Hp) for d in range(2)],
        axis=1).astype(jnp.bfloat16)
    bh = jnp.stack([_pack_gate_bias(params["b_hh"][d], H, Hp) for d in range(2)])

    # --- time-major, padded, bf16 activations (BN lives in the folded weights) -
    x_tm = jnp.zeros((Tp, Bp, Fp), jnp.bfloat16)
    x_tm = x_tm.at[:T, :B, :F].set(jnp.transpose(x, (1, 0, 2)).astype(jnp.bfloat16))
    lens = jnp.zeros((Bp, 1), jnp.int32).at[:B, 0].set(lengths.astype(jnp.int32))
    h0 = jnp.zeros((2, Bp, Hp), jnp.float32).at[:, :B, :H].set(h_last.astype(jnp.float32))

    kernel = functools.partial(gru_block_kernel, chunk=C, batch_blk=Bb,
                               hidden_pad=Hp, seq_len_pad=Tp)

    yf, yb, h_out = pl.pallas_call(
        kernel,
        grid_spec=pltpu.PrefetchScalarGridSpec(
            num_scalar_prefetch=0,
            grid=(NB, K),                       # (batch blocks, time chunks)
            in_specs=[
                pl.BlockSpec((C, Bb, Fp), lambda b, k: (k, b, 0)),          # x fwd chunk
                pl.BlockSpec((C, Bb, Fp), lambda b, k: (K - 1 - k, b, 0)),  # x bwd chunk
                pl.BlockSpec((Bb, 1), lambda b, k: (b, 0)),                 # lengths
                pl.BlockSpec((2, Bb, Hp), lambda b, k: (0, b, 0)),          # h0
                pl.BlockSpec((2, Fp, 3 * Hp), lambda b, k: (0, 0, 0)),      # wi
                pl.BlockSpec((2, 1, 3 * Hp), lambda b, k: (0, 0, 0)),       # bi
                pl.BlockSpec((Hp, 6 * Hp), lambda b, k: (0, 0)),            # wh merged
                pl.BlockSpec((2, 1, 3 * Hp), lambda b, k: (0, 0, 0)),       # bh
            ],
            out_specs=[
                pl.BlockSpec((C, Bb, Hp), lambda b, k: (k, b, 0)),          # y fwd
                pl.BlockSpec((C, Bb, Hp), lambda b, k: (K - 1 - k, b, 0)),  # y bwd
                pl.BlockSpec((2, Bb, Hp), lambda b, k: (0, b, 0)),          # h_last
            ],
            scratch_shapes=[
                pltpu.VMEM((2 * Bb, Hp), jnp.float32),        # carried hidden state
                pltpu.VMEM((C, Bb, 3 * Hp), jnp.float32),     # fwd input projections
                pltpu.VMEM((C, Bb, 3 * Hp), jnp.float32),     # bwd input projections
            ],
        ),
        out_shape=(
            jax.ShapeDtypeStruct((Tp, Bp, Hp), jnp.float32),
            jax.ShapeDtypeStruct((Tp, Bp, Hp), jnp.float32),
            jax.ShapeDtypeStruct((2, Bp, Hp), jnp.float32),
        ),
        compiler_params=pltpu.CompilerParams(
            dimension_semantics=("parallel", "arbitrary"),    # batch sharded across TCs
            vmem_limit_bytes=32 * 1024 * 1024,                # fits v5e/v6e/v7x scoped VMEM
        ),
    )(x_tm, x_tm, lens, h0, wi, bi, wh, bh)

    # direction sum on the streamed outputs (single bandwidth-bound XLA add)
    y = (yf + yb)[:T, :B, :H]
    layer_hiddens = jnp.transpose(y, (1, 0, 2))               # (B, T, H)
    return layer_hiddens, h_out[:, :B, :H]


def init_params(key, F, H):
    """Parameters in the PyTorch nn.GRU / nn.BatchNorm1d layout."""
    k = 1.0 / jnp.sqrt(jnp.float32(H))
    keys = jax.random.split(key, 10)

    def u(kk, shape):
        return jax.random.uniform(kk, shape, jnp.float32, -k, k)

    return {
        "bn_gamma": 1.0 + 0.1 * jax.random.normal(keys[8], (F,), jnp.float32),
        "bn_beta": 0.1 * jax.random.normal(keys[9], (F,), jnp.float32),
        # per direction, gates stacked rows [r | z | n] (torch weight_ih/hh_l0)
        "w_ih": jnp.stack([u(keys[0], (3 * H, F)), u(keys[1], (3 * H, F))]),
        "w_hh": jnp.stack([u(keys[2], (3 * H, H)), u(keys[3], (3 * H, H))]),
        "b_ih": jnp.stack([u(keys[4], (3 * H,)), u(keys[5], (3 * H,))]),
        "b_hh": jnp.stack([u(keys[6], (3 * H,)), u(keys[7], (3 * H,))]),
    }


if __name__ == "__main__":
    B, T, F, H = 2, 8, 16, 32

    key = jax.random.PRNGKey(0)
    k_x, k_h, k_p = jax.random.split(key, 3)

    x = jax.random.normal(k_x, (B, T, F), jnp.float32)
    h0 = 0.1 * jax.random.normal(k_h, (2, B, H), jnp.float32)
    lengths = jnp.array([8, 5], dtype=jnp.int32)   # max(lengths) == T
    params = init_params(k_p, F, H)

    fwd = jax.jit(functools.partial(gru_block_forward, time_chunk=4))
    layer_hiddens, h_last = fwd(x, h0, lengths, params)
    jax.block_until_ready((layer_hiddens, h_last))

    assert layer_hiddens.shape == (B, T, H)
    assert h_last.shape == (2, B, H)
    assert bool(jnp.all(jnp.isfinite(layer_hiddens)))
    assert bool(jnp.all(jnp.isfinite(h_last)))
    # padded timesteps (t >= length) must be zero, as after pad_packed_sequence
    assert bool(jnp.all(layer_hiddens[1, 5:] == 0.0))

    print("KERNEL_OK")
</pallas_src>

<mosaic_0001>
module attributes {stable_mosaic.version = 11 : i64} {
  func.func @gru_block_kernel(%arg0: i32, %arg1: i32, %arg2: memref<4x8x128xbf16, #tpu.memory_space<vmem>>, %arg3: memref<4x8x128xbf16, #tpu.memory_space<vmem>>, %arg4: memref<8x1xi32, #tpu.memory_space<vmem>>, %arg5: memref<2x8x128xf32, #tpu.memory_space<vmem>>, %arg6: memref<2x128x384xbf16, #tpu.memory_space<vmem>>, %arg7: memref<2x1x384xf32, #tpu.memory_space<vmem>>, %arg8: memref<128x768xbf16, #tpu.memory_space<vmem>>, %arg9: memref<2x1x384xf32, #tpu.memory_space<vmem>>, %arg10: memref<4x8x128xf32, #tpu.memory_space<vmem>>, %arg11: memref<4x8x128xf32, #tpu.memory_space<vmem>>, %arg12: memref<2x8x128xf32, #tpu.memory_space<vmem>>, %arg13: memref<16x128xf32, #tpu.memory_space<vmem>>, %arg14: memref<4x8x384xf32, #tpu.memory_space<vmem>>, %arg15: memref<4x8x384xf32, #tpu.memory_space<vmem>>) attributes {dimension_semantics = [#tpu.dimension_semantics<parallel>, #tpu.dimension_semantics<arbitrary>], iteration_bounds = array<i64: 1, 2>, scalar_prefetch = 0 : i64, scratch_operands = 3 : i64, tpu.core_type = #tpu.core_type<tc>, window_params = [{transform_indices = @transform_0, window_bounds = array<i64: 4, 8, 128>}, {transform_indices = @transform_1, window_bounds = array<i64: 4, 8, 128>}, {transform_indices = @transform_2, window_bounds = array<i64: 8, 1>}, {transform_indices = @transform_3, window_bounds = array<i64: 2, 8, 128>}, {pipeline_mode = #tpu.pipeline_mode<synchronous>, transform_indices = @transform_4, window_bounds = array<i64: 2, 128, 384>}, {pipeline_mode = #tpu.pipeline_mode<synchronous>, transform_indices = @transform_5, window_bounds = array<i64: 2, 1, 384>}, {pipeline_mode = #tpu.pipeline_mode<synchronous>, transform_indices = @transform_6, window_bounds = array<i64: 128, 768>}, {pipeline_mode = #tpu.pipeline_mode<synchronous>, transform_indices = @transform_7, window_bounds = array<i64: 2, 1, 384>}, {transform_indices = @transform_8, window_bounds = array<i64: 4, 8, 128>}, {transform_indices = @transform_9, window_bounds = array<i64: 4, 8, 128>}, {transform_indices = @transform_10, window_bounds = array<i64: 2, 8, 128>}]} {
    %c0_i32 = arith.constant 0 : i32
    %0 = arith.cmpi eq, %arg1, %c0_i32 : i32
    %1 = arith.extui %0 : i1 to i32
    %c0_i32_0 = arith.constant 0 : i32
    %2 = arith.cmpi ne, %1, %c0_i32_0 : i32
    scf.if %2 {
      %c0_121 = arith.constant 0 : index
      %c0_122 = arith.constant 0 : index
      %c0_123 = arith.constant 0 : index
      %437 = vector.load %arg5[%c0_121, %c0_122, %c0_123] : memref<2x8x128xf32, #tpu.memory_space<vmem>>, vector<2x8x128xf32>
      %438 = vector.shape_cast %437 : vector<2x8x128xf32> to vector<16x128xf32>
      %c0_124 = arith.constant 0 : index
      %c0_125 = arith.constant 0 : index
      %439 = vector.load %arg13[%c0_124, %c0_125] : memref<16x128xf32, #tpu.memory_space<vmem>>, vector<16x128xf32>
      tpu.vector_store %arg13[%c0_124, %c0_125], %438 {strides = array<i32>} : memref<16x128xf32, #tpu.memory_space<vmem>>, vector<16x128xf32>,
    } else {
    }
    %c0 = arith.constant 0 : index
    %c0_1 = arith.constant 0 : index
    %c0_2 = arith.constant 0 : index
    %3 = vector.load %arg2[%c0, %c0_1, %c0_2] : memref<4x8x128xbf16, #tpu.memory_space<vmem>>, vector<4x8x128xbf16>
    %4 = vector.shape_cast %3 : vector<4x8x128xbf16> to vector<32x128xbf16>
    %c0_3 = arith.constant 0 : index
    %c0_4 = arith.constant 0 : index
    %c0_5 = arith.constant 0 : index
    %5 = vector.load %arg3[%c0_3, %c0_4, %c0_5] : memref<4x8x128xbf16, #tpu.memory_space<vmem>>, vector<4x8x128xbf16>
    %6 = vector.shape_cast %5 : vector<4x8x128xbf16> to vector<32x128xbf16>
    %c0_6 = arith.constant 0 : index
    %c0_7 = arith.constant 0 : index
    %c0_8 = arith.constant 0 : index
    %7 = vector.load %arg6[%c0_6, %c0_7, %c0_8] : memref<2x128x384xbf16, #tpu.memory_space<vmem>>, vector<1x128x384xbf16>
    %8 = vector.shape_cast %7 : vector<1x128x384xbf16> to vector<128x384xbf16>
    %cst = arith.constant dense<0.000000e+00> : vector<32x384xf32>
    %9 = tpu.matmul %4, %8, %cst {dimension_numbers = #tpu.dot_dimension_numbers<[1], [0], [0], [1], [0, 0, 1, 1], [], []>} : vector<32x128xbf16>, vector<128x384xbf16>, vector<32x384xf32> -> vector<32x384xf32>
    %c0_9 = arith.constant 0 : index
    %c0_10 = arith.constant 0 : index
    %c0_11 = arith.constant 0 : index
    %10 = vector.load %arg7[%c0_9, %c0_10, %c0_11] : memref<2x1x384xf32, #tpu.memory_space<vmem>>, vector<1x1x384xf32>
    %11 = vector.shape_cast %10 : vector<1x1x384xf32> to vector<1x384xf32>
    %12 = vector.broadcast %11 : vector<1x384xf32> to vector<32x384xf32>
    %13 = arith.addf %9, %12 : vector<32x384xf32>
    %14 = vector.shape_cast %13 : vector<32x384xf32> to vector<4x8x384xf32>
    %c0_12 = arith.constant 0 : index
    %c0_13 = arith.constant 0 : index
    %c0_14 = arith.constant 0 : index
    %15 = vector.load %arg14[%c0_12, %c0_13, %c0_14] : memref<4x8x384xf32, #tpu.memory_space<vmem>>, vector<4x8x384xf32>
    tpu.vector_store %arg14[%c0_12, %c0_13, %c0_14], %14 {strides = array<i32>} : memref<4x8x384xf32, #tpu.memory_space<vmem>>, vector<4x8x384xf32>,
    %c1 = arith.constant 1 : index
    %c0_15 = arith.constant 0 : index
    %c0_16 = arith.constant 0 : index
    %16 = vector.load %arg6[%c1, %c0_15, %c0_16] : memref<2x128x384xbf16, #tpu.memory_space<vmem>>, vector<1x128x384xbf16>
    %17 = vector.shape_cast %16 : vector<1x128x384xbf16> to vector<128x384xbf16>
    %cst_17 = arith.constant dense<0.000000e+00> : vector<32x384xf32>
    %18 = tpu.matmul %6, %17, %cst_17 {dimension_numbers = #tpu.dot_dimension_numbers<[1], [0], [0], [1], [0, 0, 1, 1], [], []>} : vector<32x128xbf16>, vector<128x384xbf16>, vector<32x384xf32> -> vector<32x384xf32>
    %c1_18 = arith.constant 1 : index
    %c0_19 = arith.constant 0 : index
    %c0_20 = arith.constant 0 : index
    %19 = vector.load %arg7[%c1_18, %c0_19, %c0_20] : memref<2x1x384xf32, #tpu.memory_space<vmem>>, vector<1x1x384xf32>
    %20 = vector.shape_cast %19 : vector<1x1x384xf32> to vector<1x384xf32>
    %21 = vector.broadcast %20 : vector<1x384xf32> to vector<32x384xf32>
    %22 = arith.addf %18, %21 : vector<32x384xf32>
    %23 = vector.shape_cast %22 : vector<32x384xf32> to vector<4x8x384xf32>
    %c0_21 = arith.constant 0 : index
    %c0_22 = arith.constant 0 : index
    %c0_23 = arith.constant 0 : index
    %24 = vector.load %arg15[%c0_21, %c0_22, %c0_23] : memref<4x8x384xf32, #tpu.memory_space<vmem>>, vector<4x8x384xf32>
    tpu.vector_store %arg15[%c0_21, %c0_22, %c0_23], %23 {strides = array<i32>} : memref<4x8x384xf32, #tpu.memory_space<vmem>>, vector<4x8x384xf32>,
    %c0_24 = arith.constant 0 : index
    %c0_25 = arith.constant 0 : index
    %25 = vector.load %arg4[%c0_24, %c0_25] : memref<8x1xi32, #tpu.memory_space<vmem>>, vector<8x1xi32>
    %c0_26 = arith.constant 0 : index
    %c0_27 = arith.constant 0 : index
    %26 = vector.load %arg8[%c0_26, %c0_27] : memref<128x768xbf16, #tpu.memory_space<vmem>>, vector<128x768xbf16>
    %c0_28 = arith.constant 0 : index
    %c0_29 = arith.constant 0 : index
    %c0_30 = arith.constant 0 : index
    %27 = vector.load %arg9[%c0_28, %c0_29, %c0_30] : memref<2x1x384xf32, #tpu.memory_space<vmem>>, vector<1x1x384xf32>
    %28 = vector.shape_cast %27 : vector<1x1x384xf32> to vector<1x384xf32>
    %c1_31 = arith.constant 1 : index
    %c0_32 = arith.constant 0 : index
    %c0_33 = arith.constant 0 : index
    %29 = vector.load %arg9[%c1_31, %c0_32, %c0_33] : memref<2x1x384xf32, #tpu.memory_space<vmem>>, vector<1x1x384xf32>
    %30 = vector.shape_cast %29 : vector<1x1x384xf32> to vector<1x384xf32>
    %c4_i32 = arith.constant 4 : i32
    %31 = arith.muli %arg1, %c4_i32 : i32
    %c0_34 = arith.constant 0 : index
    %c0_35 = arith.constant 0 : index
    %32 = vector.load %arg13[%c0_34, %c0_35] : memref<16x128xf32, #tpu.memory_space<vmem>>, vector<16x128xf32>
    %c0_i32_36 = arith.constant 0 : i32
    %33 = arith.truncf %32 : vector<16x128xf32> to vector<16x128xbf16>
    %cst_37 = arith.constant dense<0.000000e+00> : vector<16x768xf32>
    %34 = tpu.matmul %33, %26, %cst_37 {dimension_numbers = #tpu.dot_dimension_numbers<[1], [0], [0], [1], [0, 0, 1, 1], [], []>} : vector<16x128xbf16>, vector<128x768xbf16>, vector<16x768xf32> -> vector<16x768xf32>
    %35 = vector.extract_strided_slice %32 {offsets = [0, 0], sizes = [8, 128], strides = [1, 1]} : vector<16x128xf32> to vector<8x128xf32>
    %36 = vector.extract_strided_slice %32 {offsets = [8, 0], sizes = [8, 128], strides = [1, 1]} : vector<16x128xf32> to vector<8x128xf32>
    %37 = vector.extract_strided_slice %34 {offsets = [0, 0], sizes = [8, 384], strides = [1, 1]} : vector<16x768xf32> to vector<8x384xf32>
    %38 = vector.broadcast %28 : vector<1x384xf32> to vector<8x384xf32>
    %39 = arith.addf %37, %38 : vector<8x384xf32>
    %40 = vector.extract_strided_slice %34 {offsets = [8, 384], sizes = [8, 384], strides = [1, 1]} : vector<16x768xf32> to vector<8x384xf32>
    %41 = vector.broadcast %30 : vector<1x384xf32> to vector<8x384xf32>
    %42 = arith.addf %40, %41 : vector<8x384xf32>
    %43 = arith.index_cast %c0_i32_36 : i32 to index
    %c0_38 = arith.constant 0 : index
    %c0_39 = arith.constant 0 : index
    %44 = vector.load %arg14[%43, %c0_38, %c0_39] : memref<4x8x384xf32, #tpu.memory_space<vmem>>, vector<1x8x384xf32>
    %45 = vector.shape_cast %44 : vector<1x8x384xf32> to vector<8x384xf32>
    %46 = vector.extract_strided_slice %45 {offsets = [0, 0], sizes = [8, 128], strides = [1, 1]} : vector<8x384xf32> to vector<8x128xf32>
    %47 = vector.extract_strided_slice %39 {offsets = [0, 0], sizes = [8, 128], strides = [1, 1]} : vector<8x384xf32> to vector<8x128xf32>
    %48 = arith.addf %46, %47 : vector<8x128xf32>
    %49 = arith.negf %48 : vector<8x128xf32>
    %50 = math.exp %49 : vector<8x128xf32>
    %cst_40 = arith.constant 1.000000e+00 : f32
    %51 = vector.broadcast %cst_40 : f32 to vector<8x128xf32>
    %52 = arith.addf %51, %50 : vector<8x128xf32>
    %53 = arith.divf %51, %52 : vector<8x128xf32>
    %54 = vector.extract_strided_slice %45 {offsets = [0, 128], sizes = [8, 128], strides = [1, 1]} : vector<8x384xf32> to vector<8x128xf32>
    %55 = vector.extract_strided_slice %39 {offsets = [0, 128], sizes = [8, 128], strides = [1, 1]} : vector<8x384xf32> to vector<8x128xf32>
    %56 = arith.addf %54, %55 : vector<8x128xf32>
    %57 = arith.negf %56 : vector<8x128xf32>
    %58 = math.exp %57 : vector<8x128xf32>
    %cst_41 = arith.constant 1.000000e+00 : f32
    %59 = vector.broadcast %cst_41 : f32 to vector<8x128xf32>
    %60 = arith.addf %59, %58 : vector<8x128xf32>
    %61 = arith.divf %59, %60 : vector<8x128xf32>
    %62 = vector.extract_strided_slice %45 {offsets = [0, 256], sizes = [8, 128], strides = [1, 1]} : vector<8x384xf32> to vector<8x128xf32>
    %63 = vector.extract_strided_slice %39 {offsets = [0, 256], sizes = [8, 128], strides = [1, 1]} : vector<8x384xf32> to vector<8x128xf32>
    %64 = arith.mulf %53, %63 : vector<8x128xf32>
    %65 = arith.addf %62, %64 : vector<8x128xf32>
    %66 = math.tanh %65 : vector<8x128xf32>
    %cst_42 = arith.constant 1.000000e+00 : f32
    %67 = vector.broadcast %cst_42 : f32 to vector<8x128xf32>
    %68 = arith.subf %67, %61 : vector<8x128xf32>
    %69 = arith.mulf %68, %66 : vector<8x128xf32>
    %70 = arith.mulf %61, %35 : vector<8x128xf32>
    %71 = arith.addf %69, %70 : vector<8x128xf32>
    %72 = arith.addi %31, %c0_i32_36 : i32
    %73 = vector.broadcast %72 : i32 to vector<8x1xi32>
    %74 = arith.cmpi sgt, %25, %73 : vector<8x1xi32>
    %75 = vector.shape_cast %74 : vector<8x1xi1> to vector<8x1xi1>
    %76 = vector.broadcast %75 : vector<8x1xi1> to vector<8x128xi1>
    %77 = arith.select %76, %71, %35 : vector<8x128xi1>, vector<8x128xf32>
    %cst_43 = arith.constant 0.000000e+00 : f32
    %78 = vector.shape_cast %74 : vector<8x1xi1> to vector<8x1xi1>
    %79 = vector.broadcast %78 : vector<8x1xi1> to vector<8x128xi1>
    %80 = vector.broadcast %cst_43 : f32 to vector<8x128xf32>
    %81 = arith.select %79, %71, %80 : vector<8x128xi1>, vector<8x128xf32>
    %82 = arith.index_cast %c0_i32_36 : i32 to index
    %c0_44 = arith.constant 0 : index
    %c0_45 = arith.constant 0 : index
    %83 = vector.load %arg10[%82, %c0_44, %c0_45] : memref<4x8x128xf32, #tpu.memory_space<vmem>>, vector<1x8x128xf32>
    %84 = vector.shape_cast %83 : vector<1x8x128xf32> to vector<8x128xf32>
    %85 = vector.shape_cast %81 : vector<8x128xf32> to vector<1x8x128xf32>
    tpu.vector_store %arg10[%82, %c0_44, %c0_45], %85 {strides = array<i32>} : memref<4x8x128xf32, #tpu.memory_space<vmem>>, vector<1x8x128xf32>,
    %c7_i32 = arith.constant 7 : i32
    %86 = arith.subi %c7_i32, %31 : i32
    %87 = arith.subi %86, %c0_i32_36 : i32
    %c3_i32 = arith.constant 3 : i32
    %88 = arith.subi %c3_i32, %c0_i32_36 : i32
    %89 = arith.index_cast %88 : i32 to index
    %c0_46 = arith.constant 0 : index
    %c0_47 = arith.constant 0 : index
    %90 = vector.load %arg15[%89, %c0_46, %c0_47] : memref<4x8x384xf32, #tpu.memory_space<vmem>>, vector<1x8x384xf32>
    %91 = vector.shape_cast %90 : vector<1x8x384xf32> to vector<8x384xf32>
    %92 = vector.extract_strided_slice %91 {offsets = [0, 0], sizes = [8, 128], strides = [1, 1]} : vector<8x384xf32> to vector<8x128xf32>
    %93 = vector.extract_strided_slice %42 {offsets = [0, 0], sizes = [8, 128], strides = [1, 1]} : vector<8x384xf32> to vector<8x128xf32>
    %94 = arith.addf %92, %93 : vector<8x128xf32>
    %95 = arith.negf %94 : vector<8x128xf32>
    %96 = math.exp %95 : vector<8x128xf32>
    %cst_48 = arith.constant 1.000000e+00 : f32
    %97 = vector.broadcast %cst_48 : f32 to vector<8x128xf32>
    %98 = arith.addf %97, %96 : vector<8x128xf32>
    %99 = arith.divf %97, %98 : vector<8x128xf32>
    %100 = vector.extract_strided_slice %91 {offsets = [0, 128], sizes = [8, 128], strides = [1, 1]} : vector<8x384xf32> to vector<8x128xf32>
    %101 = vector.extract_strided_slice %42 {offsets = [0, 128], sizes = [8, 128], strides = [1, 1]} : vector<8x384xf32> to vector<8x128xf32>
    %102 = arith.addf %100, %101 : vector<8x128xf32>
    %103 = arith.negf %102 : vector<8x128xf32>
    %104 = math.exp %103 : vector<8x128xf32>
    %cst_49 = arith.constant 1.000000e+00 : f32
    %105 = vector.broadcast %cst_49 : f32 to vector<8x128xf32>
    %106 = arith.addf %105, %104 : vector<8x128xf32>
    %107 = arith.divf %105, %106 : vector<8x128xf32>
    %108 = vector.extract_strided_slice %91 {offsets = [0, 256], sizes = [8, 128], strides = [1, 1]} : vector<8x384xf32> to vector<8x128xf32>
    %109 = vector.extract_strided_slice %42 {offsets = [0, 256], sizes = [8, 128], strides = [1, 1]} : vector<8x384xf32> to vector<8x128xf32>
    %110 = arith.mulf %99, %109 : vector<8x128xf32>
    %111 = arith.addf %108, %110 : vector<8x128xf32>
    %112 = math.tanh %111 : vector<8x128xf32>
    %cst_50 = arith.constant 1.000000e+00 : f32
    %113 = vector.broadcast %cst_50 : f32 to vector<8x128xf32>
    %114 = arith.subf %113, %107 : vector<8x128xf32>
    %115 = arith.mulf %114, %112 : vector<8x128xf32>
    %116 = arith.mulf %107, %36 : vector<8x128xf32>
    %117 = arith.addf %115, %116 : vector<8x128xf32>
    %118 = vector.broadcast %87 : i32 to vector<8x1xi32>
    %119 = arith.cmpi sgt, %25, %118 : vector<8x1xi32>
    %120 = vector.shape_cast %119 : vector<8x1xi1> to vector<8x1xi1>
    %121 = vector.broadcast %120 : vector<8x1xi1> to vector<8x128xi1>
    %122 = arith.select %121, %117, %36 : vector<8x128xi1>, vector<8x128xf32>
    %cst_51 = arith.constant 0.000000e+00 : f32
    %123 = vector.shape_cast %119 : vector<8x1xi1> to vector<8x1xi1>
    %124 = vector.broadcast %123 : vector<8x1xi1> to vector<8x128xi1>
    %125 = vector.broadcast %cst_51 : f32 to vector<8x128xf32>
    %126 = arith.select %124, %117, %125 : vector<8x128xi1>, vector<8x128xf32>
    %c3_i32_52 = arith.constant 3 : i32
    %127 = arith.subi %c3_i32_52, %c0_i32_36 : i32
    %128 = arith.index_cast %127 : i32 to index
    %c0_53 = arith.constant 0 : index
    %c0_54 = arith.constant 0 : index
    %129 = vector.load %arg11[%128, %c0_53, %c0_54] : memref<4x8x128xf32, #tpu.memory_space<vmem>>, vector<1x8x128xf32>
    %130 = vector.shape_cast %129 : vector<1x8x128xf32> to vector<8x128xf32>
    %131 = vector.shape_cast %126 : vector<8x128xf32> to vector<1x8x128xf32>
    tpu.vector_store %arg11[%128, %c0_53, %c0_54], %131 {strides = array<i32>} : memref<4x8x128xf32, #tpu.memory_space<vmem>>, vector<1x8x128xf32>,
    %132 = tpu.concatenate %77, %122 in 0 : vector<8x128xf32>, vector<8x128xf32> -> vector<16x128xf32>
    %c1_i32 = arith.constant 1 : i32
    %133 = arith.truncf %132 : vector<16x128xf32> to vector<16x128xbf16>
    %cst_55 = arith.constant dense<0.000000e+00> : vector<16x768xf32>
    %134 = tpu.matmul %133, %26, %cst_55 {dimension_numbers = #tpu.dot_dimension_numbers<[1], [0], [0], [1], [0, 0, 1, 1], [], []>} : vector<16x128xbf16>, vector<128x768xbf16>, vector<16x768xf32> -> vector<16x768xf32>
    %135 = vector.extract_strided_slice %132 {offsets = [0, 0], sizes = [8, 128], strides = [1, 1]} : vector<16x128xf32> to vector<8x128xf32>
    %136 = vector.extract_strided_slice %132 {offsets = [8, 0], sizes = [8, 128], strides = [1, 1]} : vector<16x128xf32> to vector<8x128xf32>
    %137 = vector.extract_strided_slice %134 {offsets = [0, 0], sizes = [8, 384], strides = [1, 1]} : vector<16x768xf32> to vector<8x384xf32>
    %138 = vector.broadcast %28 : vector<1x384xf32> to vector<8x384xf32>
    %139 = arith.addf %137, %138 : vector<8x384xf32>
    %140 = vector.extract_strided_slice %134 {offsets = [8, 384], sizes = [8, 384], strides = [1, 1]} : vector<16x768xf32> to vector<8x384xf32>
    %141 = vector.broadcast %30 : vector<1x384xf32> to vector<8x384xf32>
    %142 = arith.addf %140, %141 : vector<8x384xf32>
    %143 = arith.index_cast %c1_i32 : i32 to index
    %c0_56 = arith.constant 0 : index
    %c0_57 = arith.constant 0 : index
    %144 = vector.load %arg14[%143, %c0_56, %c0_57] : memref<4x8x384xf32, #tpu.memory_space<vmem>>, vector<1x8x384xf32>
    %145 = vector.shape_cast %144 : vector<1x8x384xf32> to vector<8x384xf32>
    %146 = vector.extract_strided_slice %145 {offsets = [0, 0], sizes = [8, 128], strides = [1, 1]} : vector<8x384xf32> to vector<8x128xf32>
    %147 = vector.extract_strided_slice %139 {offsets = [0, 0], sizes = [8, 128], strides = [1, 1]} : vector<8x384xf32> to vector<8x128xf32>
    %148 = arith.addf %146, %147 : vector<8x128xf32>
    %149 = arith.negf %148 : vector<8x128xf32>
    %150 = math.exp %149 : vector<8x128xf32>
    %cst_58 = arith.constant 1.000000e+00 : f32
    %151 = vector.broadcast %cst_58 : f32 to vector<8x128xf32>
    %152 = arith.addf %151, %150 : vector<8x128xf32>
    %153 = arith.divf %151, %152 : vector<8x128xf32>
    %154 = vector.extract_strided_slice %145 {offsets = [0, 128], sizes = [8, 128], strides = [1, 1]} : vector<8x384xf32> to vector<8x128xf32>
    %155 = vector.extract_strided_slice %139 {offsets = [0, 128], sizes = [8, 128], strides = [1, 1]} : vector<8x384xf32> to vector<8x128xf32>
    %156 = arith.addf %154, %155 : vector<8x128xf32>
    %157 = arith.negf %156 : vector<8x128xf32>
    %158 = math.exp %157 : vector<8x128xf32>
    %cst_59 = arith.constant 1.000000e+00 : f32
    %159 = vector.broadcast %cst_59 : f32 to vector<8x128xf32>
    %160 = arith.addf %159, %158 : vector<8x128xf32>
    %161 = arith.divf %159, %160 : vector<8x128xf32>
    %162 = vector.extract_strided_slice %145 {offsets = [0, 256], sizes = [8, 128], strides = [1, 1]} : vector<8x384xf32> to vector<8x128xf32>
    %163 = vector.extract_strided_slice %139 {offsets = [0, 256], sizes = [8, 128], strides = [1, 1]} : vector<8x384xf32> to vector<8x128xf32>
    %164 = arith.mulf %153, %163 : vector<8x128xf32>
    %165 = arith.addf %162, %164 : vector<8x128xf32>
    %166 = math.tanh %165 : vector<8x128xf32>
    %cst_60 = arith.constant 1.000000e+00 : f32
    %167 = vector.broadcast %cst_60 : f32 to vector<8x128xf32>
    %168 = arith.subf %167, %161 : vector<8x128xf32>
    %169 = arith.mulf %168, %166 : vector<8x128xf32>
    %170 = arith.mulf %161, %135 : vector<8x128xf32>
    %171 = arith.addf %169, %170 : vector<8x128xf32>
    %172 = arith.addi %31, %c1_i32 : i32
    %173 = vector.broadcast %172 : i32 to vector<8x1xi32>
    %174 = arith.cmpi sgt, %25, %173 : vector<8x1xi32>
    %175 = vector.shape_cast %174 : vector<8x1xi1> to vector<8x1xi1>
    %176 = vector.broadcast %175 : vector<8x1xi1> to vector<8x128xi1>
    %177 = arith.select %176, %171, %135 : vector<8x128xi1>, vector<8x128xf32>
    %cst_61 = arith.constant 0.000000e+00 : f32
    %178 = vector.shape_cast %174 : vector<8x1xi1> to vector<8x1xi1>
    %179 = vector.broadcast %178 : vector<8x1xi1> to vector<8x128xi1>
    %180 = vector.broadcast %cst_61 : f32 to vector<8x128xf32>
    %181 = arith.select %179, %171, %180 : vector<8x128xi1>, vector<8x128xf32>
    %182 = arith.index_cast %c1_i32 : i32 to index
    %c0_62 = arith.constant 0 : index
    %c0_63 = arith.constant 0 : index
    %183 = vector.load %arg10[%182, %c0_62, %c0_63] : memref<4x8x128xf32, #tpu.memory_space<vmem>>, vector<1x8x128xf32>
    %184 = vector.shape_cast %183 : vector<1x8x128xf32> to vector<8x128xf32>
    %185 = vector.shape_cast %181 : vector<8x128xf32> to vector<1x8x128xf32>
    tpu.vector_store %arg10[%182, %c0_62, %c0_63], %185 {strides = array<i32>} : memref<4x8x128xf32, #tpu.memory_space<vmem>>, vector<1x8x128xf32>,
    %c7_i32_64 = arith.constant 7 : i32
    %186 = arith.subi %c7_i32_64, %31 : i32
    %187 = arith.subi %186, %c1_i32 : i32
    %c3_i32_65 = arith.constant 3 : i32
    %188 = arith.subi %c3_i32_65, %c1_i32 : i32
    %189 = arith.index_cast %188 : i32 to index
    %c0_66 = arith.constant 0 : index
    %c0_67 = arith.constant 0 : index
    %190 = vector.load %arg15[%189, %c0_66, %c0_67] : memref<4x8x384xf32, #tpu.memory_space<vmem>>, vector<1x8x384xf32>
    %191 = vector.shape_cast %190 : vector<1x8x384xf32> to vector<8x384xf32>
    %192 = vector.extract_strided_slice %191 {offsets = [0, 0], sizes = [8, 128], strides = [1, 1]} : vector<8x384xf32> to vector<8x128xf32>
    %193 = vector.extract_strided_slice %142 {offsets = [0, 0], sizes = [8, 128], strides = [1, 1]} : vector<8x384xf32> to vector<8x128xf32>
    %194 = arith.addf %192, %193 : vector<8x128xf32>
    %195 = arith.negf %194 : vector<8x128xf32>
    %196 = math.exp %195 : vector<8x128xf32>
    %cst_68 = arith.constant 1.000000e+00 : f32
    %197 = vector.broadcast %cst_68 : f32 to vector<8x128xf32>
    %198 = arith.addf %197, %196 : vector<8x128xf32>
    %199 = arith.divf %197, %198 : vector<8x128xf32>
    %200 = vector.extract_strided_slice %191 {offsets = [0, 128], sizes = [8, 128], strides = [1, 1]} : vector<8x384xf32> to vector<8x128xf32>
    %201 = vector.extract_strided_slice %142 {offsets = [0, 128], sizes = [8, 128], strides = [1, 1]} : vector<8x384xf32> to vector<8x128xf32>
    %202 = arith.addf %200, %201 : vector<8x128xf32>
    %203 = arith.negf %202 : vector<8x128xf32>
    %204 = math.exp %203 : vector<8x128xf32>
    %cst_69 = arith.constant 1.000000e+00 : f32
    %205 = vector.broadcast %cst_69 : f32 to vector<8x128xf32>
    %206 = arith.addf %205, %204 : vector<8x128xf32>
    %207 = arith.divf %205, %206 : vector<8x128xf32>
    %208 = vector.extract_strided_slice %191 {offsets = [0, 256], sizes = [8, 128], strides = [1, 1]} : vector<8x384xf32> to vector<8x128xf32>
    %209 = vector.extract_strided_slice %142 {offsets = [0, 256], sizes = [8, 128], strides = [1, 1]} : vector<8x384xf32> to vector<8x128xf32>
    %210 = arith.mulf %199, %209 : vector<8x128xf32>
    %211 = arith.addf %208, %210 : vector<8x128xf32>
    %212 = math.tanh %211 : vector<8x128xf32>
    %cst_70 = arith.constant 1.000000e+00 : f32
    %213 = vector.broadcast %cst_70 : f32 to vector<8x128xf32>
    %214 = arith.subf %213, %207 : vector<8x128xf32>
    %215 = arith.mulf %214, %212 : vector<8x128xf32>
    %216 = arith.mulf %207, %136 : vector<8x128xf32>
    %217 = arith.addf %215, %216 : vector<8x128xf32>
    %218 = vector.broadcast %187 : i32 to vector<8x1xi32>
    %219 = arith.cmpi sgt, %25, %218 : vector<8x1xi32>
    %220 = vector.shape_cast %219 : vector<8x1xi1> to vector<8x1xi1>
    %221 = vector.broadcast %220 : vector<8x1xi1> to vector<8x128xi1>
    %222 = arith.select %221, %217, %136 : vector<8x128xi1>, vector<8x128xf32>
    %cst_71 = arith.constant 0.000000e+00 : f32
    %223 = vector.shape_cast %219 : vector<8x1xi1> to vector<8x1xi1>
    %224 = vector.broadcast %223 : vector<8x1xi1> to vector<8x128xi1>
    %225 = vector.broadcast %cst_71 : f32 to vector<8x128xf32>
    %226 = arith.select %224, %217, %225 : vector<8x128xi1>, vector<8x128xf32>
    %c3_i32_72 = arith.constant 3 : i32
    %227 = arith.subi %c3_i32_72, %c1_i32 : i32
    %228 = arith.index_cast %227 : i32 to index
    %c0_73 = arith.constant 0 : index
    %c0_74 = arith.constant 0 : index
    %229 = vector.load %arg11[%228, %c0_73, %c0_74] : memref<4x8x128xf32, #tpu.memory_space<vmem>>, vector<1x8x128xf32>
    %230 = vector.shape_cast %229 : vector<1x8x128xf32> to vector<8x128xf32>
    %231 = vector.shape_cast %226 : vector<8x128xf32> to vector<1x8x128xf32>
    tpu.vector_store %arg11[%228, %c0_73, %c0_74], %231 {strides = array<i32>} : memref<4x8x128xf32, #tpu.memory_space<vmem>>, vector<1x8x128xf32>,
    %232 = tpu.concatenate %177, %222 in 0 : vector<8x128xf32>, vector<8x128xf32> -> vector<16x128xf32>
    %c2_i32 = arith.constant 2 : i32
    %233 = arith.truncf %232 : vector<16x128xf32> to vector<16x128xbf16>
    %cst_75 = arith.constant dense<0.000000e+00> : vector<16x768xf32>
    %234 = tpu.matmul %233, %26, %cst_75 {dimension_numbers = #tpu.dot_dimension_numbers<[1], [0], [0], [1], [0, 0, 1, 1], [], []>} : vector<16x128xbf16>, vector<128x768xbf16>, vector<16x768xf32> -> vector<16x768xf32>
    %235 = vector.extract_strided_slice %232 {offsets = [0, 0], sizes = [8, 128], strides = [1, 1]} : vector<16x128xf32> to vector<8x128xf32>
    %236 = vector.extract_strided_slice %232 {offsets = [8, 0], sizes = [8, 128], strides = [1, 1]} : vector<16x128xf32> to vector<8x128xf32>
    %237 = vector.extract_strided_slice %234 {offsets = [0, 0], sizes = [8, 384], strides = [1, 1]} : vector<16x768xf32> to vector<8x384xf32>
    %238 = vector.broadcast %28 : vector<1x384xf32> to vector<8x384xf32>
    %239 = arith.addf %237, %238 : vector<8x384xf32>
    %240 = vector.extract_strided_slice %234 {offsets = [8, 384], sizes = [8, 384], strides = [1, 1]} : vector<16x768xf32> to vector<8x384xf32>
    %241 = vector.broadcast %30 : vector<1x384xf32> to vector<8x384xf32>
    %242 = arith.addf %240, %241 : vector<8x384xf32>
    %243 = arith.index_cast %c2_i32 : i32 to index
    %c0_76 = arith.constant 0 : index
    %c0_77 = arith.constant 0 : index
    %244 = vector.load %arg14[%243, %c0_76, %c0_77] : memref<4x8x384xf32, #tpu.memory_space<vmem>>, vector<1x8x384xf32>
    %245 = vector.shape_cast %244 : vector<1x8x384xf32> to vector<8x384xf32>
    %246 = vector.extract_strided_slice %245 {offsets = [0, 0], sizes = [8, 128], strides = [1, 1]} : vector<8x384xf32> to vector<8x128xf32>
    %247 = vector.extract_strided_slice %239 {offsets = [0, 0], sizes = [8, 128], strides = [1, 1]} : vector<8x384xf32> to vector<8x128xf32>
    %248 = arith.addf %246, %247 : vector<8x128xf32>
    %249 = arith.negf %248 : vector<8x128xf32>
    %250 = math.exp %249 : vector<8x128xf32>
    %cst_78 = arith.constant 1.000000e+00 : f32
    %251 = vector.broadcast %cst_78 : f32 to vector<8x128xf32>
    %252 = arith.addf %251, %250 : vector<8x128xf32>
    %253 = arith.divf %251, %252 : vector<8x128xf32>
    %254 = vector.extract_strided_slice %245 {offsets = [0, 128], sizes = [8, 128], strides = [1, 1]} : vector<8x384xf32> to vector<8x128xf32>
    %255 = vector.extract_strided_slice %239 {offsets = [0, 128], sizes = [8, 128], strides = [1, 1]} : vector<8x384xf32> to vector<8x128xf32>
    %256 = arith.addf %254, %255 : vector<8x128xf32>
    %257 = arith.negf %256 : vector<8x128xf32>
    %258 = math.exp %257 : vector<8x128xf32>
    %cst_79 = arith.constant 1.000000e+00 : f32
    %259 = vector.broadcast %cst_79 : f32 to vector<8x128xf32>
    %260 = arith.addf %259, %258 : vector<8x128xf32>
    %261 = arith.divf %259, %260 : vector<8x128xf32>
    %262 = vector.extract_strided_slice %245 {offsets = [0, 256], sizes = [8, 128], strides = [1, 1]} : vector<8x384xf32> to vector<8x128xf32>
    %263 = vector.extract_strided_slice %239 {offsets = [0, 256], sizes = [8, 128], strides = [1, 1]} : vector<8x384xf32> to vector<8x128xf32>
    %264 = arith.mulf %253, %263 : vector<8x128xf32>
    %265 = arith.addf %262, %264 : vector<8x128xf32>
    %266 = math.tanh %265 : vector<8x128xf32>
    %cst_80 = arith.constant 1.000000e+00 : f32
    %267 = vector.broadcast %cst_80 : f32 to vector<8x128xf32>
    %268 = arith.subf %267, %261 : vector<8x128xf32>
    %269 = arith.mulf %268, %266 : vector<8x128xf32>
    %270 = arith.mulf %261, %235 : vector<8x128xf32>
    %271 = arith.addf %269, %270 : vector<8x128xf32>
    %272 = arith.addi %31, %c2_i32 : i32
    %273 = vector.broadcast %272 : i32 to vector<8x1xi32>
    %274 = arith.cmpi sgt, %25, %273 : vector<8x1xi32>
    %275 = vector.shape_cast %274 : vector<8x1xi1> to vector<8x1xi1>
    %276 = vector.broadcast %275 : vector<8x1xi1> to vector<8x128xi1>
    %277 = arith.select %276, %271, %235 : vector<8x128xi1>, vector<8x128xf32>
    %cst_81 = arith.constant 0.000000e+00 : f32
    %278 = vector.shape_cast %274 : vector<8x1xi1> to vector<8x1xi1>
    %279 = vector.broadcast %278 : vector<8x1xi1> to vector<8x128xi1>
    %280 = vector.broadcast %cst_81 : f32 to vector<8x128xf32>
    %281 = arith.select %279, %271, %280 : vector<8x128xi1>, vector<8x128xf32>
    %282 = arith.index_cast %c2_i32 : i32 to index
    %c0_82 = arith.constant 0 : index
    %c0_83 = arith.constant 0 : index
    %283 = vector.load %arg10[%282, %c0_82, %c0_83] : memref<4x8x128xf32, #tpu.memory_space<vmem>>, vector<1x8x128xf32>
    %284 = vector.shape_cast %283 : vector<1x8x128xf32> to vector<8x128xf32>
    %285 = vector.shape_cast %281 : vector<8x128xf32> to vector<1x8x128xf32>
    tpu.vector_store %arg10[%282, %c0_82, %c0_83], %285 {strides = array<i32>} : memref<4x8x128xf32, #tpu.memory_space<vmem>>, vector<1x8x128xf32>,
    %c7_i32_84 = arith.constant 7 : i32
    %286 = arith.subi %c7_i32_84, %31 : i32
    %287 = arith.subi %286, %c2_i32 : i32
    %c3_i32_85 = arith.constant 3 : i32
    %288 = arith.subi %c3_i32_85, %c2_i32 : i32
    %289 = arith.index_cast %288 : i32 to index
    %c0_86 = arith.constant 0 : index
    %c0_87 = arith.constant 0 : index
    %290 = vector.load %arg15[%289, %c0_86, %c0_87] : memref<4x8x384xf32, #tpu.memory_space<vmem>>, vector<1x8x384xf32>
    %291 = vector.shape_cast %290 : vector<1x8x384xf32> to vector<8x384xf32>
    %292 = vector.extract_strided_slice %291 {offsets = [0, 0], sizes = [8, 128], strides = [1, 1]} : vector<8x384xf32> to vector<8x128xf32>
    %293 = vector.extract_strided_slice %242 {offsets = [0, 0], sizes = [8, 128], strides = [1, 1]} : vector<8x384xf32> to vector<8x128xf32>
    %294 = arith.addf %292, %293 : vector<8x128xf32>
    %295 = arith.negf %294 : vector<8x128xf32>
    %296 = math.exp %295 : vector<8x128xf32>
    %cst_88 = arith.constant 1.000000e+00 : f32
    %297 = vector.broadcast %cst_88 : f32 to vector<8x128xf32>
    %298 = arith.addf %297, %296 : vector<8x128xf32>
    %299 = arith.divf %297, %298 : vector<8x128xf32>
    %300 = vector.extract_strided_slice %291 {offsets = [0, 128], sizes = [8, 128], strides = [1, 1]} : vector<8x384xf32> to vector<8x128xf32>
    %301 = vector.extract_strided_slice %242 {offsets = [0, 128], sizes = [8, 128], strides = [1, 1]} : vector<8x384xf32> to vector<8x128xf32>
    %302 = arith.addf %300, %301 : vector<8x128xf32>
    %303 = arith.negf %302 : vector<8x128xf32>
    %304 = math.exp %303 : vector<8x128xf32>
    %cst_89 = arith.constant 1.000000e+00 : f32
    %305 = vector.broadcast %cst_89 : f32 to vector<8x128xf32>
    %306 = arith.addf %305, %304 : vector<8x128xf32>
    %307 = arith.divf %305, %306 : vector<8x128xf32>
    %308 = vector.extract_strided_slice %291 {offsets = [0, 256], sizes = [8, 128], strides = [1, 1]} : vector<8x384xf32> to vector<8x128xf32>
    %309 = vector.extract_strided_slice %242 {offsets = [0, 256], sizes = [8, 128], strides = [1, 1]} : vector<8x384xf32> to vector<8x128xf32>
    %310 = arith.mulf %299, %309 : vector<8x128xf32>
    %311 = arith.addf %308, %310 : vector<8x128xf32>
    %312 = math.tanh %311 : vector<8x128xf32>
    %cst_90 = arith.constant 1.000000e+00 : f32
    %313 = vector.broadcast %cst_90 : f32 to vector<8x128xf32>
    %314 = arith.subf %313, %307 : vector<8x128xf32>
    %315 = arith.mulf %314, %312 : vector<8x128xf32>
    %316 = arith.mulf %307, %236 : vector<8x128xf32>
    %317 = arith.addf %315, %316 : vector<8x128xf32>
    %318 = vector.broadcast %287 : i32 to vector<8x1xi32>
    %319 = arith.cmpi sgt, %25, %318 : vector<8x1xi32>
    %320 = vector.shape_cast %319 : vector<8x1xi1> to vector<8x1xi1>
    %321 = vector.broadcast %320 : vector<8x1xi1> to vector<8x128xi1>
    %322 = arith.select %321, %317, %236 : vector<8x128xi1>, vector<8x128xf32>
    %cst_91 = arith.constant 0.000000e+00 : f32
    %323 = vector.shape_cast %319 : vector<8x1xi1> to vector<8x1xi1>
    %324 = vector.broadcast %323 : vector<8x1xi1> to vector<8x128xi1>
    %325 = vector.broadcast %cst_91 : f32 to vector<8x128xf32>
    %326 = arith.select %324, %317, %325 : vector<8x128xi1>, vector<8x128xf32>
    %c3_i32_92 = arith.constant 3 : i32
    %327 = arith.subi %c3_i32_92, %c2_i32 : i32
    %328 = arith.index_cast %327 : i32 to index
    %c0_93 = arith.constant 0 : index
    %c0_94 = arith.constant 0 : index
    %329 = vector.load %arg11[%328, %c0_93, %c0_94] : memref<4x8x128xf32, #tpu.memory_space<vmem>>, vector<1x8x128xf32>
    %330 = vector.shape_cast %329 : vector<1x8x128xf32> to vector<8x128xf32>
    %331 = vector.shape_cast %326 : vector<8x128xf32> to vector<1x8x128xf32>
    tpu.vector_store %arg11[%328, %c0_93, %c0_94], %331 {strides = array<i32>} : memref<4x8x128xf32, #tpu.memory_space<vmem>>, vector<1x8x128xf32>,
    %332 = tpu.concatenate %277, %322 in 0 : vector<8x128xf32>, vector<8x128xf32> -> vector<16x128xf32>
    %c3_i32_95 = arith.constant 3 : i32
    %333 = arith.truncf %332 : vector<16x128xf32> to vector<16x128xbf16>
    %cst_96 = arith.constant dense<0.000000e+00> : vector<16x768xf32>
    %334 = tpu.matmul %333, %26, %cst_96 {dimension_numbers = #tpu.dot_dimension_numbers<[1], [0], [0], [1], [0, 0, 1, 1], [], []>} : vector<16x128xbf16>, vector<128x768xbf16>, vector<16x768xf32> -> vector<16x768xf32>
    %335 = vector.extract_strided_slice %332 {offsets = [0, 0], sizes = [8, 128], strides = [1, 1]} : vector<16x128xf32> to vector<8x128xf32>
    %336 = vector.extract_strided_slice %332 {offsets = [8, 0], sizes = [8, 128], strides = [1, 1]} : vector<16x128xf32> to vector<8x128xf32>
    %337 = vector.extract_strided_slice %334 {offsets = [0, 0], sizes = [8, 384], strides = [1, 1]} : vector<16x768xf32> to vector<8x384xf32>
    %338 = vector.broadcast %28 : vector<1x384xf32> to vector<8x384xf32>
    %339 = arith.addf %337, %338 : vector<8x384xf32>
    %340 = vector.extract_strided_slice %334 {offsets = [8, 384], sizes = [8, 384], strides = [1, 1]} : vector<16x768xf32> to vector<8x384xf32>
    %341 = vector.broadcast %30 : vector<1x384xf32> to vector<8x384xf32>
    %342 = arith.addf %340, %341 : vector<8x384xf32>
    %343 = arith.index_cast %c3_i32_95 : i32 to index
    %c0_97 = arith.constant 0 : index
    %c0_98 = arith.constant 0 : index
    %344 = vector.load %arg14[%343, %c0_97, %c0_98] : memref<4x8x384xf32, #tpu.memory_space<vmem>>, vector<1x8x384xf32>
    %345 = vector.shape_cast %344 : vector<1x8x384xf32> to vector<8x384xf32>
    %346 = vector.extract_strided_slice %345 {offsets = [0, 0], sizes = [8, 128], strides = [1, 1]} : vector<8x384xf32> to vector<8x128xf32>
    %347 = vector.extract_strided_slice %339 {offsets = [0, 0], sizes = [8, 128], strides = [1, 1]} : vector<8x384xf32> to vector<8x128xf32>
    %348 = arith.addf %346, %347 : vector<8x128xf32>
    %349 = arith.negf %348 : vector<8x128xf32>
    %350 = math.exp %349 : vector<8x128xf32>
    %cst_99 = arith.constant 1.000000e+00 : f32
    %351 = vector.broadcast %cst_99 : f32 to vector<8x128xf32>
    %352 = arith.addf %351, %350 : vector<8x128xf32>
    %353 = arith.divf %351, %352 : vector<8x128xf32>
    %354 = vector.extract_strided_slice %345 {offsets = [0, 128], sizes = [8, 128], strides = [1, 1]} : vector<8x384xf32> to vector<8x128xf32>
    %355 = vector.extract_strided_slice %339 {offsets = [0, 128], sizes = [8, 128], strides = [1, 1]} : vector<8x384xf32> to vector<8x128xf32>
    %356 = arith.addf %354, %355 : vector<8x128xf32>
    %357 = arith.negf %356 : vector<8x128xf32>
    %358 = math.exp %357 : vector<8x128xf32>
    %cst_100 = arith.constant 1.000000e+00 : f32
    %359 = vector.broadcast %cst_100 : f32 to vector<8x128xf32>
    %360 = arith.addf %359, %358 : vector<8x128xf32>
    %361 = arith.divf %359, %360 : vector<8x128xf32>
    %362 = vector.extract_strided_slice %345 {offsets = [0, 256], sizes = [8, 128], strides = [1, 1]} : vector<8x384xf32> to vector<8x128xf32>
    %363 = vector.extract_strided_slice %339 {offsets = [0, 256], sizes = [8, 128], strides = [1, 1]} : vector<8x384xf32> to vector<8x128xf32>
    %364 = arith.mulf %353, %363 : vector<8x128xf32>
    %365 = arith.addf %362, %364 : vector<8x128xf32>
    %366 = math.tanh %365 : vector<8x128xf32>
    %cst_101 = arith.constant 1.000000e+00 : f32
    %367 = vector.broadcast %cst_101 : f32 to vector<8x128xf32>
    %368 = arith.subf %367, %361 : vector<8x128xf32>
    %369 = arith.mulf %368, %366 : vector<8x128xf32>
    %370 = arith.mulf %361, %335 : vector<8x128xf32>
    %371 = arith.addf %369, %370 : vector<8x128xf32>
    %372 = arith.addi %31, %c3_i32_95 : i32
    %373 = vector.broadcast %372 : i32 to vector<8x1xi32>
    %374 = arith.cmpi sgt, %25, %373 : vector<8x1xi32>
    %375 = vector.shape_cast %374 : vector<8x1xi1> to vector<8x1xi1>
    %376 = vector.broadcast %375 : vector<8x1xi1> to vector<8x128xi1>
    %377 = arith.select %376, %371, %335 : vector<8x128xi1>, vector<8x128xf32>
    %cst_102 = arith.constant 0.000000e+00 : f32
    %378 = vector.shape_cast %374 : vector<8x1xi1> to vector<8x1xi1>
    %379 = vector.broadcast %378 : vector<8x1xi1> to vector<8x128xi1>
    %380 = vector.broadcast %cst_102 : f32 to vector<8x128xf32>
    %381 = arith.select %379, %371, %380 : vector<8x128xi1>, vector<8x128xf32>
    %382 = arith.index_cast %c3_i32_95 : i32 to index
    %c0_103 = arith.constant 0 : index
    %c0_104 = arith.constant 0 : index
    %383 = vector.load %arg10[%382, %c0_103, %c0_104] : memref<4x8x128xf32, #tpu.memory_space<vmem>>, vector<1x8x128xf32>
    %384 = vector.shape_cast %383 : vector<1x8x128xf32> to vector<8x128xf32>
    %385 = vector.shape_cast %381 : vector<8x128xf32> to vector<1x8x128xf32>
    tpu.vector_store %arg10[%382, %c0_103, %c0_104], %385 {strides = array<i32>} : memref<4x8x128xf32, #tpu.memory_space<vmem>>, vector<1x8x128xf32>,
    %c7_i32_105 = arith.constant 7 : i32
    %386 = arith.subi %c7_i32_105, %31 : i32
    %387 = arith.subi %386, %c3_i32_95 : i32
    %c3_i32_106 = arith.constant 3 : i32
    %388 = arith.subi %c3_i32_106, %c3_i32_95 : i32
    %389 = arith.index_cast %388 : i32 to index
    %c0_107 = arith.constant 0 : index
    %c0_108 = arith.constant 0 : index
    %390 = vector.load %arg15[%389, %c0_107, %c0_108] : memref<4x8x384xf32, #tpu.memory_space<vmem>>, vector<1x8x384xf32>
    %391 = vector.shape_cast %390 : vector<1x8x384xf32> to vector<8x384xf32>
    %392 = vector.extract_strided_slice %391 {offsets = [0, 0], sizes = [8, 128], strides = [1, 1]} : vector<8x384xf32> to vector<8x128xf32>
    %393 = vector.extract_strided_slice %342 {offsets = [0, 0], sizes = [8, 128], strides = [1, 1]} : vector<8x384xf32> to vector<8x128xf32>
    %394 = arith.addf %392, %393 : vector<8x128xf32>
    %395 = arith.negf %394 : vector<8x128xf32>
    %396 = math.exp %395 : vector<8x128xf32>
    %cst_109 = arith.constant 1.000000e+00 : f32
    %397 = vector.broadcast %cst_109 : f32 to vector<8x128xf32>
    %398 = arith.addf %397, %396 : vector<8x128xf32>
    %399 = arith.divf %397, %398 : vector<8x128xf32>
    %400 = vector.extract_strided_slice %391 {offsets = [0, 128], sizes = [8, 128], strides = [1, 1]} : vector<8x384xf32> to vector<8x128xf32>
    %401 = vector.extract_strided_slice %342 {offsets = [0, 128], sizes = [8, 128], strides = [1, 1]} : vector<8x384xf32> to vector<8x128xf32>
    %402 = arith.addf %400, %401 : vector<8x128xf32>
    %403 = arith.negf %402 : vector<8x128xf32>
    %404 = math.exp %403 : vector<8x128xf32>
    %cst_110 = arith.constant 1.000000e+00 : f32
    %405 = vector.broadcast %cst_110 : f32 to vector<8x128xf32>
    %406 = arith.addf %405, %404 : vector<8x128xf32>
    %407 = arith.divf %405, %406 : vector<8x128xf32>
    %408 = vector.extract_strided_slice %391 {offsets = [0, 256], sizes = [8, 128], strides = [1, 1]} : vector<8x384xf32> to vector<8x128xf32>
    %409 = vector.extract_strided_slice %342 {offsets = [0, 256], sizes = [8, 128], strides = [1, 1]} : vector<8x384xf32> to vector<8x128xf32>
    %410 = arith.mulf %399, %409 : vector<8x128xf32>
    %411 = arith.addf %408, %410 : vector<8x128xf32>
    %412 = math.tanh %411 : vector<8x128xf32>
    %cst_111 = arith.constant 1.000000e+00 : f32
    %413 = vector.broadcast %cst_111 : f32 to vector<8x128xf32>
    %414 = arith.subf %413, %407 : vector<8x128xf32>
    %415 = arith.mulf %414, %412 : vector<8x128xf32>
    %416 = arith.mulf %407, %336 : vector<8x128xf32>
    %417 = arith.addf %415, %416 : vector<8x128xf32>
    %418 = vector.broadcast %387 : i32 to vector<8x1xi32>
    %419 = arith.cmpi sgt, %25, %418 : vector<8x1xi32>
    %420 = vector.shape_cast %419 : vector<8x1xi1> to vector<8x1xi1>
    %421 = vector.broadcast %420 : vector<8x1xi1> to vector<8x128xi1>
    %422 = arith.select %421, %417, %336 : vector<8x128xi1>, vector<8x128xf32>
    %cst_112 = arith.constant 0.000000e+00 : f32
    %423 = vector.shape_cast %419 : vector<8x1xi1> to vector<8x1xi1>
    %424 = vector.broadcast %423 : vector<8x1xi1> to vector<8x128xi1>
    %425 = vector.broadcast %cst_112 : f32 to vector<8x128xf32>
    %426 = arith.select %424, %417, %425 : vector<8x128xi1>, vector<8x128xf32>
    %c3_i32_113 = arith.constant 3 : i32
    %427 = arith.subi %c3_i32_113, %c3_i32_95 : i32
    %428 = arith.index_cast %427 : i32 to index
    %c0_114 = arith.constant 0 : index
    %c0_115 = arith.constant 0 : index
    %429 = vector.load %arg11[%428, %c0_114, %c0_115] : memref<4x8x128xf32, #tpu.memory_space<vmem>>, vector<1x8x128xf32>
    %430 = vector.shape_cast %429 : vector<1x8x128xf32> to vector<8x128xf32>
    %431 = vector.shape_cast %426 : vector<8x128xf32> to vector<1x8x128xf32>
    tpu.vector_store %arg11[%428, %c0_114, %c0_115], %431 {strides = array<i32>} : memref<4x8x128xf32, #tpu.memory_space<vmem>>, vector<1x8x128xf32>,
    %432 = tpu.concatenate %377, %422 in 0 : vector<8x128xf32>, vector<8x128xf32> -> vector<16x128xf32>
    %c4_i32_116 = arith.constant 4 : i32
    %c0_117 = arith.constant 0 : index
    %c0_118 = arith.constant 0 : index
    %433 = vector.load %arg13[%c0_117, %c0_118] : memref<16x128xf32, #tpu.memory_space<vmem>>, vector<16x128xf32>
    tpu.vector_store %arg13[%c0_117, %c0_118], %432 {strides = array<i32>} : memref<16x128xf32, #tpu.memory_space<vmem>>, vector<16x128xf32>,
    %c1_i32_119 = arith.constant 1 : i32
    %434 = arith.cmpi eq, %arg1, %c1_i32_119 : i32
    %435 = arith.extui %434 : i1 to i32
    %c0_i32_120 = arith.constant 0 : i32
    %436 = arith.cmpi ne, %435, %c0_i32_120 : i32
    scf.if %436 {
      %437 = vector.shape_cast %432 : vector<16x128xf32> to vector<2x8x128xf32>
      %c0_121 = arith.constant 0 : index
      %c0_122 = arith.constant 0 : index
      %c0_123 = arith.constant 0 : index
      %438 = vector.load %arg12[%c0_121, %c0_122, %c0_123] : memref<2x8x128xf32, #tpu.memory_space<vmem>>, vector<2x8x128xf32>
      tpu.vector_store %arg12[%c0_121, %c0_122, %c0_123], %437 {strides = array<i32>} : memref<2x8x128xf32, #tpu.memory_space<vmem>>, vector<2x8x128xf32>,
    } else {
    }
    return
  }
  func.func @transform_0(%arg0: i32, %arg1: i32) -> (i32, i32, i32) {
    %c0_i32 = arith.constant 0 : i32
    %c0_i32_0 = arith.constant 0 : i32
    return %arg1, %arg0, %c0_i32 : i32, i32, i32
  }
  func.func @transform_1(%arg0: i32, %arg1: i32) -> (i32, i32, i32) {
    %c1_i32 = arith.constant 1 : i32
    %0 = arith.subi %c1_i32, %arg1 : i32
    %c0_i32 = arith.constant 0 : i32
    %c0_i32_0 = arith.constant 0 : i32
    return %0, %arg0, %c0_i32 : i32, i32, i32
  }
  func.func @transform_2(%arg0: i32, %arg1: i32) -> (i32, i32) {
    %c0_i32 = arith.constant 0 : i32
    %c0_i32_0 = arith.constant 0 : i32
    return %arg0, %c0_i32 : i32, i32
  }
  func.func @transform_3(%arg0: i32, %arg1: i32) -> (i32, i32, i32) {
    %c0_i32 = arith.constant 0 : i32
    %c0_i32_0 = arith.constant 0 : i32
    %c0_i32_1 = arith.constant 0 : i32
    return %c0_i32, %arg0, %c0_i32_0 : i32, i32, i32
  }
  func.func @transform_4(%arg0: i32, %arg1: i32) -> (i32, i32, i32) {
    %c0_i32 = arith.constant 0 : i32
    %c0_i32_0 = arith.constant 0 : i32
    %c0_i32_1 = arith.constant 0 : i32
    %c0_i32_2 = arith.constant 0 : i32
    return %c0_i32, %c0_i32_0, %c0_i32_1 : i32, i32, i32
  }
  func.func @transform_5(%arg0: i32, %arg1: i32) -> (i32, i32, i32) {
    %c0_i32 = arith.constant 0 : i32
    %c0_i32_0 = arith.constant 0 : i32
    %c0_i32_1 = arith.constant 0 : i32
    %c0_i32_2 = arith.constant 0 : i32
    return %c0_i32, %c0_i32_0, %c0_i32_1 : i32, i32, i32
  }
  func.func @transform_6(%arg0: i32, %arg1: i32) -> (i32, i32) {
    %c0_i32 = arith.constant 0 : i32
    %c0_i32_0 = arith.constant 0 : i32
    %c0_i32_1 = arith.constant 0 : i32
    return %c0_i32, %c0_i32_0 : i32, i32
  }
  func.func @transform_7(%arg0: i32, %arg1: i32) -> (i32, i32, i32) {
    %c0_i32 = arith.constant 0 : i32
    %c0_i32_0 = arith.constant 0 : i32
    %c0_i32_1 = arith.constant 0 : i32
    %c0_i32_2 = arith.constant 0 : i32
    return %c0_i32, %c0_i32_0, %c0_i32_1 : i32, i32, i32
  }
  func.func @transform_8(%arg0: i32, %arg1: i32) -> (i32, i32, i32) {
    %c0_i32 = arith.constant 0 : i32
    %c0_i32_0 = arith.constant 0 : i32
    return %arg1, %arg0, %c0_i32 : i32, i32, i32
  }
  func.func @transform_9(%arg0: i32, %arg1: i32) -> (i32, i32, i32) {
    %c1_i32 = arith.constant 1 : i32
    %0 = arith.subi %c1_i32, %arg1 : i32
    %c0_i32 = arith.constant 0 : i32
    %c0_i32_0 = arith.constant 0 : i32
    return %0, %arg0, %c0_i32 : i32, i32, i32
  }
  func.func @transform_10(%arg0: i32, %arg1: i32) -> (i32, i32, i32) {
    %c0_i32 = arith.constant 0 : i32
    %c0_i32_0 = arith.constant 0 : i32
    %c0_i32_1 = arith.constant 0 : i32
    return %c0_i32, %arg0, %c0_i32_0 : i32, i32, i32
  }
}

</mosaic_0001>

<llo_original>
// kernel: gru_block_forward.1
$region0: #{gru_block_forward.1}
  #allocation0 [shape = 'u32[]', space=smem, size = 0x4, offset = 0x4, fixed_abs, tag = 'smem constant byte address 0x4 - core index']
  #allocation1 [shape = 'u32[144,128]{1,0:T(1,128)}', space=vmem, size = 0x12000, scoped, tag = 'internal scratch']
  #allocation2 [shape = 'f32[16,128]{1,0:T(8,128)}', space=vmem, size = 0x2000, scoped, tag = 'scratch operand']
  #allocation3 [shape = 'f32[4,8,384]{2,1,0:T(8,128)}', space=vmem, size = 0xc000, scoped, tag = 'scratch operand']
  #allocation4 [shape = 'f32[4,8,384]{2,1,0:T(8,128)}', space=vmem, size = 0xc000, scoped, tag = 'scratch operand']
  %s0 = inlined_call_operand.vmem [shape: bf16[8,8,128], index: 0, kind: input, shape index: {}, may-alias: {0,1}]
  %s1 = inlined_call_operand.vmem [shape: bf16[8,8,128], index: 1, kind: input, shape index: {}, may-alias: {0,1}]
  %s2 = inlined_call_operand.vmem [shape: s32[8,1], index: 2, kind: input, shape index: {}]
  %s3 = inlined_call_operand.vmem [shape: f32[2,8,128], index: 3, kind: input, shape index: {}]
  %s4 = inlined_call_operand.vmem [shape: bf16[2,128,384], index: 4, kind: input, shape index: {}]
  %s5 = inlined_call_operand.vmem [shape: f32[2,1,384], index: 5, kind: input, shape index: {}]
  %s6 = inlined_call_operand.vmem [shape: bf16[128,768], index: 6, kind: input, shape index: {}]
  %s7 = inlined_call_operand.vmem [shape: f32[2,1,384], index: 7, kind: input, shape index: {}]
  %s8 = inlined_call_operand.vmem [shape: f32[8,8,128], index: 8, kind: output, shape index: {0}]
  %s9 = inlined_call_operand.vmem [shape: f32[8,8,128], index: 9, kind: output, shape index: {1}]
  %s10 = inlined_call_operand.vmem [shape: f32[2,8,128], index: 10, kind: output, shape index: {2}]
  %11 = xla_tuple %s8, %s9, %s10
  %s12 = sld [smem:[#allocation0]]
  $region89: #{gru_block_forward.1} parent=0
    _
  %s14 = ssub.s32 1, %s12
  %s15 = scalar_select 0, %s14, %s12
  loop: start=0, step=1, limit=4
  $region2: #{gru_block_forward.1} parent=0 // loop_pre_header
    _
  $region3: #{gru_block_forward.1} parent=0 // loop_header
    %s17 = sphi 0, %s21
    %p18 = scmp.ge.s32.totalorder %s17, 4
    %s24 = sphi 0, %s36
    %s25 = sphi 0, %s32
    %s26 = sphi 0, %s24
    %s27 = sphi 0, %s25
    %s28 = sphi 0, %s26
    %s29 = sphi 0, %s27
    %s41 = sphi 0, %s43
    %s44 = sphi 0, %s41
    %s45 = sphi 0, %s44
    %s61 = sphi 0, %s45
    %s71 = sphi 0, %s73
    %s74 = sphi 0, %s71
    %s75 = sphi 0, %s74
    %s91 = sphi 0, %s75
    %s97 = sphi 0, %s99
    %s100 = sphi 0, %s97
    %s101 = sphi 0, %s100
    %s117 = sphi 0, %s101
    %s123 = sphi 0, %s125
    %s126 = sphi 0, %s123
    %s127 = sphi 0, %s126
    %s143 = sphi 0, %s127
    %s147 = sphi 0, %s147
    %s149 = sphi 0, %s147
    %s150 = sphi 0, %s149
    %s164 = sphi 0, %s150
    %s168 = sphi 0, %s168
    %s170 = sphi 0, %s168
    %s171 = sphi 0, %s170
    %s185 = sphi 0, %s171
    %s189 = sphi 0, %s189
    %s191 = sphi 0, %s189
    %s192 = sphi 0, %s191
    %s206 = sphi 0, %s192
    %s210 = sphi 0, %s210
    %s212 = sphi 0, %s210
    %s213 = sphi 0, %s212
    %s227 = sphi 0, %s213
    %s235 = sphi 0, %s237
    %s238 = sphi 0, %s235
    %s239 = sphi 0, %s238
    %s255 = sphi 0, %s239
    %s265 = sphi 0, %s267
    %s268 = sphi 0, %s265
    %s269 = sphi 0, %s268
    %s285 = sphi 0, %s269
    %s291 = sphi 0, %s293
    %s294 = sphi 0, %s291
    %s295 = sphi 0, %s294
    %s311 = sphi 0, %s295
  $region4: #{gru_block_forward.1} parent=0 // loop_header_branch
    %20 = sbr.rel (%p18) target = $region8
  $region5: #{gru_block_forward.1} parent=0 // loop_body
    %s22 = ssub.s32 %s17, 1
    %s23 = ssub.s32 %s17, 2
    %s30 = sadd.s32 1, %s25
    %p31 = scmp.ge.s32.totalorder %s30, 2
    %s32 = scalar_select %p31, 0, %s30
    %s33 = sadd.s32 1, %s24
    %s34 = scalar_select %p31, %s33, %s24
    %p35 = scmp.ge.s32.totalorder %s34, 1
    %s36 = scalar_select %p35, 0, %s34
    %s37 = ssub.s32 %s25, %s32
    %s38 = ssub.s32 %s24, %s36
    %s39 = sor.u32 %s37, %s38
    %p40 = scmp.eq.s32.totalorder %s39, 0
    %s42 = sadd.s32 %s41, 1
    %s43 = scalar_select %p40, %s41, %s42
    %p46 = pneg %p40
    %p47 = scmp.eq.s32.totalorder %s17, 1
    %p48 = por %p46, %p47
    %p49 = scmp.ne.s32.totalorder %s41, %s44
    %p50 = scmp.eq.s32.totalorder %s17, 0
    %p51 = por %p49, %p50
    %p52 = scmp.ne.s32.totalorder %s41, %s44
    %p53 = scmp.eq.s32.totalorder %s22, 1
    %p54 = por %p52, %p53
    %p55 = scmp.ne.s32.totalorder %s44, %s45
    %p56 = scmp.eq.s32.totalorder %s22, 0
    %p57 = por %p55, %p56
    %p58 = scmp.ne.s32.totalorder %s44, %s45
    %p59 = scmp.eq.s32.totalorder %s23, 1
    %p60 = por %p58, %p59
    %p62 = scmp.ne.s32.totalorder %s45, %s61
    %p63 = scmp.eq.s32.totalorder %s23, 0
    %p64 = por %p62, %p63
    %s65 = ssub.s32 1, %s25
    %s66 = ssub.s32 1, %s32
    %s67 = ssub.s32 %s65, %s66
    %s68 = ssub.s32 %s24, %s36
    %s69 = sor.u32 %s67, %s68
    %p70 = scmp.eq.s32.totalorder %s69, 0
    %s72 = sadd.s32 %s71, 1
    %s73 = scalar_select %p70, %s71, %s72
    %p76 = pneg %p70
    %p77 = scmp.eq.s32.totalorder %s17, 1
    %p78 = por %p76, %p77
    %p79 = scmp.ne.s32.totalorder %s71, %s74
    %p80 = scmp.eq.s32.totalorder %s17, 0
    %p81 = por %p79, %p80
    %p82 = scmp.ne.s32.totalorder %s71, %s74
    %p83 = scmp.eq.s32.totalorder %s22, 1
    %p84 = por %p82, %p83
    %p85 = scmp.ne.s32.totalorder %s74, %s75
    %p86 = scmp.eq.s32.totalorder %s22, 0
    %p87 = por %p85, %p86
    %p88 = scmp.ne.s32.totalorder %s74, %s75
    %p89 = scmp.eq.s32.totalorder %s23, 1
    %p90 = por %p88, %p89
    %p92 = scmp.ne.s32.totalorder %s75, %s91
    %p93 = scmp.eq.s32.totalorder %s23, 0
    %p94 = por %p92, %p93
    %s95 = ssub.s32 %s24, %s36
    %p96 = scmp.eq.s32.totalorder %s95, 0
    %s98 = sadd.s32 %s97, 1
    %s99 = scalar_select %p96, %s97, %s98
    %p102 = pneg %p96
    %p103 = scmp.eq.s32.totalorder %s17, 1
    %p104 = por %p102, %p103
    %p105 = scmp.ne.s32.totalorder %s97, %s100
    %p106 = scmp.eq.s32.totalorder %s17, 0
    %p107 = por %p105, %p106
    %p108 = scmp.ne.s32.totalorder %s97, %s100
    %p109 = scmp.eq.s32.totalorder %s22, 1
    %p110 = por %p108, %p109
    %p111 = scmp.ne.s32.totalorder %s100, %s101
    %p112 = scmp.eq.s32.totalorder %s22, 0
    %p113 = por %p111, %p112
    %p114 = scmp.ne.s32.totalorder %s100, %s101
    %p115 = scmp.eq.s32.totalorder %s23, 1
    %p116 = por %p114, %p115
    %p118 = scmp.ne.s32.totalorder %s101, %s117
    %p119 = scmp.eq.s32.totalorder %s23, 0
    %p120 = por %p118, %p119
    %s121 = ssub.s32 %s24, %s36
    %p122 = scmp.eq.s32.totalorder %s121, 0
    %s124 = sadd.s32 %s123, 1
    %s125 = scalar_select %p122, %s123, %s124
    %p128 = pneg %p122
    %p129 = scmp.eq.s32.totalorder %s17, 1
    %p130 = por %p128, %p129
    %p131 = scmp.ne.s32.totalorder %s123, %s126
    %p132 = scmp.eq.s32.totalorder %s17, 0
    %p133 = por %p131, %p132
    %p134 = scmp.ne.s32.totalorder %s123, %s126
    %p135 = scmp.eq.s32.totalorder %s22, 1
    %p136 = por %p134, %p135
    %p137 = scmp.ne.s32.totalorder %s126, %s127
    %p138 = scmp.eq.s32.totalorder %s22, 0
    %p139 = por %p137, %p138
    %p140 = scmp.ne.s32.totalorder %s126, %s127
    %p141 = scmp.eq.s32.totalorder %s23, 1
    %p142 = por %p140, %p141
    %p144 = scmp.ne.s32.totalorder %s127, %s143
    %p145 = scmp.eq.s32.totalorder %s23, 0
    %p146 = por %p144, %p145
    %s148 = sadd.s32 %s147, 1
    %p151 = scmp.eq.s32.totalorder %s17, 1
    %p152 = scmp.ne.s32.totalorder %s147, %s149
    %p153 = scmp.eq.s32.totalorder %s17, 0
    %p154 = por %p152, %p153
    %p155 = scmp.ne.s32.totalorder %s147, %s149
    %p156 = scmp.eq.s32.totalorder %s22, 1
    %p157 = por %p155, %p156
    %p158 = scmp.ne.s32.totalorder %s149, %s150
    %p159 = scmp.eq.s32.totalorder %s22, 0
    %p160 = por %p158, %p159
    %p161 = scmp.ne.s32.totalorder %s149, %s150
    %p162 = scmp.eq.s32.totalorder %s23, 1
    %p163 = por %p161, %p162
    %p165 = scmp.ne.s32.totalorder %s150, %s164
    %p166 = scmp.eq.s32.totalorder %s23, 0
    %p167 = por %p165, %p166
    %s169 = sadd.s32 %s168, 1
    %p172 = scmp.eq.s32.totalorder %s17, 1
    %p173 = scmp.ne.s32.totalorder %s168, %s170
    %p174 = scmp.eq.s32.totalorder %s17, 0
    %p175 = por %p173, %p174
    %p176 = scmp.ne.s32.totalorder %s168, %s170
    %p177 = scmp.eq.s32.totalorder %s22, 1
    %p178 = por %p176, %p177
    %p179 = scmp.ne.s32.totalorder %s170, %s171
    %p180 = scmp.eq.s32.totalorder %s22, 0
    %p181 = por %p179, %p180
    %p182 = scmp.ne.s32.totalorder %s170, %s171
    %p183 = scmp.eq.s32.totalorder %s23, 1
    %p184 = por %p182, %p183
    %p186 = scmp.ne.s32.totalorder %s171, %s185
    %p187 = scmp.eq.s32.totalorder %s23, 0
    %p188 = por %p186, %p187
    %s190 = sadd.s32 %s189, 1
    %p193 = scmp.eq.s32.totalorder %s17, 1
    %p194 = scmp.ne.s32.totalorder %s189, %s191
    %p195 = scmp.eq.s32.totalorder %s17, 0
    %p196 = por %p194, %p195
    %p197 = scmp.ne.s32.totalorder %s189, %s191
    %p198 = scmp.eq.s32.totalorder %s22, 1
    %p199 = por %p197, %p198
    %p200 = scmp.ne.s32.totalorder %s191, %s192
    %p201 = scmp.eq.s32.totalorder %s22, 0
    %p202 = por %p200, %p201
    %p203 = scmp.ne.s32.totalorder %s191, %s192
    %p204 = scmp.eq.s32.totalorder %s23, 1
    %p205 = por %p203, %p204
    %p207 = scmp.ne.s32.totalorder %s192, %s206
    %p208 = scmp.eq.s32.totalorder %s23, 0
    %p209 = por %p207, %p208
    %s211 = sadd.s32 %s210, 1
    %p214 = scmp.eq.s32.totalorder %s17, 1
    %p215 = scmp.ne.s32.totalorder %s210, %s212
    %p216 = scmp.eq.s32.totalorder %s17, 0
    %p217 = por %p215, %p216
    %p218 = scmp.ne.s32.totalorder %s210, %s212
    %p219 = scmp.eq.s32.totalorder %s22, 1
    %p220 = por %p218, %p219
    %p221 = scmp.ne.s32.totalorder %s212, %s213
    %p222 = scmp.eq.s32.totalorder %s22, 0
    %p223 = por %p221, %p222
    %p224 = scmp.ne.s32.totalorder %s212, %s213
    %p225 = scmp.eq.s32.totalorder %s23, 1
    %p226 = por %p224, %p225
    %p228 = scmp.ne.s32.totalorder %s213, %s227
    %p229 = scmp.eq.s32.totalorder %s23, 0
    %p230 = por %p228, %p229
    %s231 = ssub.s32 %s25, %s32
    %s232 = ssub.s32 %s24, %s36
    %s233 = sor.u32 %s231, %s232
    %p234 = scmp.eq.s32.totalorder %s233, 0
    %s236 = sadd.s32 %s235, 1
    %s237 = scalar_select %p234, %s235, %s236
    %p240 = pneg %p234
    %p241 = scmp.eq.s32.totalorder %s17, 1
    %p242 = por %p240, %p241
    %p243 = scmp.ne.s32.totalorder %s235, %s238
    %p244 = scmp.eq.s32.totalorder %s17, 0
    %p245 = por %p243, %p244
    %p246 = scmp.ne.s32.totalorder %s235, %s238
    %p247 = scmp.eq.s32.totalorder %s22, 1
    %p248 = por %p246, %p247
    %p249 = scmp.ne.s32.totalorder %s238, %s239
    %p250 = scmp.eq.s32.totalorder %s22, 0
    %p251 = por %p249, %p250
    %p252 = scmp.ne.s32.totalorder %s238, %s239
    %p253 = scmp.eq.s32.totalorder %s23, 1
    %p254 = por %p252, %p253
    %p256 = scmp.ne.s32.totalorder %s239, %s255
    %p257 = scmp.eq.s32.totalorder %s23, 0
    %p258 = por %p256, %p257
    %s259 = ssub.s32 1, %s25
    %s260 = ssub.s32 1, %s32
    %s261 = ssub.s32 %s259, %s260
    %s262 = ssub.s32 %s24, %s36
    %s263 = sor.u32 %s261, %s262
    %p264 = scmp.eq.s32.totalorder %s263, 0
    %s266 = sadd.s32 %s265, 1
    %s267 = scalar_select %p264, %s265, %s266
    %p270 = pneg %p264
    %p271 = scmp.eq.s32.totalorder %s17, 1
    %p272 = por %p270, %p271
    %p273 = scmp.ne.s32.totalorder %s265, %s268
    %p274 = scmp.eq.s32.totalorder %s17, 0
    %p275 = por %p273, %p274
    %p276 = scmp.ne.s32.totalorder %s265, %s268
    %p277 = scmp.eq.s32.totalorder %s22, 1
    %p278 = por %p276, %p277
    %p279 = scmp.ne.s32.totalorder %s268, %s269
    %p280 = scmp.eq.s32.totalorder %s22, 0
    %p281 = por %p279, %p280
    %p282 = scmp.ne.s32.totalorder %s268, %s269
    %p283 = scmp.eq.s32.totalorder %s23, 1
    %p284 = por %p282, %p283
    %p286 = scmp.ne.s32.totalorder %s269, %s285
    %p287 = scmp.eq.s32.totalorder %s23, 0
    %p288 = por %p286, %p287
    %s289 = ssub.s32 %s24, %s36
    %p290 = scmp.eq.s32.totalorder %s289, 0
    %s292 = sadd.s32 %s291, 1
    %s293 = scalar_select %p290, %s291, %s292
    %p296 = pneg %p290
    %p297 = scmp.eq.s32.totalorder %s17, 1
    %p298 = por %p296, %p297
    %p299 = scmp.ne.s32.totalorder %s291, %s294
    %p300 = scmp.eq.s32.totalorder %s17, 0
    %p301 = por %p299, %p300
    %p302 = scmp.ne.s32.totalorder %s291, %s294
    %p303 = scmp.eq.s32.totalorder %s22, 1
    %p304 = por %p302, %p303
    %p305 = scmp.ne.s32.totalorder %s294, %s295
    %p306 = scmp.eq.s32.totalorder %s22, 0
    %p307 = por %p305, %p306
    %p308 = scmp.ne.s32.totalorder %s294, %s295
    %p309 = scmp.eq.s32.totalorder %s23, 1
    %p310 = por %p308, %p309
    %p312 = scmp.ne.s32.totalorder %s295, %s311
    %p313 = scmp.eq.s32.totalorder %s23, 0
    %p314 = por %p312, %p313
    %p315 = scmp.le.s32.totalorder 1, %s17
    %p316 = scmp.lt.s32.totalorder %s17, 3
    %p317 = pnand %p315, %p316
    %p318 = pneg %p317
    // Predicated region
    $region9: #{gru_block_forward.1} parent=5 // pred_check
      _
    $region10: #{gru_block_forward.1} parent=5 // pred_check_branch
      %320 = sbr.rel (%p317) target = $region12
    $region11: #{gru_block_forward.1} parent=5 // pred_region
      %s321 = ssub.s32 %s17, 1
      // Predicated region
      $region13: #{gru_block_forward.1} parent=11 // pred_check
        %p322 = pneg %p113
      $region14: #{gru_block_forward.1} parent=11 // pred_check_branch
        %324 = sbr.rel (%p322) target = $region16
      $region15: #{gru_block_forward.1} parent=11 // pred_region
        %p325 = scmp.lt.s32.totalorder %s26, 0
        %s326 = scalar_select %p325, %s26, 0
        %s327 = smul.addr %s326, 8
        %s328 = scalar_lea.vmem %s2, %s327
      $region16: #{gru_block_forward.1} parent=11 // pred_fallthru
        _
      // Predicated region
      $region17: #{gru_block_forward.1} parent=11 // pred_check
        %p329 = pneg %p139
      $region18: #{gru_block_forward.1} parent=11 // pred_check_branch
        %331 = sbr.rel (%p329) target = $region20
      $region19: #{gru_block_forward.1} parent=11 // pred_region
        %p332 = scmp.lt.s32.totalorder %s26, 0
        %s333 = scalar_select %p332, %s26, 0
        %s334 = smul.addr %s333, 8
        %s335 = scalar_lea.vmem %s3, %s334
      $region20: #{gru_block_forward.1} parent=11 // pred_fallthru
        _
      // Predicated region
      $region21: #{gru_block_forward.1} parent=11 // pred_check
        %p336 = pneg %p160
      $region22: #{gru_block_forward.1} parent=11 // pred_check_branch
        %338 = sbr.rel (%p336) target = $region24
      $region23: #{gru_block_forward.1} parent=11 // pred_region
        _
      $region24: #{gru_block_forward.1} parent=11 // pred_fallthru
        _
      // Predicated region
      $region25: #{gru_block_forward.1} parent=11 // pred_check
        %p339 = pneg %p181
      $region26: #{gru_block_forward.1} parent=11 // pred_check_branch
        %341 = sbr.rel (%p339) target = $region28
      $region27: #{gru_block_forward.1} parent=11 // pred_region
        _
      $region28: #{gru_block_forward.1} parent=11 // pred_fallthru
        _
      // Predicated region
      $region29: #{gru_block_forward.1} parent=11 // pred_check
        %p342 = pneg %p202
      $region30: #{gru_block_forward.1} parent=11 // pred_check_branch
        %344 = sbr.rel (%p342) target = $region32
      $region31: #{gru_block_forward.1} parent=11 // pred_region
        _
      $region32: #{gru_block_forward.1} parent=11 // pred_fallthru
        _
      // Predicated region
      $region33: #{gru_block_forward.1} parent=11 // pred_check
        %p345 = pneg %p223
      $region34: #{gru_block_forward.1} parent=11 // pred_check_branch
        %347 = sbr.rel (%p345) target = $region36
      $region35: #{gru_block_forward.1} parent=11 // pred_region
        _
      $region36: #{gru_block_forward.1} parent=11 // pred_fallthru
        _
    $region12: #{gru_block_forward.1} parent=5 // pred_fallthru
      _
    %p348 = scmp.lt.s32.totalorder %s17, 2
    // Predicated region
    $region37: #{gru_block_forward.1} parent=5 // pred_check
      %p349 = pneg %p348
    $region38: #{gru_block_forward.1} parent=5 // pred_check_branch
      %351 = sbr.rel (%p349) target = $region40
    $region39: #{gru_block_forward.1} parent=5 // pred_region
      // Predicated region
      $region41: #{gru_block_forward.1} parent=39 // pred_check
        %p352 = pneg %p51
      $region42: #{gru_block_forward.1} parent=39 // pred_check_branch
        %354 = sbr.rel (%p352) target = $region44
      $region43: #{gru_block_forward.1} parent=39 // pred_region
        %s355 = smul.u32 4, %s25
        %p356 = scmp.lt.s32.totalorder %s355, 7
        %s357 = scalar_select %p356, %s355, 7
        %p358 = scmp.lt.s32.totalorder %s24, 0
        %s359 = scalar_select %p358, %s24, 0
        %s360 = sadd.s32 %s359, %s357
        %s361 = smul.addr %s360, 4
        %s362 = scalar_lea.vmem %s0, %s361
        %s363 = smul.u32 4, %s25
      $region44: #{gru_block_forward.1} parent=39 // pred_fallthru
        _
      // Predicated region
      $region45: #{gru_block_forward.1} parent=39 // pred_check
        %p364 = pneg %p81
      $region46: #{gru_block_forward.1} parent=39 // pred_check_branch
        %366 = sbr.rel (%p364) target = $region48
      $region47: #{gru_block_forward.1} parent=39 // pred_region
        %s367 = ssub.s32 1, %s25
        %s368 = smul.u32 4, %s367
        %p369 = scmp.lt.s32.totalorder %s368, 7
        %s370 = scalar_select %p369, %s368, 7
        %p371 = scmp.lt.s32.totalorder %s24, 0
        %s372 = scalar_select %p371, %s24, 0
        %s373 = sadd.s32 %s372, %s370
        %s374 = smul.addr %s373, 4
        %s375 = scalar_lea.vmem %s1, %s374
        %s376 = ssub.s32 1, %s25
        %s377 = smul.u32 4, %s376
      $region48: #{gru_block_forward.1} parent=39 // pred_fallthru
        _
    $region40: #{gru_block_forward.1} parent=5 // pred_fallthru
      _
    %p378 = scmp.le.s32.totalorder 1, %s17
    %p379 = scmp.lt.s32.totalorder %s17, 3
    %p380 = pnand %p378, %p379
    %p381 = pneg %p380
    // Predicated region
    $region49: #{gru_block_forward.1} parent=5 // pred_check
      _
    $region50: #{gru_block_forward.1} parent=5 // pred_check_branch
      %383 = sbr.rel (%p380) target = $region52
    $region51: #{gru_block_forward.1} parent=5 // pred_region
      %s384 = ssub.s32 %s17, 1
      %s385 = smul.u32 4, %s27
      %p386 = scmp.lt.s32.totalorder %s385, 7
      %s387 = scalar_select %p386, %s385, 7
      %p388 = scmp.lt.s32.totalorder %s26, 0
      %s389 = scalar_select %p388, %s26, 0
      %s390 = sadd.s32 %s389, %s387
      %s391 = smul.addr %s390, 4
      %s392 = scalar_lea.vmem %s0, %s391
      %p393 = pneg %p57
      %p394 = pneg %p54
      %s395 = ssub.s32 1, %s27
      %s396 = smul.u32 4, %s395
      %p397 = scmp.lt.s32.totalorder %s396, 7
      %s398 = scalar_select %p397, %s396, 7
      %p399 = scmp.lt.s32.totalorder %s26, 0
      %s400 = scalar_select %p399, %s26, 0
      %s401 = sadd.s32 %s400, %s398
      %s402 = smul.addr %s401, 4
      %s403 = scalar_lea.vmem %s1, %s402
      %p404 = pneg %p87
      %p405 = pneg %p84
      %p406 = scmp.lt.s32.totalorder %s26, 0
      %s407 = scalar_select %p406, %s26, 0
      %s408 = smul.addr %s407, 8
      %s409 = scalar_lea.vmem %s2, %s408
      %p410 = pneg %p113
      %p411 = pneg %p110
      %p412 = scmp.lt.s32.totalorder %s26, 0
      %s413 = scalar_select %p412, %s26, 0
      %s414 = smul.addr %s413, 8
      %s415 = scalar_lea.vmem %s3, %s414
      %p416 = pneg %p139
      %p417 = pneg %p136
      %p418 = pneg %p160
      %p419 = pneg %p157
      %p420 = pneg %p181
      %p421 = pneg %p178
      %p422 = pneg %p202
      %p423 = pneg %p199
      %p424 = pneg %p223
      %p425 = pneg %p220
      %p426 = pneg %p251
      %p427 = pneg %p248
      %s428 = smul.u32 4, %s27
      %p429 = scmp.lt.s32.totalorder %s428, 7
      %s430 = scalar_select %p429, %s428, 7
      %p431 = scmp.lt.s32.totalorder %s26, 0
      %s432 = scalar_select %p431, %s26, 0
      %s433 = sadd.s32 %s432, %s430
      %s434 = smul.addr %s433, 8
      %s435 = scalar_lea.vmem %s8, %s434
      %p436 = pneg %p281
      %p437 = pneg %p278
      %s438 = ssub.s32 1, %s27
      %s439 = smul.u32 4, %s438
      %p440 = scmp.lt.s32.totalorder %s439, 7
      %s441 = scalar_select %p440, %s439, 7
      %p442 = scmp.lt.s32.totalorder %s26, 0
      %s443 = scalar_select %p442, %s26, 0
      %s444 = sadd.s32 %s443, %s441
      %s445 = smul.addr %s444, 8
      %s446 = scalar_lea.vmem %s9, %s445
      %p447 = pneg %p307
      %p448 = pneg %p304
      %p449 = scmp.lt.s32.totalorder %s26, 0
      %s450 = scalar_select %p449, %s26, 0
      %s451 = smul.addr %s450, 8
      %s452 = scalar_lea.vmem %s10, %s451
      %s453 = smul.u32 4, %s27
      %p454 = scmp.lt.s32.totalorder %s453, 7
      %s455 = scalar_select %p454, %s453, 7
      %p456 = scmp.lt.s32.totalorder %s26, 0
      %s457 = scalar_select %p456, %s26, 0
      %s458 = sadd.s32 %s457, %s455
      %s459 = smul.addr %s458, 4
      %s460 = scalar_lea.vmem %s0, %s459
      %s461 = smul.u32 4, %s27
      %s462 = ssub.s32 1, %s27
      %s463 = smul.u32 4, %s462
      %p464 = scmp.lt.s32.totalorder %s463, 7
      %s465 = scalar_select %p464, %s463, 7
      %p466 = scmp.lt.s32.totalorder %s26, 0
      %s467 = scalar_select %p466, %s26, 0
      %s468 = sadd.s32 %s467, %s465
      %s469 = smul.addr %s468, 4
      %s470 = scalar_lea.vmem %s1, %s469
      %s471 = ssub.s32 1, %s27
      %s472 = smul.u32 4, %s471
      %p473 = scmp.lt.s32.totalorder %s26, 0
      %s474 = scalar_select %p473, %s26, 0
      %s475 = smul.addr %s474, 8
      %s476 = scalar_lea.vmem %s2, %s475
      %p477 = scmp.lt.s32.totalorder %s26, 0
      %s478 = scalar_select %p477, %s26, 0
      %s479 = smul.addr %s478, 8
      %s480 = scalar_lea.vmem %s3, %s479
      %s481 = smul.u32 4, %s27
      %p482 = scmp.lt.s32.totalorder %s481, 7
      %s483 = scalar_select %p482, %s481, 7
      %p484 = scmp.lt.s32.totalorder %s26, 0
      %s485 = scalar_select %p484, %s26, 0
      %s486 = sadd.s32 %s485, %s483
      %s487 = smul.addr %s486, 8
      %s488 = scalar_lea.vmem %s8, %s487
      %s489 = smul.u32 4, %s27
      %s490 = ssub.s32 1, %s27
      %s491 = smul.u32 4, %s490
      %p492 = scmp.lt.s32.totalorder %s491, 7
      %s493 = scalar_select %p492, %s491, 7
      %p494 = scmp.lt.s32.totalorder %s26, 0
      %s495 = scalar_select %p494, %s26, 0
      %s496 = sadd.s32 %s495, %s493
      %s497 = smul.addr %s496, 8
      %s498 = scalar_lea.vmem %s9, %s497
      %s499 = ssub.s32 1, %s27
      %s500 = smul.u32 4, %s499
      %p501 = scmp.lt.s32.totalorder %s26, 0
      %s502 = scalar_select %p501, %s26, 0
      %s503 = smul.addr %s502, 8
      %s504 = scalar_lea.vmem %s10, %s503
      %p506 = scmp.eq.s32.totalorder %s27, 0
      // Predicated region
      $region53: #{gru_block_forward.1} parent=51 // pred_check
        %p507 = pneg %p506
      $region54: #{gru_block_forward.1} parent=51 // pred_check_branch
        %509 = sbr.rel (%p507) target = $region56
      $region55: #{gru_block_forward.1} parent=51 // pred_region
        %v510 = vld [vmem:[%s480] sm:$0xff]
        %v511 = vld [vmem:[%s480 + $0x8] sm:$0xff]
        %512 = vst [vmem:[#allocation2] sm:$0xff] %v510
        %513 = vst [vmem:[#allocation2 + $0x8] sm:$0xff] %v511
      $region56: #{gru_block_forward.1} parent=51 // pred_fallthru
        _
      %v514 = vld [vmem:[%s460] sm:$0xf]
      %v515 = vld [vmem:[%s460 + $0x4] sm:$0xf]
      %v516 = vld [vmem:[%s460 + $0x8] sm:$0xf]
      %v517 = vld [vmem:[%s460 + $0xc] sm:$0xf]
      %v518 = vld [vmem:[%s470] sm:$0xf]
      %v519 = vld [vmem:[%s470 + $0x4] sm:$0xf]
      %v520 = vld [vmem:[%s470 + $0x8] sm:$0xf]
      %v521 = vld [vmem:[%s470 + $0xc] sm:$0xf]
      %v522 = vld [vmem:[%s4] sm:$0xff]
      %v523 = vld [vmem:[%s4 + $0x8] sm:$0xf]
      %v524 = vld [vmem:[%s4 + $0xc] sm:$0xff]
      %v525 = vld [vmem:[%s4 + $0x14] sm:$0xf]
      %v526 = vld [vmem:[%s4 + $0x18] sm:$0xff]
      %v527 = vld [vmem:[%s4 + $0x20] sm:$0xf]
      %v528 = vld [vmem:[%s4 + $0x24] sm:$0xff]
      %v529 = vld [vmem:[%s4 + $0x2c] sm:$0xf]
      %v530 = vld [vmem:[%s4 + $0x30] sm:$0xff]
      %v531 = vld [vmem:[%s4 + $0x38] sm:$0xf]
      %v532 = vld [vmem:[%s4 + $0x3c] sm:$0xff]
      %v533 = vld [vmem:[%s4 + $0x44] sm:$0xf]
      %v534 = vld [vmem:[%s4 + $0x48] sm:$0xff]
      %v535 = vld [vmem:[%s4 + $0x50] sm:$0xf]
      %v536 = vld [vmem:[%s4 + $0x54] sm:$0xff]
      %v537 = vld [vmem:[%s4 + $0x5c] sm:$0xf]
      %v538 = vld [vmem:[%s4 + $0x60] sm:$0xff]
      %v539 = vld [vmem:[%s4 + $0x68] sm:$0xf]
      %v540 = vld [vmem:[%s4 + $0x6c] sm:$0xff]
      %v541 = vld [vmem:[%s4 + $0x74] sm:$0xf]
      %v542 = vld [vmem:[%s4 + $0x78] sm:$0xff]
      %v543 = vld [vmem:[%s4 + $0x80] sm:$0xf]
      %v544 = vld [vmem:[%s4 + $0x84] sm:$0xff]
      %v545 = vld [vmem:[%s4 + $0x8c] sm:$0xf]
      %v546 = vld [vmem:[%s4 + $0x90] sm:$0xff]
      %v547 = vld [vmem:[%s4 + $0x98] sm:$0xf]
      %v548 = vld [vmem:[%s4 + $0x9c] sm:$0xff]
      %v549 = vld [vmem:[%s4 + $0xa4] sm:$0xf]
      %v550 = vld [vmem:[%s4 + $0xa8] sm:$0xff]
      %v551 = vld [vmem:[%s4 + $0xb0] sm:$0xf]
      %v552 = vld [vmem:[%s4 + $0xb4] sm:$0xff]
      %v553 = vld [vmem:[%s4 + $0xbc] sm:$0xf]
      %v554 = vld [vmem:[%s5] sm:$0x7]
      %v556 = vlaneseq
      %v557 = vshrl.u32 %v556, 7
      %v558 = vsub.s32 0, %v557
      %v559 = vrot.slane %v554, %v558
      %v560 = vlaneseq
      %v561 = vshrl.u32 %v560, 7
      %v562 = vsub.s32 1, %v561
      %v563 = vrot.slane %v554, %v562
      %v564 = vlaneseq
      %v565 = vshrl.u32 %v564, 7
      %v566 = vsub.s32 2, %v565
      %v567 = vrot.slane %v554, %v566
      %v575 = vunpack.c.l.b16 %v514
      %v576 = vunpack.c.l.b16 %v515
      %v577 = vunpack.c.l.b16 %v516
      %v578 = vunpack.c.l.b16 %v517
      %v579 = vpack.c.b16 %v576, %v575
      %v580 = vpack.c.b16 %v578, %v577
      %v615 = vunpack.c.l.b16 %v522
      %v616 = vunpack.c.h.b16 %v522
      %v617 = vunpack.c.l.b16 %v523
      %v618 = vunpack.c.l.b16 %v524
      %v619 = vunpack.c.h.b16 %v524
      %v620 = vunpack.c.l.b16 %v525
      %v621 = vunpack.c.l.b16 %v526
      %v622 = vunpack.c.h.b16 %v526
      %v623 = vunpack.c.l.b16 %v527
      %v624 = vunpack.c.l.b16 %v528
      %v625 = vunpack.c.h.b16 %v528
      %v626 = vunpack.c.l.b16 %v529
      %v627 = vunpack.c.l.b16 %v530
      %v628 = vunpack.c.h.b16 %v530
      %v629 = vunpack.c.l.b16 %v531
      %v630 = vunpack.c.l.b16 %v532
      %v631 = vunpack.c.h.b16 %v532
      %v632 = vunpack.c.l.b16 %v533
      %v633 = vunpack.c.l.b16 %v534
      %v634 = vunpack.c.h.b16 %v534
      %v635 = vunpack.c.l.b16 %v535
      %v636 = vunpack.c.l.b16 %v536
      %v637 = vunpack.c.h.b16 %v536
      %v638 = vunpack.c.l.b16 %v537
      %v639 = vunpack.c.l.b16 %v538
      %v640 = vunpack.c.h.b16 %v538
      %v641 = vunpack.c.l.b16 %v539
      %v642 = vunpack.c.l.b16 %v540
      %v643 = vunpack.c.h.b16 %v540
      %v644 = vunpack.c.l.b16 %v541
      %v645 = vunpack.c.l.b16 %v542
      %v646 = vunpack.c.h.b16 %v542
      %v647 = vunpack.c.l.b16 %v543
      %v648 = vunpack.c.l.b16 %v544
      %v649 = vunpack.c.h.b16 %v544
      %v650 = vunpack.c.l.b16 %v545
      %v651 = vunpack.c.l.b16 %v546
      %v652 = vunpack.c.h.b16 %v546
      %v653 = vunpack.c.l.b16 %v547
      %v654 = vunpack.c.l.b16 %v548
      %v655 = vunpack.c.h.b16 %v548
      %v656 = vunpack.c.l.b16 %v549
      %v657 = vunpack.c.l.b16 %v550
      %v658 = vunpack.c.h.b16 %v550
      %v659 = vunpack.c.l.b16 %v551
      %v660 = vunpack.c.l.b16 %v552
      %v661 = vunpack.c.h.b16 %v552
      %v662 = vunpack.c.l.b16 %v553
      %v663 = vpack.c.b16 %v618, %v615
      %v664 = vpack.c.b16 %v619, %v616
      %v665 = vpack.c.b16 %v620, %v617
      %v666 = vpack.c.b16 %v624, %v621
      %v667 = vpack.c.b16 %v625, %v622
      %v668 = vpack.c.b16 %v626, %v623
      %v669 = vpack.c.b16 %v630, %v627
      %v670 = vpack.c.b16 %v631, %v628
      %v671 = vpack.c.b16 %v632, %v629
      %v672 = vpack.c.b16 %v636, %v633
      %v673 = vpack.c.b16 %v637, %v634
      %v674 = vpack.c.b16 %v638, %v635
      %v675 = vpack.c.b16 %v642, %v639
      %v676 = vpack.c.b16 %v643, %v640
      %v677 = vpack.c.b16 %v644, %v641
      %v678 = vpack.c.b16 %v648, %v645
      %v679 = vpack.c.b16 %v649, %v646
      %v680 = vpack.c.b16 %v650, %v647
      %v681 = vpack.c.b16 %v654, %v651
      %v682 = vpack.c.b16 %v655, %v652
      %v683 = vpack.c.b16 %v656, %v653
      %v684 = vpack.c.b16 %v660, %v657
      %v685 = vpack.c.b16 %v661, %v658
      %v686 = vpack.c.b16 %v662, %v659
      %711 = vmatprep.subr.bf16.mxu0 %v685
      %712 = vmatpush1.bf16.msra.mxu0 %v684
      %713 = vmatprep.subr.bf16.mxu0 %v682
      %714 = vmatpush1.bf16.msra.mxu0 %v681
      %715 = vmatprep.subr.bf16.mxu0 %v679
      %716 = vmatpush1.bf16.msra.mxu0 %v678
      %717 = vmatprep.subr.bf16.mxu0 %v676
      %718 = vmatpush1.bf16.msra.mxu0 %v675
      %719 = vmatprep.subr.bf16.mxu0 %v673
      %720 = vmatpush1.bf16.msra.mxu0 %v672
      %721 = vmatprep.subr.bf16.mxu0 %v670
      %722 = vmatpush1.bf16.msra.mxu0 %v669
      %723 = vmatprep.subr.bf16.mxu0 %v667
      %724 = vmatpush1.bf16.msra.mxu0 %v666
      %725 = vmatprep.subr.bf16.mxu0 %v664
      %726 = vmatpush1.bf16.msra.mxu0 %v663
      %727 = vmatprep.subr.bf16.mxu0 0
      %728 = vmatpush2.bf16.msra.mxu0 0
      %729 = vmatprep.subr.bf16.mxu0 0
      %730 = vmatpush2.bf16.msra.mxu0 0
      %731 = vmatprep.subr.bf16.mxu0 0
      %732 = vmatpush2.bf16.msra.mxu0 0
      %733 = vmatprep.subr.bf16.mxu0 0
      %734 = vmatpush2.bf16.msra.mxu0 0
      %735 = vmatprep.subr.bf16.mxu0 0
      %736 = vmatpush2.bf16.msra.mxu0 0
      %737 = vmatprep.subr.bf16.mxu0 0
      %738 = vmatpush2.bf16.msra.mxu0 0
      %739 = vmatprep.subr.bf16.mxu0 0
      %740 = vmatpush2.bf16.msra.mxu0 0
      %741 = vmatprep.subr.bf16.mxu0 0
      %742 = vmatpush2.bf16.msra.mxu0 0
      %743 = vmatprep.mubr.bf16.mxu0 0
      %744 = vmatmul.mubr.bf16.gmra.mxu0 %v579
      %v745 = vpop.f32.mrf.mxu0
      %v746 = vadd.f32 %v559, %v745
      %v747 = vpop.f32.mrf.mxu0
      %v748 = vadd.f32 %v563, %v747
      %v749 = vpop.f32.mrf.mxu0
      %v750 = vadd.f32 %v559, %v749
      %v751 = vpop.f32.mrf.mxu0
      %v752 = vadd.f32 %v563, %v751
      %753 = vmatprep.mubr.bf16.mxu0 0
      %754 = vmatmul.mubr.bf16.gmra.mxu0 %v580
      %v755 = vpop.f32.mrf.mxu0
      %v756 = vadd.f32 %v559, %v755
      %v757 = vpop.f32.mrf.mxu0
      %v758 = vadd.f32 %v563, %v757
      %v759 = vpop.f32.mrf.mxu0
      %v760 = vadd.f32 %v559, %v759
      %v761 = vpop.f32.mrf.mxu0
      %v762 = vadd.f32 %v563, %v761
      %763 = vdwg.mxu0
      %764 = vmatprep.subr.bf16.mxu0 0
      %765 = vmatpush1.bf16.msra.mxu0 %v686
      %766 = vmatprep.subr.bf16.mxu0 0
      %767 = vmatpush1.bf16.msra.mxu0 %v683
      %768 = vmatprep.subr.bf16.mxu0 0
      %769 = vmatpush1.bf16.msra.mxu0 %v680
      %770 = vmatprep.subr.bf16.mxu0 0
      %771 = vmatpush1.bf16.msra.mxu0 %v677
      %772 = vmatprep.subr.bf16.mxu0 0
      %773 = vmatpush1.bf16.msra.mxu0 %v674
      %774 = vmatprep.subr.bf16.mxu0 0
      %775 = vmatpush1.bf16.msra.mxu0 %v671
      %776 = vmatprep.subr.bf16.mxu0 0
      %777 = vmatpush1.bf16.msra.mxu0 %v668
      %778 = vmatprep.subr.bf16.mxu0 0
      %779 = vmatpush1.bf16.msra.mxu0 %v665
      %780 = vmatprep.subr.bf16.mxu0 0
      %781 = vmatpush2.bf16.msra.mxu0 0
      %782 = vmatprep.subr.bf16.mxu0 0
      %783 = vmatpush2.bf16.msra.mxu0 0
      %784 = vmatprep.subr.bf16.mxu0 0
      %785 = vmatpush2.bf16.msra.mxu0 0
      %786 = vmatprep.subr.bf16.mxu0 0
      %787 = vmatpush2.bf16.msra.mxu0 0
      %788 = vmatprep.subr.bf16.mxu0 0
      %789 = vmatpush2.bf16.msra.mxu0 0
      %790 = vmatprep.subr.bf16.mxu0 0
      %791 = vmatpush2.bf16.msra.mxu0 0
      %792 = vmatprep.subr.bf16.mxu0 0
      %793 = vmatpush2.bf16.msra.mxu0 0
      %794 = vmatprep.subr.bf16.mxu0 0
      %795 = vmatpush2.bf16.msra.mxu0 0
      %796 = vmatprep.mubr.bf16.mxu0 0
      %797 = vmatmul.mubr.bf16.gmra.mxu0 %v579
      %v798 = vpop.f32.mrf.mxu0
      %v799 = vadd.f32 %v567, %v798
      %v800 = vpop.f32.mrf.mxu0
      %v801 = vpop.f32.mrf.mxu0
      %v802 = vadd.f32 %v567, %v801
      %v803 = vpop.f32.mrf.mxu0
      %804 = vmatprep.mubr.bf16.mxu0 0
      %805 = vmatmul.mubr.bf16.gmra.mxu0 %v580
      %v806 = vpop.f32.mrf.mxu0
      %v807 = vadd.f32 %v567, %v806
      %v808 = vpop.f32.mrf.mxu0
      %v809 = vpop.f32.mrf.mxu0
      %v810 = vadd.f32 %v567, %v809
      %v811 = vpop.f32.mrf.mxu0
      %812 = vdwg.mxu0
      %813 = vst [vmem:[#allocation3] sm:$0xff] %v746
      %814 = vst [vmem:[#allocation3 + $0x8] sm:$0xff] %v748
      %815 = vst [vmem:[#allocation3 + $0x10] sm:$0xff] %v799
      %816 = vst [vmem:[#allocation3 + $0x18] sm:$0xff] %v750
      %817 = vst [vmem:[#allocation3 + $0x20] sm:$0xff] %v752
      %818 = vst [vmem:[#allocation3 + $0x28] sm:$0xff] %v802
      %819 = vst [vmem:[#allocation3 + $0x30] sm:$0xff] %v756
      %820 = vst [vmem:[#allocation3 + $0x38] sm:$0xff] %v758
      %821 = vst [vmem:[#allocation3 + $0x40] sm:$0xff] %v807
      %822 = vst [vmem:[#allocation3 + $0x48] sm:$0xff] %v760
      %823 = vst [vmem:[#allocation3 + $0x50] sm:$0xff] %v762
      %824 = vst [vmem:[#allocation3 + $0x58] sm:$0xff] %v810
      %s825 = scalar_lea.vmem %s4, 192
      %v826 = vld [vmem:[%s825] sm:$0xff]
      %v827 = vld [vmem:[%s825 + $0x8] sm:$0xf]
      %v828 = vld [vmem:[%s825 + $0xc] sm:$0xff]
      %v829 = vld [vmem:[%s825 + $0x14] sm:$0xf]
      %v830 = vld [vmem:[%s825 + $0x18] sm:$0xff]
      %v831 = vld [vmem:[%s825 + $0x20] sm:$0xf]
      %v832 = vld [vmem:[%s825 + $0x24] sm:$0xff]
      %v833 = vld [vmem:[%s825 + $0x2c] sm:$0xf]
      %v834 = vld [vmem:[%s825 + $0x30] sm:$0xff]
      %v835 = vld [vmem:[%s825 + $0x38] sm:$0xf]
      %v836 = vld [vmem:[%s825 + $0x3c] sm:$0xff]
      %v837 = vld [vmem:[%s825 + $0x44] sm:$0xf]
      %v838 = vld [vmem:[%s825 + $0x48] sm:$0xff]
      %v839 = vld [vmem:[%s825 + $0x50] sm:$0xf]
      %v840 = vld [vmem:[%s825 + $0x54] sm:$0xff]
      %v841 = vld [vmem:[%s825 + $0x5c] sm:$0xf]
      %v842 = vld [vmem:[%s825 + $0x60] sm:$0xff]
      %v843 = vld [vmem:[%s825 + $0x68] sm:$0xf]
      %v844 = vld [vmem:[%s825 + $0x6c] sm:$0xff]
      %v845 = vld [vmem:[%s825 + $0x74] sm:$0xf]
      %v846 = vld [vmem:[%s825 + $0x78] sm:$0xff]
      %v847 = vld [vmem:[%s825 + $0x80] sm:$0xf]
      %v848 = vld [vmem:[%s825 + $0x84] sm:$0xff]
      %v849 = vld [vmem:[%s825 + $0x8c] sm:$0xf]
      %v850 = vld [vmem:[%s825 + $0x90] sm:$0xff]
      %v851 = vld [vmem:[%s825 + $0x98] sm:$0xf]
      %v852 = vld [vmem:[%s825 + $0x9c] sm:$0xff]
      %v853 = vld [vmem:[%s825 + $0xa4] sm:$0xf]
      %v854 = vld [vmem:[%s825 + $0xa8] sm:$0xff]
      %v855 = vld [vmem:[%s825 + $0xb0] sm:$0xf]
      %v856 = vld [vmem:[%s825 + $0xb4] sm:$0xff]
      %v857 = vld [vmem:[%s825 + $0xbc] sm:$0xf]
      %s858 = scalar_lea.vmem %s5, 3
      %v859 = vld [vmem:[%s858] sm:$0x7]
      %v861 = vlaneseq
      %v862 = vshrl.u32 %v861, 7
      %v863 = vsub.s32 0, %v862
      %v864 = vrot.slane %v859, %v863
      %v865 = vlaneseq
      %v866 = vshrl.u32 %v865, 7
      %v867 = vsub.s32 1, %v866
      %v868 = vrot.slane %v859, %v867
      %v869 = vlaneseq
      %v870 = vshrl.u32 %v869, 7
      %v871 = vsub.s32 2, %v870
      %v872 = vrot.slane %v859, %v871
      %v880 = vunpack.c.l.b16 %v518
      %v881 = vunpack.c.l.b16 %v519
      %v882 = vunpack.c.l.b16 %v520
      %v883 = vunpack.c.l.b16 %v521
      %v884 = vpack.c.b16 %v881, %v880
      %v885 = vpack.c.b16 %v883, %v882
      %v920 = vunpack.c.l.b16 %v826
      %v921 = vunpack.c.h.b16 %v826
      %v922 = vunpack.c.l.b16 %v827
      %v923 = vunpack.c.l.b16 %v828
      %v924 = vunpack.c.h.b16 %v828
      %v925 = vunpack.c.l.b16 %v829
      %v926 = vunpack.c.l.b16 %v830
      %v927 = vunpack.c.h.b16 %v830
      %v928 = vunpack.c.l.b16 %v831
      %v929 = vunpack.c.l.b16 %v832
      %v930 = vunpack.c.h.b16 %v832
      %v931 = vunpack.c.l.b16 %v833
      %v932 = vunpack.c.l.b16 %v834
      %v933 = vunpack.c.h.b16 %v834
      %v934 = vunpack.c.l.b16 %v835
      %v935 = vunpack.c.l.b16 %v836
      %v936 = vunpack.c.h.b16 %v836
      %v937 = vunpack.c.l.b16 %v837
      %v938 = vunpack.c.l.b16 %v838
      %v939 = vunpack.c.h.b16 %v838
      %v940 = vunpack.c.l.b16 %v839
      %v941 = vunpack.c.l.b16 %v840
      %v942 = vunpack.c.h.b16 %v840
      %v943 = vunpack.c.l.b16 %v841
      %v944 = vunpack.c.l.b16 %v842
      %v945 = vunpack.c.h.b16 %v842
      %v946 = vunpack.c.l.b16 %v843
      %v947 = vunpack.c.l.b16 %v844
      %v948 = vunpack.c.h.b16 %v844
      %v949 = vunpack.c.l.b16 %v845
      %v950 = vunpack.c.l.b16 %v846
      %v951 = vunpack.c.h.b16 %v846
      %v952 = vunpack.c.l.b16 %v847
      %v953 = vunpack.c.l.b16 %v848
      %v954 = vunpack.c.h.b16 %v848
      %v955 = vunpack.c.l.b16 %v849
      %v956 = vunpack.c.l.b16 %v850
      %v957 = vunpack.c.h.b16 %v850
      %v958 = vunpack.c.l.b16 %v851
      %v959 = vunpack.c.l.b16 %v852
      %v960 = vunpack.c.h.b16 %v852
      %v961 = vunpack.c.l.b16 %v853
      %v962 = vunpack.c.l.b16 %v854
      %v963 = vunpack.c.h.b16 %v854
      %v964 = vunpack.c.l.b16 %v855
      %v965 = vunpack.c.l.b16 %v856
      %v966 = vunpack.c.h.b16 %v856
      %v967 = vunpack.c.l.b16 %v857
      %v968 = vpack.c.b16 %v923, %v920
      %v969 = vpack.c.b16 %v924, %v921
      %v970 = vpack.c.b16 %v925, %v922
      %v971 = vpack.c.b16 %v929, %v926
      %v972 = vpack.c.b16 %v930, %v927
      %v973 = vpack.c.b16 %v931, %v928
      %v974 = vpack.c.b16 %v935, %v932
      %v975 = vpack.c.b16 %v936, %v933
      %v976 = vpack.c.b16 %v937, %v934
      %v977 = vpack.c.b16 %v941, %v938
      %v978 = vpack.c.b16 %v942, %v939
      %v979 = vpack.c.b16 %v943, %v940
      %v980 = vpack.c.b16 %v947, %v944
      %v981 = vpack.c.b16 %v948, %v945
      %v982 = vpack.c.b16 %v949, %v946
      %v983 = vpack.c.b16 %v953, %v950
      %v984 = vpack.c.b16 %v954, %v951
      %v985 = vpack.c.b16 %v955, %v952
      %v986 = vpack.c.b16 %v959, %v956
      %v987 = vpack.c.b16 %v960, %v957
      %v988 = vpack.c.b16 %v961, %v958
      %v989 = vpack.c.b16 %v965, %v962
      %v990 = vpack.c.b16 %v966, %v963
      %v991 = vpack.c.b16 %v967, %v964
      %1016 = vmatprep.subr.bf16.mxu0 %v990
      %1017 = vmatpush1.bf16.msra.mxu0 %v989
      %1018 = vmatprep.subr.bf16.mxu0 %v987
      %1019 = vmatpush1.bf16.msra.mxu0 %v986
      %1020 = vmatprep.subr.bf16.mxu0 %v984
      %1021 = vmatpush1.bf16.msra.mxu0 %v983
      %1022 = vmatprep.subr.bf16.mxu0 %v981
      %1023 = vmatpush1.bf16.msra.mxu0 %v980
      %1024 = vmatprep.subr.bf16.mxu0 %v978
      %1025 = vmatpush1.bf16.msra.mxu0 %v977
      %1026 = vmatprep.subr.bf16.mxu0 %v975
      %1027 = vmatpush1.bf16.msra.mxu0 %v974
      %1028 = vmatprep.subr.bf16.mxu0 %v972
      %1029 = vmatpush1.bf16.msra.mxu0 %v971
      %1030 = vmatprep.subr.bf16.mxu0 %v969
      %1031 = vmatpush1.bf16.msra.mxu0 %v968
      %1032 = vmatprep.subr.bf16.mxu0 0
      %1033 = vmatpush2.bf16.msra.mxu0 0
      %1034 = vmatprep.subr.bf16.mxu0 0
      %1035 = vmatpush2.bf16.msra.mxu0 0
      %1036 = vmatprep.subr.bf16.mxu0 0
      %1037 = vmatpush2.bf16.msra.mxu0 0
      %1038 = vmatprep.subr.bf16.mxu0 0
      %1039 = vmatpush2.bf16.msra.mxu0 0
      %1040 = vmatprep.subr.bf16.mxu0 0
      %1041 = vmatpush2.bf16.msra.mxu0 0
      %1042 = vmatprep.subr.bf16.mxu0 0
      %1043 = vmatpush2.bf16.msra.mxu0 0
      %1044 = vmatprep.subr.bf16.mxu0 0
      %1045 = vmatpush2.bf16.msra.mxu0 0
      %1046 = vmatprep.subr.bf16.mxu0 0
      %1047 = vmatpush2.bf16.msra.mxu0 0
      %1048 = vmatprep.mubr.bf16.mxu0 0
      %1049 = vmatmul.mubr.bf16.gmra.mxu0 %v884
      %v1050 = vpop.f32.mrf.mxu0
      %v1051 = vadd.f32 %v864, %v1050
      %v1052 = vpop.f32.mrf.mxu0
      %v1053 = vadd.f32 %v868, %v1052
      %v1054 = vpop.f32.mrf.mxu0
      %v1055 = vadd.f32 %v864, %v1054
      %v1056 = vpop.f32.mrf.mxu0
      %v1057 = vadd.f32 %v868, %v1056
      %1058 = vmatprep.mubr.bf16.mxu0 0
      %1059 = vmatmul.mubr.bf16.gmra.mxu0 %v885
      %v1060 = vpop.f32.mrf.mxu0
      %v1061 = vadd.f32 %v864, %v1060
      %v1062 = vpop.f32.mrf.mxu0
      %v1063 = vadd.f32 %v868, %v1062
      %v1064 = vpop.f32.mrf.mxu0
      %v1065 = vadd.f32 %v864, %v1064
      %v1066 = vpop.f32.mrf.mxu0
      %v1067 = vadd.f32 %v868, %v1066
      %1068 = vdwg.mxu0
      %1069 = vmatprep.subr.bf16.mxu0 0
      %1070 = vmatpush1.bf16.msra.mxu0 %v991
      %1071 = vmatprep.subr.bf16.mxu0 0
      %1072 = vmatpush1.bf16.msra.mxu0 %v988
      %1073 = vmatprep.subr.bf16.mxu0 0
      %1074 = vmatpush1.bf16.msra.mxu0 %v985
      %1075 = vmatprep.subr.bf16.mxu0 0
      %1076 = vmatpush1.bf16.msra.mxu0 %v982
      %1077 = vmatprep.subr.bf16.mxu0 0
      %1078 = vmatpush1.bf16.msra.mxu0 %v979
      %1079 = vmatprep.subr.bf16.mxu0 0
      %1080 = vmatpush1.bf16.msra.mxu0 %v976
      %1081 = vmatprep.subr.bf16.mxu0 0
      %1082 = vmatpush1.bf16.msra.mxu0 %v973
      %1083 = vmatprep.subr.bf16.mxu0 0
      %1084 = vmatpush1.bf16.msra.mxu0 %v970
      %1085 = vmatprep.subr.bf16.mxu0 0
      %1086 = vmatpush2.bf16.msra.mxu0 0
      %1087 = vmatprep.subr.bf16.mxu0 0
      %1088 = vmatpush2.bf16.msra.mxu0 0
      %1089 = vmatprep.subr.bf16.mxu0 0
      %1090 = vmatpush2.bf16.msra.mxu0 0
      %1091 = vmatprep.subr.bf16.mxu0 0
      %1092 = vmatpush2.bf16.msra.mxu0 0
      %1093 = vmatprep.subr.bf16.mxu0 0
      %1094 = vmatpush2.bf16.msra.mxu0 0
      %1095 = vmatprep.subr.bf16.mxu0 0
      %1096 = vmatpush2.bf16.msra.mxu0 0
      %1097 = vmatprep.subr.bf16.mxu0 0
      %1098 = vmatpush2.bf16.msra.mxu0 0
      %1099 = vmatprep.subr.bf16.mxu0 0
      %1100 = vmatpush2.bf16.msra.mxu0 0
      %1101 = vmatprep.mubr.bf16.mxu0 0
      %1102 = vmatmul.mubr.bf16.gmra.mxu0 %v884
      %v1103 = vpop.f32.mrf.mxu0
      %v1104 = vadd.f32 %v872, %v1103
      %v1105 = vpop.f32.mrf.mxu0
      %v1106 = vpop.f32.mrf.mxu0
      %v1107 = vadd.f32 %v872, %v1106
      %v1108 = vpop.f32.mrf.mxu0
      %1109 = vmatprep.mubr.bf16.mxu0 0
      %1110 = vmatmul.mubr.bf16.gmra.mxu0 %v885
      %v1111 = vpop.f32.mrf.mxu0
      %v1112 = vadd.f32 %v872, %v1111
      %v1113 = vpop.f32.mrf.mxu0
      %v1114 = vpop.f32.mrf.mxu0
      %v1115 = vadd.f32 %v872, %v1114
      %v1116 = vpop.f32.mrf.mxu0
      %1117 = vdwg.mxu0
      %1118 = vst [vmem:[#allocation4] sm:$0xff] %v1051
      %1119 = vst [vmem:[#allocation4 + $0x8] sm:$0xff] %v1053
      %1120 = vst [vmem:[#allocation4 + $0x10] sm:$0xff] %v1104
      %1121 = vst [vmem:[#allocation4 + $0x18] sm:$0xff] %v1055
      %1122 = vst [vmem:[#allocation4 + $0x20] sm:$0xff] %v1057
      %1123 = vst [vmem:[#allocation4 + $0x28] sm:$0xff] %v1107
      %1124 = vst [vmem:[#allocation4 + $0x30] sm:$0xff] %v1061
      %1125 = vst [vmem:[#allocation4 + $0x38] sm:$0xff] %v1063
      %1126 = vst [vmem:[#allocation4 + $0x40] sm:$0xff] %v1112
      %1127 = vst [vmem:[#allocation4 + $0x48] sm:$0xff] %v1065
      %1128 = vst [vmem:[#allocation4 + $0x50] sm:$0xff] %v1067
      %1129 = vst [vmem:[#allocation4 + $0x58] sm:$0xff] %v1115
      %v1130 = vld [vmem:[%s476] sm:$0xff]
      %v1131 = vld [vmem:[%s6] sm:$0xff]
      %v1132 = vld [vmem:[%s6 + $0x8] sm:$0xff]
      %v1133 = vld [vmem:[%s6 + $0x10] sm:$0xff]
      %v1134 = vld [vmem:[%s6 + $0x18] sm:$0xff]
      %v1135 = vld [vmem:[%s6 + $0x20] sm:$0xff]
      %v1136 = vld [vmem:[%s6 + $0x28] sm:$0xff]
      %v1137 = vld [vmem:[%s6 + $0x30] sm:$0xff]
      %v1138 = vld [vmem:[%s6 + $0x38] sm:$0xff]
      %v1139 = vld [vmem:[%s6 + $0x40] sm:$0xff]
      %v1140 = vld [vmem:[%s6 + $0x48] sm:$0xff]
      %v1141 = vld [vmem:[%s6 + $0x50] sm:$0xff]
      %v1142 = vld [vmem:[%s6 + $0x58] sm:$0xff]
      %v1143 = vld [vmem:[%s6 + $0x60] sm:$0xff]
      %v1144 = vld [vmem:[%s6 + $0x68] sm:$0xff]
      %v1145 = vld [vmem:[%s6 + $0x70] sm:$0xff]
      %v1146 = vld [vmem:[%s6 + $0x78] sm:$0xff]
      %v1147 = vld [vmem:[%s6 + $0x80] sm:$0xff]
      %v1148 = vld [vmem:[%s6 + $0x88] sm:$0xff]
      %v1149 = vld [vmem:[%s6 + $0x90] sm:$0xff]
      %v1150 = vld [vmem:[%s6 + $0x98] sm:$0xff]
      %v1151 = vld [vmem:[%s6 + $0xa0] sm:$0xff]
      %v1152 = vld [vmem:[%s6 + $0xa8] sm:$0xff]
      %v1153 = vld [vmem:[%s6 + $0xb0] sm:$0xff]
      %v1154 = vld [vmem:[%s6 + $0xb8] sm:$0xff]
      %v1155 = vld [vmem:[%s6 + $0xc0] sm:$0xff]
      %v1156 = vld [vmem:[%s6 + $0xc8] sm:$0xff]
      %v1157 = vld [vmem:[%s6 + $0xd0] sm:$0xff]
      %v1158 = vld [vmem:[%s6 + $0xd8] sm:$0xff]
      %v1159 = vld [vmem:[%s6 + $0xe0] sm:$0xff]
      %v1160 = vld [vmem:[%s6 + $0xe8] sm:$0xff]
      %v1161 = vld [vmem:[%s6 + $0xf0] sm:$0xff]
      %v1162 = vld [vmem:[%s6 + $0xf8] sm:$0xff]
      %v1163 = vld [vmem:[%s6 + $0x100] sm:$0xff]
      %v1164 = vld [vmem:[%s6 + $0x108] sm:$0xff]
      %v1165 = vld [vmem:[%s6 + $0x110] sm:$0xff]
      %v1166 = vld [vmem:[%s6 + $0x118] sm:$0xff]
      %v1167 = vld [vmem:[%s6 + $0x120] sm:$0xff]
      %v1168 = vld [vmem:[%s6 + $0x128] sm:$0xff]
      %v1169 = vld [vmem:[%s6 + $0x130] sm:$0xff]
      %v1170 = vld [vmem:[%s6 + $0x138] sm:$0xff]
      %v1171 = vld [vmem:[%s6 + $0x140] sm:$0xff]
      %v1172 = vld [vmem:[%s6 + $0x148] sm:$0xff]
      %v1173 = vld [vmem:[%s6 + $0x150] sm:$0xff]
      %v1174 = vld [vmem:[%s6 + $0x158] sm:$0xff]
      %v1175 = vld [vmem:[%s6 + $0x160] sm:$0xff]
      %v1176 = vld [vmem:[%s6 + $0x168] sm:$0xff]
      %v1177 = vld [vmem:[%s6 + $0x170] sm:$0xff]
      %v1178 = vld [vmem:[%s6 + $0x178] sm:$0xff]
      %v1179 = vld [vmem:[%s7] sm:$0x7]
      %s1180 = scalar_lea.vmem %s7, 3
      %v1181 = vld [vmem:[%s1180] sm:$0x7]
      %s1182 = smul.u32 %s27, 4
      %v1183 = vld [vmem:[#allocation2] sm:$0xff]
      %v1184 = vld [vmem:[#allocation2 + $0x8] sm:$0xff]
      %v1185 = vpack.c.bf16 %v1184, %v1183
      %v1234 = vunpack.c.l.b16 %v1131
      %v1235 = vunpack.c.h.b16 %v1131
      %v1236 = vunpack.c.l.b16 %v1132
      %v1237 = vunpack.c.h.b16 %v1132
      %v1238 = vunpack.c.l.b16 %v1133
      %v1239 = vunpack.c.h.b16 %v1133
      %v1240 = vunpack.c.l.b16 %v1134
      %v1241 = vunpack.c.h.b16 %v1134
      %v1242 = vunpack.c.l.b16 %v1135
      %v1243 = vunpack.c.h.b16 %v1135
      %v1244 = vunpack.c.l.b16 %v1136
      %v1245 = vunpack.c.h.b16 %v1136
      %v1246 = vunpack.c.l.b16 %v1137
      %v1247 = vunpack.c.h.b16 %v1137
      %v1248 = vunpack.c.l.b16 %v1138
      %v1249 = vunpack.c.h.b16 %v1138
      %v1250 = vunpack.c.l.b16 %v1139
      %v1251 = vunpack.c.h.b16 %v1139
      %v1252 = vunpack.c.l.b16 %v1140
      %v1253 = vunpack.c.h.b16 %v1140
      %v1254 = vunpack.c.l.b16 %v1141
      %v1255 = vunpack.c.h.b16 %v1141
      %v1256 = vunpack.c.l.b16 %v1142
      %v1257 = vunpack.c.h.b16 %v1142
      %v1258 = vunpack.c.l.b16 %v1143
      %v1259 = vunpack.c.h.b16 %v1143
      %v1260 = vunpack.c.l.b16 %v1144
      %v1261 = vunpack.c.h.b16 %v1144
      %v1262 = vunpack.c.l.b16 %v1145
      %v1263 = vunpack.c.h.b16 %v1145
      %v1264 = vunpack.c.l.b16 %v1146
      %v1265 = vunpack.c.h.b16 %v1146
      %v1266 = vunpack.c.l.b16 %v1147
      %v1267 = vunpack.c.h.b16 %v1147
      %v1268 = vunpack.c.l.b16 %v1148
      %v1269 = vunpack.c.h.b16 %v1148
      %v1270 = vunpack.c.l.b16 %v1149
      %v1271 = vunpack.c.h.b16 %v1149
      %v1272 = vunpack.c.l.b16 %v1150
      %v1273 = vunpack.c.h.b16 %v1150
      %v1274 = vunpack.c.l.b16 %v1151
      %v1275 = vunpack.c.h.b16 %v1151
      %v1276 = vunpack.c.l.b16 %v1152
      %v1277 = vunpack.c.h.b16 %v1152
      %v1278 = vunpack.c.l.b16 %v1153
      %v1279 = vunpack.c.h.b16 %v1153
      %v1280 = vunpack.c.l.b16 %v1154
      %v1281 = vunpack.c.h.b16 %v1154
      %v1282 = vunpack.c.l.b16 %v1155
      %v1283 = vunpack.c.h.b16 %v1155
      %v1284 = vunpack.c.l.b16 %v1156
      %v1285 = vunpack.c.h.b16 %v1156
      %v1286 = vunpack.c.l.b16 %v1157
      %v1287 = vunpack.c.h.b16 %v1157
      %v1288 = vunpack.c.l.b16 %v1158
      %v1289 = vunpack.c.h.b16 %v1158
      %v1290 = vunpack.c.l.b16 %v1159
      %v1291 = vunpack.c.h.b16 %v1159
      %v1292 = vunpack.c.l.b16 %v1160
      %v1293 = vunpack.c.h.b16 %v1160
      %v1294 = vunpack.c.l.b16 %v1161
      %v1295 = vunpack.c.h.b16 %v1161
      %v1296 = vunpack.c.l.b16 %v1162
      %v1297 = vunpack.c.h.b16 %v1162
      %v1298 = vunpack.c.l.b16 %v1163
      %v1299 = vunpack.c.h.b16 %v1163
      %v1300 = vunpack.c.l.b16 %v1164
      %v1301 = vunpack.c.h.b16 %v1164
      %v1302 = vunpack.c.l.b16 %v1165
      %v1303 = vunpack.c.h.b16 %v1165
      %v1304 = vunpack.c.l.b16 %v1166
      %v1305 = vunpack.c.h.b16 %v1166
      %v1306 = vunpack.c.l.b16 %v1167
      %v1307 = vunpack.c.h.b16 %v1167
      %v1308 = vunpack.c.l.b16 %v1168
      %v1309 = vunpack.c.h.b16 %v1168
      %v1310 = vunpack.c.l.b16 %v1169
      %v1311 = vunpack.c.h.b16 %v1169
      %v1312 = vunpack.c.l.b16 %v1170
      %v1313 = vunpack.c.h.b16 %v1170
      %v1314 = vunpack.c.l.b16 %v1171
      %v1315 = vunpack.c.h.b16 %v1171
      %v1316 = vunpack.c.l.b16 %v1172
      %v1317 = vunpack.c.h.b16 %v1172
      %v1318 = vunpack.c.l.b16 %v1173
      %v1319 = vunpack.c.h.b16 %v1173
      %v1320 = vunpack.c.l.b16 %v1174
      %v1321 = vunpack.c.h.b16 %v1174
      %v1322 = vunpack.c.l.b16 %v1175
      %v1323 = vunpack.c.h.b16 %v1175
      %v1324 = vunpack.c.l.b16 %v1176
      %v1325 = vunpack.c.h.b16 %v1176
      %v1326 = vunpack.c.l.b16 %v1177
      %v1327 = vunpack.c.h.b16 %v1177
      %v1328 = vunpack.c.l.b16 %v1178
      %v1329 = vunpack.c.h.b16 %v1178
      %v1330 = vpack.c.b16 %v1240, %v1234
      %v1331 = vpack.c.b16 %v1241, %v1235
      %v1332 = vpack.c.b16 %v1242, %v1236
      %v1333 = vpack.c.b16 %v1243, %v1237
      %v1334 = vpack.c.b16 %v1244, %v1238
      %v1335 = vpack.c.b16 %v1245, %v1239
      %v1336 = vpack.c.b16 %v1252, %v1246
      %v1337 = vpack.c.b16 %v1253, %v1247
      %v1338 = vpack.c.b16 %v1254, %v1248
      %v1339 = vpack.c.b16 %v1255, %v1249
      %v1340 = vpack.c.b16 %v1256, %v1250
      %v1341 = vpack.c.b16 %v1257, %v1251
      %v1342 = vpack.c.b16 %v1264, %v1258
      %v1343 = vpack.c.b16 %v1265, %v1259
      %v1344 = vpack.c.b16 %v1266, %v1260
      %v1345 = vpack.c.b16 %v1267, %v1261
      %v1346 = vpack.c.b16 %v1268, %v1262
      %v1347 = vpack.c.b16 %v1269, %v1263
      %v1348 = vpack.c.b16 %v1276, %v1270
      %v1349 = vpack.c.b16 %v1277, %v1271
      %v1350 = vpack.c.b16 %v1278, %v1272
      %v1351 = vpack.c.b16 %v1279, %v1273
      %v1352 = vpack.c.b16 %v1280, %v1274
      %v1353 = vpack.c.b16 %v1281, %v1275
      %v1354 = vpack.c.b16 %v1288, %v1282
      %v1355 = vpack.c.b16 %v1289, %v1283
      %v1356 = vpack.c.b16 %v1290, %v1284
      %v1357 = vpack.c.b16 %v1291, %v1285
      %v1358 = vpack.c.b16 %v1292, %v1286
      %v1359 = vpack.c.b16 %v1293, %v1287
      %v1360 = vpack.c.b16 %v1300, %v1294
      %v1361 = vpack.c.b16 %v1301, %v1295
      %v1362 = vpack.c.b16 %v1302, %v1296
      %v1363 = vpack.c.b16 %v1303, %v1297
      %v1364 = vpack.c.b16 %v1304, %v1298
      %v1365 = vpack.c.b16 %v1305, %v1299
      %v1366 = vpack.c.b16 %v1312, %v1306
      %v1367 = vpack.c.b16 %v1313, %v1307
      %v1368 = vpack.c.b16 %v1314, %v1308
      %v1369 = vpack.c.b16 %v1315, %v1309
      %v1370 = vpack.c.b16 %v1316, %v1310
      %v1371 = vpack.c.b16 %v1317, %v1311
      %v1372 = vpack.c.b16 %v1324, %v1318
      %v1373 = vpack.c.b16 %v1325, %v1319
      %v1374 = vpack.c.b16 %v1326, %v1320
      %v1375 = vpack.c.b16 %v1327, %v1321
      %v1376 = vpack.c.b16 %v1328, %v1322
      %v1377 = vpack.c.b16 %v1329, %v1323
      %1426 = vmatprep.subr.bf16.mxu0 %v1373
      %1427 = vmatpush1.bf16.msra.mxu0 %v1372
      %1428 = vmatprep.subr.bf16.mxu0 %v1367
      %1429 = vmatpush1.bf16.msra.mxu0 %v1366
      %1430 = vmatprep.subr.bf16.mxu0 %v1361
      %1431 = vmatpush1.bf16.msra.mxu0 %v1360
      %1432 = vmatprep.subr.bf16.mxu0 %v1355
      %1433 = vmatpush1.bf16.msra.mxu0 %v1354
      %1434 = vmatprep.subr.bf16.mxu0 %v1349
      %1435 = vmatpush1.bf16.msra.mxu0 %v1348
      %1436 = vmatprep.subr.bf16.mxu0 %v1343
      %1437 = vmatpush1.bf16.msra.mxu0 %v1342
      %1438 = vmatprep.subr.bf16.mxu0 %v1337
      %1439 = vmatpush1.bf16.msra.mxu0 %v1336
      %1440 = vmatprep.subr.bf16.mxu0 %v1331
      %1441 = vmatpush1.bf16.msra.mxu0 %v1330
      %1442 = vmatprep.subr.bf16.mxu0 0
      %1443 = vmatpush2.bf16.msra.mxu0 0
      %1444 = vmatprep.subr.bf16.mxu0 0
      %1445 = vmatpush2.bf16.msra.mxu0 0
      %1446 = vmatprep.subr.bf16.mxu0 0
      %1447 = vmatpush2.bf16.msra.mxu0 0
      %1448 = vmatprep.subr.bf16.mxu0 0
      %1449 = vmatpush2.bf16.msra.mxu0 0
      %1450 = vmatprep.subr.bf16.mxu0 0
      %1451 = vmatpush2.bf16.msra.mxu0 0
      %1452 = vmatprep.subr.bf16.mxu0 0
      %1453 = vmatpush2.bf16.msra.mxu0 0
      %1454 = vmatprep.subr.bf16.mxu0 0
      %1455 = vmatpush2.bf16.msra.mxu0 0
      %1456 = vmatprep.subr.bf16.mxu0 0
      %1457 = vmatpush2.bf16.msra.mxu0 0
      %1458 = vmatprep.mubr.bf16.mxu0 0
      %1459 = vmatmul.mubr.bf16.gmra.mxu0 %v1185
      %v1460 = vpop.f32.mrf.mxu0
      %v1461 = vadd.f32 0.0, %v1460
      %v1462 = vpop.f32.mrf.mxu0
      %v1463 = vadd.f32 0.0, %v1462
      %v1464 = vpop.f32.mrf.mxu0
      %v1465 = vpop.f32.mrf.mxu0
      %1466 = vdwg.mxu0
      %1467 = vmatprep.subr.bf16.mxu0 %v1375
      %1468 = vmatpush1.bf16.msra.mxu0 %v1374
      %1469 = vmatprep.subr.bf16.mxu0 %v1369
      %1470 = vmatpush1.bf16.msra.mxu0 %v1368
      %1471 = vmatprep.subr.bf16.mxu0 %v1363
      %1472 = vmatpush1.bf16.msra.mxu0 %v1362
      %1473 = vmatprep.subr.bf16.mxu0 %v1357
      %1474 = vmatpush1.bf16.msra.mxu0 %v1356
      %1475 = vmatprep.subr.bf16.mxu0 %v1351
      %1476 = vmatpush1.bf16.msra.mxu0 %v1350
      %1477 = vmatprep.subr.bf16.mxu0 %v1345
      %1478 = vmatpush1.bf16.msra.mxu0 %v1344
      %1479 = vmatprep.subr.bf16.mxu0 %v1339
      %1480 = vmatpush1.bf16.msra.mxu0 %v1338
      %1481 = vmatprep.subr.bf16.mxu0 %v1333
      %1482 = vmatpush1.bf16.msra.mxu0 %v1332
      %1483 = vmatprep.subr.bf16.mxu0 0
      %1484 = vmatpush2.bf16.msra.mxu0 0
      %1485 = vmatprep.subr.bf16.mxu0 0
      %1486 = vmatpush2.bf16.msra.mxu0 0
      %1487 = vmatprep.subr.bf16.mxu0 0
      %1488 = vmatpush2.bf16.msra.mxu0 0
      %1489 = vmatprep.subr.bf16.mxu0 0
      %1490 = vmatpush2.bf16.msra.mxu0 0
      %1491 = vmatprep.subr.bf16.mxu0 0
      %1492 = vmatpush2.bf16.msra.mxu0 0
      %1493 = vmatprep.subr.bf16.mxu0 0
      %1494 = vmatpush2.bf16.msra.mxu0 0
      %1495 = vmatprep.subr.bf16.mxu0 0
      %1496 = vmatpush2.bf16.msra.mxu0 0
      %1497 = vmatprep.subr.bf16.mxu0 0
      %1498 = vmatpush2.bf16.msra.mxu0 0
      %1499 = vmatprep.mubr.bf16.mxu0 0
      %1500 = vmatmul.mubr.bf16.gmra.mxu0 %v1185
      %v1501 = vpop.f32.mrf.mxu0
      %v1502 = vadd.f32 0.0, %v1501
      %v1503 = vpop.f32.mrf.mxu0
      %v1504 = vpop.f32.mrf.mxu0
      %v1505 = vpop.f32.mrf.mxu0
      %v1506 = vadd.f32 0.0, %v1505
      %1507 = vdwg.mxu0
      %1508 = vmatprep.subr.bf16.mxu0 %v1377
      %1509 = vmatpush1.bf16.msra.mxu0 %v1376
      %1510 = vmatprep.subr.bf16.mxu0 %v1371
      %1511 = vmatpush1.bf16.msra.mxu0 %v1370
      %1512 = vmatprep.subr.bf16.mxu0 %v1365
      %1513 = vmatpush1.bf16.msra.mxu0 %v1364
      %1514 = vmatprep.subr.bf16.mxu0 %v1359
      %1515 = vmatpush1.bf16.msra.mxu0 %v1358
      %1516 = vmatprep.subr.bf16.mxu0 %v1353
      %1517 = vmatpush1.bf16.msra.mxu0 %v1352
      %1518 = vmatprep.subr.bf16.mxu0 %v1347
      %1519 = vmatpush1.bf16.msra.mxu0 %v1346
      %1520 = vmatprep.subr.bf16.mxu0 %v1341
      %1521 = vmatpush1.bf16.msra.mxu0 %v1340
      %1522 = vmatprep.subr.bf16.mxu0 %v1335
      %1523 = vmatpush1.bf16.msra.mxu0 %v1334
      %1524 = vmatprep.subr.bf16.mxu0 0
      %1525 = vmatpush2.bf16.msra.mxu0 0
      %1526 = vmatprep.subr.bf16.mxu0 0
      %1527 = vmatpush2.bf16.msra.mxu0 0
      %1528 = vmatprep.subr.bf16.mxu0 0
      %1529 = vmatpush2.bf16.msra.mxu0 0
      %1530 = vmatprep.subr.bf16.mxu0 0
      %1531 = vmatpush2.bf16.msra.mxu0 0
      %1532 = vmatprep.subr.bf16.mxu0 0
      %1533 = vmatpush2.bf16.msra.mxu0 0
      %1534 = vmatprep.subr.bf16.mxu0 0
      %1535 = vmatpush2.bf16.msra.mxu0 0
      %1536 = vmatprep.subr.bf16.mxu0 0
      %1537 = vmatpush2.bf16.msra.mxu0 0
      %1538 = vmatprep.subr.bf16.mxu0 0
      %1539 = vmatpush2.bf16.msra.mxu0 0
      %1540 = vmatprep.mubr.bf16.mxu0 0
      %1541 = vmatmul.mubr.bf16.gmra.mxu0 %v1185
      %v1542 = vpop.f32.mrf.mxu0
      %v1543 = vpop.f32.mrf.mxu0
      %v1544 = vpop.f32.mrf.mxu0
      %v1545 = vadd.f32 0.0, %v1544
      %v1546 = vpop.f32.mrf.mxu0
      %v1547 = vadd.f32 0.0, %v1546
      %1548 = vdwg.mxu0
      %v1550 = vlaneseq
      %v1551 = vshrl.u32 %v1550, 7
      %v1552 = vsub.s32 0, %v1551
      %v1553 = vrot.slane %v1179, %v1552
      %v1554 = vlaneseq
      %v1555 = vshrl.u32 %v1554, 7
      %v1556 = vsub.s32 1, %v1555
      %v1557 = vrot.slane %v1179, %v1556
      %v1558 = vlaneseq
      %v1559 = vshrl.u32 %v1558, 7
      %v1560 = vsub.s32 2, %v1559
      %v1561 = vrot.slane %v1179, %v1560
      %v1565 = vadd.f32 %v1461, %v1553
      %v1566 = vadd.f32 %v1463, %v1557
      %v1567 = vadd.f32 %v1502, %v1561
      %v1569 = vlaneseq
      %v1570 = vshrl.u32 %v1569, 7
      %v1571 = vsub.s32 0, %v1570
      %v1572 = vrot.slane %v1181, %v1571
      %v1573 = vlaneseq
      %v1574 = vshrl.u32 %v1573, 7
      %v1575 = vsub.s32 1, %v1574
      %v1576 = vrot.slane %v1181, %v1575
      %v1577 = vlaneseq
      %v1578 = vshrl.u32 %v1577, 7
      %v1579 = vsub.s32 2, %v1578
      %v1580 = vrot.slane %v1181, %v1579
      %v1584 = vadd.f32 %v1506, %v1572
      %v1585 = vadd.f32 %v1545, %v1576
      %v1586 = vadd.f32 %v1547, %v1580
      %v1587 = vld [vmem:[#allocation3] sm:$0xff]
      %v1588 = vld [vmem:[#allocation3 + $0x8] sm:$0xff]
      %v1589 = vld [vmem:[#allocation3 + $0x10] sm:$0xff]
      %v1590 = vadd.f32 %v1587, %v1565
      %v1591 = vxor.u32 %v1590, 2147483648
      %v1592 = vmul.f32 %v1591, 1.442695
      %v1593 = vpow.pop %v1592
      %v1594 = vadd.f32 %v1593, 1.0
      %v1595 = vrcp.pop %v1594
      %v1596 = vmul.f32 1.0, %v1595
      %v1597 = vadd.f32 %v1588, %v1566
      %v1598 = vxor.u32 %v1597, 2147483648
      %v1599 = vmul.f32 %v1598, 1.442695
      %v1600 = vpow.pop %v1599
      %v1601 = vadd.f32 %v1600, 1.0
      %v1602 = vrcp.pop %v1601
      %v1603 = vmul.f32 1.0, %v1602
      %v1604 = vmul.f32 %v1596, %v1567
      %v1605 = vadd.f32 %v1589, %v1604
      %v1606 = vtanh.pop %v1605
      %v1607 = vsub.f32 1.0, %v1603
      %v1608 = vmul.f32 %v1607, %v1606
      %v1609 = vmul.f32 %v1603, %v1183
      %v1610 = vadd.f32 %v1608, %v1609
      %v1611 = vstv %s1182
      %vm1612 = vcmp.gt.s32.totalorder %v1130, %v1611
      %v1613 = vsel %vm1612, 1, 0
      %1614 = vset.pattern.permute.xlu0 0
      %1615 = vperm.xlu0 %1614, %v1613
      %v1616 = vpop.permute.xlu0 %1615
      %vm1617 = vcmp.eq.s32.totalorder %v1616, 1
      %v1618 = vsel %vm1617, %v1610, %v1183
      %v1619 = vsel %vm1617, %v1610, 0.0
      %1620 = vst [vmem:[%s488] sm:$0xff] %v1619
      %s1621 = ssub.s32 7, %s1182
      %s1622 = scalar_lea.vmem [#allocation4], 72
      %v1623 = vld [vmem:[%s1622] sm:$0xff]
      %v1624 = vld [vmem:[%s1622 + $0x8] sm:$0xff]
      %v1625 = vld [vmem:[%s1622 + $0x10] sm:$0xff]
      %v1626 = vadd.f32 %v1623, %v1584
      %v1627 = vxor.u32 %v1626, 2147483648
      %v1628 = vmul.f32 %v1627, 1.442695
      %v1629 = vpow.pop %v1628
      %v1630 = vadd.f32 %v1629, 1.0
      %v1631 = vrcp.pop %v1630
      %v1632 = vmul.f32 1.0, %v1631
      %v1633 = vadd.f32 %v1624, %v1585
      %v1634 = vxor.u32 %v1633, 2147483648
      %v1635 = vmul.f32 %v1634, 1.442695
      %v1636 = vpow.pop %v1635
      %v1637 = vadd.f32 %v1636, 1.0
      %v1638 = vrcp.pop %v1637
      %v1639 = vmul.f32 1.0, %v1638
      %v1640 = vmul.f32 %v1632, %v1586
      %v1641 = vadd.f32 %v1625, %v1640
      %v1642 = vtanh.pop %v1641
      %v1643 = vsub.f32 1.0, %v1639
      %v1644 = vmul.f32 %v1643, %v1642
      %v1645 = vmul.f32 %v1639, %v1184
      %v1646 = vadd.f32 %v1644, %v1645
      %v1647 = vstv %s1621
      %vm1648 = vcmp.gt.s32.totalorder %v1130, %v1647
      %v1649 = vsel %vm1648, 1, 0
      %1650 = vset.pattern.permute.xlu0 0
      %1651 = vperm.xlu0 %1650, %v1649
      %v1652 = vpop.permute.xlu0 %1651
      %vm1653 = vcmp.eq.s32.totalorder %v1652, 1
      %v1654 = vsel %vm1653, %v1646, %v1184
      %v1655 = vsel %vm1653, %v1646, 0.0
      %s1656 = scalar_lea.vmem %s498, 24
      %1657 = vst [vmem:[%s1656] sm:$0xff] %v1655
      %v1658 = vpack.c.bf16 %v1654, %v1618
      %1659 = vmatprep.subr.bf16.mxu0 %v1373
      %1660 = vmatpush1.bf16.msra.mxu0 %v1372
      %1661 = vmatprep.subr.bf16.mxu0 %v1367
      %1662 = vmatpush1.bf16.msra.mxu0 %v1366
      %1663 = vmatprep.subr.bf16.mxu0 %v1361
      %1664 = vmatpush1.bf16.msra.mxu0 %v1360
      %1665 = vmatprep.subr.bf16.mxu0 %v1355
      %1666 = vmatpush1.bf16.msra.mxu0 %v1354
      %1667 = vmatprep.subr.bf16.mxu0 %v1349
      %1668 = vmatpush1.bf16.msra.mxu0 %v1348
      %1669 = vmatprep.subr.bf16.mxu0 %v1343
      %1670 = vmatpush1.bf16.msra.mxu0 %v1342
      %1671 = vmatprep.subr.bf16.mxu0 %v1337
      %1672 = vmatpush1.bf16.msra.mxu0 %v1336
      %1673 = vmatprep.subr.bf16.mxu0 %v1331
      %1674 = vmatpush1.bf16.msra.mxu0 %v1330
      %1675 = vmatprep.subr.bf16.mxu0 0
      %1676 = vmatpush2.bf16.msra.mxu0 0
      %1677 = vmatprep.subr.bf16.mxu0 0
      %1678 = vmatpush2.bf16.msra.mxu0 0
      %1679 = vmatprep.subr.bf16.mxu0 0
      %1680 = vmatpush2.bf16.msra.mxu0 0
      %1681 = vmatprep.subr.bf16.mxu0 0
      %1682 = vmatpush2.bf16.msra.mxu0 0
      %1683 = vmatprep.subr.bf16.mxu0 0
      %1684 = vmatpush2.bf16.msra.mxu0 0
      %1685 = vmatprep.subr.bf16.mxu0 0
      %1686 = vmatpush2.bf16.msra.mxu0 0
      %1687 = vmatprep.subr.bf16.mxu0 0
      %1688 = vmatpush2.bf16.msra.mxu0 0
      %1689 = vmatprep.subr.bf16.mxu0 0
      %1690 = vmatpush2.bf16.msra.mxu0 0
      %1691 = vmatprep.mubr.bf16.mxu0 0
      %1692 = vmatmul.mubr.bf16.gmra.mxu0 %v1658
      %v1693 = vpop.f32.mrf.mxu0
      %v1694 = vadd.f32 0.0, %v1693
      %v1695 = vpop.f32.mrf.mxu0
      %v1696 = vadd.f32 0.0, %v1695
      %v1697 = vpop.f32.mrf.mxu0
      %v1698 = vpop.f32.mrf.mxu0
      %1699 = vdwg.mxu0
      %1700 = vmatprep.subr.bf16.mxu0 %v1375
      %1701 = vmatpush1.bf16.msra.mxu0 %v1374
      %1702 = vmatprep.subr.bf16.mxu0 %v1369
      %1703 = vmatpush1.bf16.msra.mxu0 %v1368
      %1704 = vmatprep.subr.bf16.mxu0 %v1363
      %1705 = vmatpush1.bf16.msra.mxu0 %v1362
      %1706 = vmatprep.subr.bf16.mxu0 %v1357
      %1707 = vmatpush1.bf16.msra.mxu0 %v1356
      %1708 = vmatprep.subr.bf16.mxu0 %v1351
      %1709 = vmatpush1.bf16.msra.mxu0 %v1350
      %1710 = vmatprep.subr.bf16.mxu0 %v1345
      %1711 = vmatpush1.bf16.msra.mxu0 %v1344
      %1712 = vmatprep.subr.bf16.mxu0 %v1339
      %1713 = vmatpush1.bf16.msra.mxu0 %v1338
      %1714 = vmatprep.subr.bf16.mxu0 %v1333
      %1715 = vmatpush1.bf16.msra.mxu0 %v1332
      %1716 = vmatprep.subr.bf16.mxu0 0
      %1717 = vmatpush2.bf16.msra.mxu0 0
      %1718 = vmatprep.subr.bf16.mxu0 0
      %1719 = vmatpush2.bf16.msra.mxu0 0
      %1720 = vmatprep.subr.bf16.mxu0 0
      %1721 = vmatpush2.bf16.msra.mxu0 0
      %1722 = vmatprep.subr.bf16.mxu0 0
      %1723 = vmatpush2.bf16.msra.mxu0 0
      %1724 = vmatprep.subr.bf16.mxu0 0
      %1725 = vmatpush2.bf16.msra.mxu0 0
      %1726 = vmatprep.subr.bf16.mxu0 0
      %1727 = vmatpush2.bf16.msra.mxu0 0
      %1728 = vmatprep.subr.bf16.mxu0 0
      %1729 = vmatpush2.bf16.msra.mxu0 0
      %1730 = vmatprep.subr.bf16.mxu0 0
      %1731 = vmatpush2.bf16.msra.mxu0 0
      %1732 = vmatprep.mubr.bf16.mxu0 0
      %1733 = vmatmul.mubr.bf16.gmra.mxu0 %v1658
      %v1734 = vpop.f32.mrf.mxu0
      %v1735 = vadd.f32 0.0, %v1734
      %v1736 = vpop.f32.mrf.mxu0
      %v1737 = vpop.f32.mrf.mxu0
      %v1738 = vpop.f32.mrf.mxu0
      %v1739 = vadd.f32 0.0, %v1738
      %1740 = vdwg.mxu0
      %1741 = vmatprep.subr.bf16.mxu0 %v1377
      %1742 = vmatpush1.bf16.msra.mxu0 %v1376
      %1743 = vmatprep.subr.bf16.mxu0 %v1371
      %1744 = vmatpush1.bf16.msra.mxu0 %v1370
      %1745 = vmatprep.subr.bf16.mxu0 %v1365
      %1746 = vmatpush1.bf16.msra.mxu0 %v1364
      %1747 = vmatprep.subr.bf16.mxu0 %v1359
      %1748 = vmatpush1.bf16.msra.mxu0 %v1358
      %1749 = vmatprep.subr.bf16.mxu0 %v1353
      %1750 = vmatpush1.bf16.msra.mxu0 %v1352
      %1751 = vmatprep.subr.bf16.mxu0 %v1347
      %1752 = vmatpush1.bf16.msra.mxu0 %v1346
      %1753 = vmatprep.subr.bf16.mxu0 %v1341
      %1754 = vmatpush1.bf16.msra.mxu0 %v1340
      %1755 = vmatprep.subr.bf16.mxu0 %v1335
      %1756 = vmatpush1.bf16.msra.mxu0 %v1334
      %1757 = vmatprep.subr.bf16.mxu0 0
      %1758 = vmatpush2.bf16.msra.mxu0 0
      %1759 = vmatprep.subr.bf16.mxu0 0
      %1760 = vmatpush2.bf16.msra.mxu0 0
      %1761 = vmatprep.subr.bf16.mxu0 0
      %1762 = vmatpush2.bf16.msra.mxu0 0
      %1763 = vmatprep.subr.bf16.mxu0 0
      %1764 = vmatpush2.bf16.msra.mxu0 0
      %1765 = vmatprep.subr.bf16.mxu0 0
      %1766 = vmatpush2.bf16.msra.mxu0 0
      %1767 = vmatprep.subr.bf16.mxu0 0
      %1768 = vmatpush2.bf16.msra.mxu0 0
      %1769 = vmatprep.subr.bf16.mxu0 0
      %1770 = vmatpush2.bf16.msra.mxu0 0
      %1771 = vmatprep.subr.bf16.mxu0 0
      %1772 = vmatpush2.bf16.msra.mxu0 0
      %1773 = vmatprep.mubr.bf16.mxu0 0
      %1774 = vmatmul.mubr.bf16.gmra.mxu0 %v1658
      %v1775 = vpop.f32.mrf.mxu0
      %v1776 = vpop.f32.mrf.mxu0
      %v1777 = vpop.f32.mrf.mxu0
      %v1778 = vadd.f32 0.0, %v1777
      %v1779 = vpop.f32.mrf.mxu0
      %v1780 = vadd.f32 0.0, %v1779
      %1781 = vdwg.mxu0
      %v1782 = vadd.f32 %v1694, %v1553
      %v1783 = vadd.f32 %v1696, %v1557
      %v1784 = vadd.f32 %v1735, %v1561
      %v1785 = vadd.f32 %v1739, %v1572
      %v1786 = vadd.f32 %v1778, %v1576
      %v1787 = vadd.f32 %v1780, %v1580
      %s1788 = scalar_lea.vmem [#allocation3], 24
      %v1789 = vld [vmem:[%s1788] sm:$0xff]
      %v1790 = vld [vmem:[%s1788 + $0x8] sm:$0xff]
      %v1791 = vld [vmem:[%s1788 + $0x10] sm:$0xff]
      %v1792 = vadd.f32 %v1789, %v1782
      %v1793 = vxor.u32 %v1792, 2147483648
      %v1794 = vmul.f32 %v1793, 1.442695
      %v1795 = vpow.pop %v1794
      %v1796 = vadd.f32 %v1795, 1.0
      %v1797 = vrcp.pop %v1796
      %v1798 = vmul.f32 1.0, %v1797
      %v1799 = vadd.f32 %v1790, %v1783
      %v1800 = vxor.u32 %v1799, 2147483648
      %v1801 = vmul.f32 %v1800, 1.442695
      %v1802 = vpow.pop %v1801
      %v1803 = vadd.f32 %v1802, 1.0
      %v1804 = vrcp.pop %v1803
      %v1805 = vmul.f32 1.0, %v1804
      %v1806 = vmul.f32 %v1798, %v1784
      %v1807 = vadd.f32 %v1791, %v1806
      %v1808 = vtanh.pop %v1807
      %v1809 = vsub.f32 1.0, %v1805
      %v1810 = vmul.f32 %v1809, %v1808
      %v1811 = vmul.f32 %v1805, %v1618
      %v1812 = vadd.f32 %v1810, %v1811
      %s1813 = sadd.s32 %s1182, 1
      %v1814 = vstv %s1813
      %vm1815 = vcmp.gt.s32.totalorder %v1130, %v1814
      %v1816 = vsel %vm1815, 1, 0
      %1817 = vset.pattern.permute.xlu0 0
      %1818 = vperm.xlu0 %1817, %v1816
      %v1819 = vpop.permute.xlu0 %1818
      %vm1820 = vcmp.eq.s32.totalorder %v1819, 1
      %v1821 = vsel %vm1820, %v1812, %v1618
      %v1822 = vsel %vm1820, %v1812, 0.0
      %s1823 = scalar_lea.vmem %s488, 8
      %1824 = vst [vmem:[%s1823] sm:$0xff] %v1822
      %s1825 = ssub.s32 6, %s1182
      %s1826 = scalar_lea.vmem [#allocation4], 48
      %v1827 = vld [vmem:[%s1826] sm:$0xff]
      %v1828 = vld [vmem:[%s1826 + $0x8] sm:$0xff]
      %v1829 = vld [vmem:[%s1826 + $0x10] sm:$0xff]
      %v1830 = vadd.f32 %v1827, %v1785
      %v1831 = vxor.u32 %v1830, 2147483648
      %v1832 = vmul.f32 %v1831, 1.442695
      %v1833 = vpow.pop %v1832
      %v1834 = vadd.f32 %v1833, 1.0
      %v1835 = vrcp.pop %v1834
      %v1836 = vmul.f32 1.0, %v1835
      %v1837 = vadd.f32 %v1828, %v1786
      %v1838 = vxor.u32 %v1837, 2147483648
      %v1839 = vmul.f32 %v1838, 1.442695
      %v1840 = vpow.pop %v1839
      %v1841 = vadd.f32 %v1840, 1.0
      %v1842 = vrcp.pop %v1841
      %v1843 = vmul.f32 1.0, %v1842
      %v1844 = vmul.f32 %v1836, %v1787
      %v1845 = vadd.f32 %v1829, %v1844
      %v1846 = vtanh.pop %v1845
      %v1847 = vsub.f32 1.0, %v1843
      %v1848 = vmul.f32 %v1847, %v1846
      %v1849 = vmul.f32 %v1843, %v1654
      %v1850 = vadd.f32 %v1848, %v1849
      %v1851 = vstv %s1825
      %vm1852 = vcmp.gt.s32.totalorder %v1130, %v1851
      %v1853 = vsel %vm1852, 1, 0
      %1854 = vset.pattern.permute.xlu0 0
      %1855 = vperm.xlu0 %1854, %v1853
      %v1856 = vpop.permute.xlu0 %1855
      %vm1857 = vcmp.eq.s32.totalorder %v1856, 1
      %v1858 = vsel %vm1857, %v1850, %v1654
      %v1859 = vsel %vm1857, %v1850, 0.0
      %s1860 = scalar_lea.vmem %s498, 16
      %1861 = vst [vmem:[%s1860] sm:$0xff] %v1859
      %v1862 = vpack.c.bf16 %v1858, %v1821
      %1863 = vmatprep.subr.bf16.mxu0 %v1373
      %1864 = vmatpush1.bf16.msra.mxu0 %v1372
      %1865 = vmatprep.subr.bf16.mxu0 %v1367
      %1866 = vmatpush1.bf16.msra.mxu0 %v1366
      %1867 = vmatprep.subr.bf16.mxu0 %v1361
      %1868 = vmatpush1.bf16.msra.mxu0 %v1360
      %1869 = vmatprep.subr.bf16.mxu0 %v1355
      %1870 = vmatpush1.bf16.msra.mxu0 %v1354
      %1871 = vmatprep.subr.bf16.mxu0 %v1349
      %1872 = vmatpush1.bf16.msra.mxu0 %v1348
      %1873 = vmatprep.subr.bf16.mxu0 %v1343
      %1874 = vmatpush1.bf16.msra.mxu0 %v1342
      %1875 = vmatprep.subr.bf16.mxu0 %v1337
      %1876 = vmatpush1.bf16.msra.mxu0 %v1336
      %1877 = vmatprep.subr.bf16.mxu0 %v1331
      %1878 = vmatpush1.bf16.msra.mxu0 %v1330
      %1879 = vmatprep.subr.bf16.mxu0 0
      %1880 = vmatpush2.bf16.msra.mxu0 0
      %1881 = vmatprep.subr.bf16.mxu0 0
      %1882 = vmatpush2.bf16.msra.mxu0 0
      %1883 = vmatprep.subr.bf16.mxu0 0
      %1884 = vmatpush2.bf16.msra.mxu0 0
      %1885 = vmatprep.subr.bf16.mxu0 0
      %1886 = vmatpush2.bf16.msra.mxu0 0
      %1887 = vmatprep.subr.bf16.mxu0 0
      %1888 = vmatpush2.bf16.msra.mxu0 0
      %1889 = vmatprep.subr.bf16.mxu0 0
      %1890 = vmatpush2.bf16.msra.mxu0 0
      %1891 = vmatprep.subr.bf16.mxu0 0
      %1892 = vmatpush2.bf16.msra.mxu0 0
      %1893 = vmatprep.subr.bf16.mxu0 0
      %1894 = vmatpush2.bf16.msra.mxu0 0
      %1895 = vmatprep.mubr.bf16.mxu0 0
      %1896 = vmatmul.mubr.bf16.gmra.mxu0 %v1862
      %v1897 = vpop.f32.mrf.mxu0
      %v1898 = vadd.f32 0.0, %v1897
      %v1899 = vpop.f32.mrf.mxu0
      %v1900 = vadd.f32 0.0, %v1899
      %v1901 = vpop.f32.mrf.mxu0
      %v1902 = vpop.f32.mrf.mxu0
      %1903 = vdwg.mxu0
      %1904 = vmatprep.subr.bf16.mxu0 %v1375
      %1905 = vmatpush1.bf16.msra.mxu0 %v1374
      %1906 = vmatprep.subr.bf16.mxu0 %v1369
      %1907 = vmatpush1.bf16.msra.mxu0 %v1368
      %1908 = vmatprep.subr.bf16.mxu0 %v1363
      %1909 = vmatpush1.bf16.msra.mxu0 %v1362
      %1910 = vmatprep.subr.bf16.mxu0 %v1357
      %1911 = vmatpush1.bf16.msra.mxu0 %v1356
      %1912 = vmatprep.subr.bf16.mxu0 %v1351
      %1913 = vmatpush1.bf16.msra.mxu0 %v1350
      %1914 = vmatprep.subr.bf16.mxu0 %v1345
      %1915 = vmatpush1.bf16.msra.mxu0 %v1344
      %1916 = vmatprep.subr.bf16.mxu0 %v1339
      %1917 = vmatpush1.bf16.msra.mxu0 %v1338
      %1918 = vmatprep.subr.bf16.mxu0 %v1333
      %1919 = vmatpush1.bf16.msra.mxu0 %v1332
      %1920 = vmatprep.subr.bf16.mxu0 0
      %1921 = vmatpush2.bf16.msra.mxu0 0
      %1922 = vmatprep.subr.bf16.mxu0 0
      %1923 = vmatpush2.bf16.msra.mxu0 0
      %1924 = vmatprep.subr.bf16.mxu0 0
      %1925 = vmatpush2.bf16.msra.mxu0 0
      %1926 = vmatprep.subr.bf16.mxu0 0
      %1927 = vmatpush2.bf16.msra.mxu0 0
      %1928 = vmatprep.subr.bf16.mxu0 0
      %1929 = vmatpush2.bf16.msra.mxu0 0
      %1930 = vmatprep.subr.bf16.mxu0 0
      %1931 = vmatpush2.bf16.msra.mxu0 0
      %1932 = vmatprep.subr.bf16.mxu0 0
      %1933 = vmatpush2.bf16.msra.mxu0 0
      %1934 = vmatprep.subr.bf16.mxu0 0
      %1935 = vmatpush2.bf16.msra.mxu0 0
      %1936 = vmatprep.mubr.bf16.mxu0 0
      %1937 = vmatmul.mubr.bf16.gmra.mxu0 %v1862
      %v1938 = vpop.f32.mrf.mxu0
      %v1939 = vadd.f32 0.0, %v1938
      %v1940 = vpop.f32.mrf.mxu0
      %v1941 = vpop.f32.mrf.mxu0
      %v1942 = vpop.f32.mrf.mxu0
      %v1943 = vadd.f32 0.0, %v1942
      %1944 = vdwg.mxu0
      %1945 = vmatprep.subr.bf16.mxu0 %v1377
      %1946 = vmatpush1.bf16.msra.mxu0 %v1376
      %1947 = vmatprep.subr.bf16.mxu0 %v1371
      %1948 = vmatpush1.bf16.msra.mxu0 %v1370
      %1949 = vmatprep.subr.bf16.mxu0 %v1365
      %1950 = vmatpush1.bf16.msra.mxu0 %v1364
      %1951 = vmatprep.subr.bf16.mxu0 %v1359
      %1952 = vmatpush1.bf16.msra.mxu0 %v1358
      %1953 = vmatprep.subr.bf16.mxu0 %v1353
      %1954 = vmatpush1.bf16.msra.mxu0 %v1352
      %1955 = vmatprep.subr.bf16.mxu0 %v1347
      %1956 = vmatpush1.bf16.msra.mxu0 %v1346
      %1957 = vmatprep.subr.bf16.mxu0 %v1341
      %1958 = vmatpush1.bf16.msra.mxu0 %v1340
      %1959 = vmatprep.subr.bf16.mxu0 %v1335
      %1960 = vmatpush1.bf16.msra.mxu0 %v1334
      %1961 = vmatprep.subr.bf16.mxu0 0
      %1962 = vmatpush2.bf16.msra.mxu0 0
      %1963 = vmatprep.subr.bf16.mxu0 0
      %1964 = vmatpush2.bf16.msra.mxu0 0
      %1965 = vmatprep.subr.bf16.mxu0 0
      %1966 = vmatpush2.bf16.msra.mxu0 0
      %1967 = vmatprep.subr.bf16.mxu0 0
      %1968 = vmatpush2.bf16.msra.mxu0 0
      %1969 = vmatprep.subr.bf16.mxu0 0
      %1970 = vmatpush2.bf16.msra.mxu0 0
      %1971 = vmatprep.subr.bf16.mxu0 0
      %1972 = vmatpush2.bf16.msra.mxu0 0
      %1973 = vmatprep.subr.bf16.mxu0 0
      %1974 = vmatpush2.bf16.msra.mxu0 0
      %1975 = vmatprep.subr.bf16.mxu0 0
      %1976 = vmatpush2.bf16.msra.mxu0 0
      %1977 = vmatprep.mubr.bf16.mxu0 0
      %1978 = vmatmul.mubr.bf16.gmra.mxu0 %v1862
      %v1979 = vpop.f32.mrf.mxu0
      %v1980 = vpop.f32.mrf.mxu0
      %v1981 = vpop.f32.mrf.mxu0
      %v1982 = vadd.f32 0.0, %v1981
      %v1983 = vpop.f32.mrf.mxu0
      %v1984 = vadd.f32 0.0, %v1983
      %1985 = vdwg.mxu0
      %v1986 = vadd.f32 %v1898, %v1553
      %v1987 = vadd.f32 %v1900, %v1557
      %v1988 = vadd.f32 %v1939, %v1561
      %v1989 = vadd.f32 %v1943, %v1572
      %v1990 = vadd.f32 %v1982, %v1576
      %v1991 = vadd.f32 %v1984, %v1580
      %s1992 = scalar_lea.vmem [#allocation3], 48
      %v1993 = vld [vmem:[%s1992] sm:$0xff]
      %v1994 = vld [vmem:[%s1992 + $0x8] sm:$0xff]
      %v1995 = vld [vmem:[%s1992 + $0x10] sm:$0xff]
      %v1996 = vadd.f32 %v1993, %v1986
      %v1997 = vxor.u32 %v1996, 2147483648
      %v1998 = vmul.f32 %v1997, 1.442695
      %v1999 = vpow.pop %v1998
      %v2000 = vadd.f32 %v1999, 1.0
      %v2001 = vrcp.pop %v2000
      %v2002 = vmul.f32 1.0, %v2001
      %v2003 = vadd.f32 %v1994, %v1987
      %v2004 = vxor.u32 %v2003, 2147483648
      %v2005 = vmul.f32 %v2004, 1.442695
      %v2006 = vpow.pop %v2005
      %v2007 = vadd.f32 %v2006, 1.0
      %v2008 = vrcp.pop %v2007
      %v2009 = vmul.f32 1.0, %v2008
      %v2010 = vmul.f32 %v2002, %v1988
      %v2011 = vadd.f32 %v1995, %v2010
      %v2012 = vtanh.pop %v2011
      %v2013 = vsub.f32 1.0, %v2009
      %v2014 = vmul.f32 %v2013, %v2012
      %v2015 = vmul.f32 %v2009, %v1821
      %v2016 = vadd.f32 %v2014, %v2015
      %s2017 = sadd.s32 %s1182, 2
      %v2018 = vstv %s2017
      %vm2019 = vcmp.gt.s32.totalorder %v1130, %v2018
      %v2020 = vsel %vm2019, 1, 0
      %2021 = vset.pattern.permute.xlu0 0
      %2022 = vperm.xlu0 %2021, %v2020
      %v2023 = vpop.permute.xlu0 %2022
      %vm2024 = vcmp.eq.s32.totalorder %v2023, 1
      %v2025 = vsel %vm2024, %v2016, %v1821
      %v2026 = vsel %vm2024, %v2016, 0.0
      %s2027 = scalar_lea.vmem %s488, 16
      %2028 = vst [vmem:[%s2027] sm:$0xff] %v2026
      %s2029 = ssub.s32 5, %s1182
      %s2030 = scalar_lea.vmem [#allocation4], 24
      %v2031 = vld [vmem:[%s2030] sm:$0xff]
      %v2032 = vld [vmem:[%s2030 + $0x8] sm:$0xff]
      %v2033 = vld [vmem:[%s2030 + $0x10] sm:$0xff]
      %v2034 = vadd.f32 %v2031, %v1989
      %v2035 = vxor.u32 %v2034, 2147483648
      %v2036 = vmul.f32 %v2035, 1.442695
      %v2037 = vpow.pop %v2036
      %v2038 = vadd.f32 %v2037, 1.0
      %v2039 = vrcp.pop %v2038
      %v2040 = vmul.f32 1.0, %v2039
      %v2041 = vadd.f32 %v2032, %v1990
      %v2042 = vxor.u32 %v2041, 2147483648
      %v2043 = vmul.f32 %v2042, 1.442695
      %v2044 = vpow.pop %v2043
      %v2045 = vadd.f32 %v2044, 1.0
      %v2046 = vrcp.pop %v2045
      %v2047 = vmul.f32 1.0, %v2046
      %v2048 = vmul.f32 %v2040, %v1991
      %v2049 = vadd.f32 %v2033, %v2048
      %v2050 = vtanh.pop %v2049
      %v2051 = vsub.f32 1.0, %v2047
      %v2052 = vmul.f32 %v2051, %v2050
      %v2053 = vmul.f32 %v2047, %v1858
      %v2054 = vadd.f32 %v2052, %v2053
      %v2055 = vstv %s2029
      %vm2056 = vcmp.gt.s32.totalorder %v1130, %v2055
      %v2057 = vsel %vm2056, 1, 0
      %2058 = vset.pattern.permute.xlu0 0
      %2059 = vperm.xlu0 %2058, %v2057
      %v2060 = vpop.permute.xlu0 %2059
      %vm2061 = vcmp.eq.s32.totalorder %v2060, 1
      %v2062 = vsel %vm2061, %v2054, %v1858
      %v2063 = vsel %vm2061, %v2054, 0.0
      %s2064 = scalar_lea.vmem %s498, 8
      %2065 = vst [vmem:[%s2064] sm:$0xff] %v2063
      %v2066 = vpack.c.bf16 %v2062, %v2025
      %2067 = vmatprep.subr.bf16.mxu0 %v1373
      %2068 = vmatpush1.bf16.msra.mxu0 %v1372
      %2069 = vmatprep.subr.bf16.mxu0 %v1367
      %2070 = vmatpush1.bf16.msra.mxu0 %v1366
      %2071 = vmatprep.subr.bf16.mxu0 %v1361
      %2072 = vmatpush1.bf16.msra.mxu0 %v1360
      %2073 = vmatprep.subr.bf16.mxu0 %v1355
      %2074 = vmatpush1.bf16.msra.mxu0 %v1354
      %2075 = vmatprep.subr.bf16.mxu0 %v1349
      %2076 = vmatpush1.bf16.msra.mxu0 %v1348
      %2077 = vmatprep.subr.bf16.mxu0 %v1343
      %2078 = vmatpush1.bf16.msra.mxu0 %v1342
      %2079 = vmatprep.subr.bf16.mxu0 %v1337
      %2080 = vmatpush1.bf16.msra.mxu0 %v1336
      %2081 = vmatprep.subr.bf16.mxu0 %v1331
      %2082 = vmatpush1.bf16.msra.mxu0 %v1330
      %2083 = vmatprep.subr.bf16.mxu0 0
      %2084 = vmatpush2.bf16.msra.mxu0 0
      %2085 = vmatprep.subr.bf16.mxu0 0
      %2086 = vmatpush2.bf16.msra.mxu0 0
      %2087 = vmatprep.subr.bf16.mxu0 0
      %2088 = vmatpush2.bf16.msra.mxu0 0
      %2089 = vmatprep.subr.bf16.mxu0 0
      %2090 = vmatpush2.bf16.msra.mxu0 0
      %2091 = vmatprep.subr.bf16.mxu0 0
      %2092 = vmatpush2.bf16.msra.mxu0 0
      %2093 = vmatprep.subr.bf16.mxu0 0
      %2094 = vmatpush2.bf16.msra.mxu0 0
      %2095 = vmatprep.subr.bf16.mxu0 0
      %2096 = vmatpush2.bf16.msra.mxu0 0
      %2097 = vmatprep.subr.bf16.mxu0 0
      %2098 = vmatpush2.bf16.msra.mxu0 0
      %2099 = vmatprep.mubr.bf16.mxu0 0
      %2100 = vmatmul.mubr.bf16.gmra.mxu0 %v2066
      %v2101 = vpop.f32.mrf.mxu0
      %v2102 = vadd.f32 0.0, %v2101
      %v2103 = vpop.f32.mrf.mxu0
      %v2104 = vadd.f32 0.0, %v2103
      %v2105 = vpop.f32.mrf.mxu0
      %v2106 = vpop.f32.mrf.mxu0
      %2107 = vdwg.mxu0
      %2108 = vmatprep.subr.bf16.mxu0 %v1375
      %2109 = vmatpush1.bf16.msra.mxu0 %v1374
      %2110 = vmatprep.subr.bf16.mxu0 %v1369
      %2111 = vmatpush1.bf16.msra.mxu0 %v1368
      %2112 = vmatprep.subr.bf16.mxu0 %v1363
      %2113 = vmatpush1.bf16.msra.mxu0 %v1362
      %2114 = vmatprep.subr.bf16.mxu0 %v1357
      %2115 = vmatpush1.bf16.msra.mxu0 %v1356
      %2116 = vmatprep.subr.bf16.mxu0 %v1351
      %2117 = vmatpush1.bf16.msra.mxu0 %v1350
      %2118 = vmatprep.subr.bf16.mxu0 %v1345
      %2119 = vmatpush1.bf16.msra.mxu0 %v1344
      %2120 = vmatprep.subr.bf16.mxu0 %v1339
      %2121 = vmatpush1.bf16.msra.mxu0 %v1338
      %2122 = vmatprep.subr.bf16.mxu0 %v1333
      %2123 = vmatpush1.bf16.msra.mxu0 %v1332
      %2124 = vmatprep.subr.bf16.mxu0 0
      %2125 = vmatpush2.bf16.msra.mxu0 0
      %2126 = vmatprep.subr.bf16.mxu0 0
      %2127 = vmatpush2.bf16.msra.mxu0 0
      %2128 = vmatprep.subr.bf16.mxu0 0
      %2129 = vmatpush2.bf16.msra.mxu0 0
      %2130 = vmatprep.subr.bf16.mxu0 0
      %2131 = vmatpush2.bf16.msra.mxu0 0
      %2132 = vmatprep.subr.bf16.mxu0 0
      %2133 = vmatpush2.bf16.msra.mxu0 0
      %2134 = vmatprep.subr.bf16.mxu0 0
      %2135 = vmatpush2.bf16.msra.mxu0 0
      %2136 = vmatprep.subr.bf16.mxu0 0
      %2137 = vmatpush2.bf16.msra.mxu0 0
      %2138 = vmatprep.subr.bf16.mxu0 0
      %2139 = vmatpush2.bf16.msra.mxu0 0
      %2140 = vmatprep.mubr.bf16.mxu0 0
      %2141 = vmatmul.mubr.bf16.gmra.mxu0 %v2066
      %v2142 = vpop.f32.mrf.mxu0
      %v2143 = vadd.f32 0.0, %v2142
      %v2144 = vpop.f32.mrf.mxu0
      %v2145 = vpop.f32.mrf.mxu0
      %v2146 = vpop.f32.mrf.mxu0
      %v2147 = vadd.f32 0.0, %v2146
      %2148 = vdwg.mxu0
      %2149 = vmatprep.subr.bf16.mxu0 %v1377
      %2150 = vmatpush1.bf16.msra.mxu0 %v1376
      %2151 = vmatprep.subr.bf16.mxu0 %v1371
      %2152 = vmatpush1.bf16.msra.mxu0 %v1370
      %2153 = vmatprep.subr.bf16.mxu0 %v1365
      %2154 = vmatpush1.bf16.msra.mxu0 %v1364
      %2155 = vmatprep.subr.bf16.mxu0 %v1359
      %2156 = vmatpush1.bf16.msra.mxu0 %v1358
      %2157 = vmatprep.subr.bf16.mxu0 %v1353
      %2158 = vmatpush1.bf16.msra.mxu0 %v1352
      %2159 = vmatprep.subr.bf16.mxu0 %v1347
      %2160 = vmatpush1.bf16.msra.mxu0 %v1346
      %2161 = vmatprep.subr.bf16.mxu0 %v1341
      %2162 = vmatpush1.bf16.msra.mxu0 %v1340
      %2163 = vmatprep.subr.bf16.mxu0 %v1335
      %2164 = vmatpush1.bf16.msra.mxu0 %v1334
      %2165 = vmatprep.subr.bf16.mxu0 0
      %2166 = vmatpush2.bf16.msra.mxu0 0
      %2167 = vmatprep.subr.bf16.mxu0 0
      %2168 = vmatpush2.bf16.msra.mxu0 0
      %2169 = vmatprep.subr.bf16.mxu0 0
      %2170 = vmatpush2.bf16.msra.mxu0 0
      %2171 = vmatprep.subr.bf16.mxu0 0
      %2172 = vmatpush2.bf16.msra.mxu0 0
      %2173 = vmatprep.subr.bf16.mxu0 0
      %2174 = vmatpush2.bf16.msra.mxu0 0
      %2175 = vmatprep.subr.bf16.mxu0 0
      %2176 = vmatpush2.bf16.msra.mxu0 0
      %2177 = vmatprep.subr.bf16.mxu0 0
      %2178 = vmatpush2.bf16.msra.mxu0 0
      %2179 = vmatprep.subr.bf16.mxu0 0
      %2180 = vmatpush2.bf16.msra.mxu0 0
      %2181 = vmatprep.mubr.bf16.mxu0 0
      %2182 = vmatmul.mubr.bf16.gmra.mxu0 %v2066
      %v2183 = vpop.f32.mrf.mxu0
      %v2184 = vpop.f32.mrf.mxu0
      %v2185 = vpop.f32.mrf.mxu0
      %v2186 = vadd.f32 0.0, %v2185
      %v2187 = vpop.f32.mrf.mxu0
      %v2188 = vadd.f32 0.0, %v2187
      %2189 = vdwg.mxu0
      %v2190 = vadd.f32 %v2102, %v1553
      %v2191 = vadd.f32 %v2104, %v1557
      %v2192 = vadd.f32 %v2143, %v1561
      %v2193 = vadd.f32 %v2147, %v1572
      %v2194 = vadd.f32 %v2186, %v1576
      %v2195 = vadd.f32 %v2188, %v1580
      %s2196 = scalar_lea.vmem [#allocation3], 72
      %v2197 = vld [vmem:[%s2196] sm:$0xff]
      %v2198 = vld [vmem:[%s2196 + $0x8] sm:$0xff]
      %v2199 = vld [vmem:[%s2196 + $0x10] sm:$0xff]
      %v2200 = vadd.f32 %v2197, %v2190
      %v2201 = vxor.u32 %v2200, 2147483648
      %v2202 = vmul.f32 %v2201, 1.442695
      %v2203 = vpow.pop %v2202
      %v2204 = vadd.f32 %v2203, 1.0
      %v2205 = vrcp.pop %v2204
      %v2206 = vmul.f32 1.0, %v2205
      %v2207 = vadd.f32 %v2198, %v2191
      %v2208 = vxor.u32 %v2207, 2147483648
      %v2209 = vmul.f32 %v2208, 1.442695
      %v2210 = vpow.pop %v2209
      %v2211 = vadd.f32 %v2210, 1.0
      %v2212 = vrcp.pop %v2211
      %v2213 = vmul.f32 1.0, %v2212
      %v2214 = vmul.f32 %v2206, %v2192
      %v2215 = vadd.f32 %v2199, %v2214
      %v2216 = vtanh.pop %v2215
      %v2217 = vsub.f32 1.0, %v2213
      %v2218 = vmul.f32 %v2217, %v2216
      %v2219 = vmul.f32 %v2213, %v2025
      %v2220 = vadd.f32 %v2218, %v2219
      %s2221 = sadd.s32 %s1182, 3
      %v2222 = vstv %s2221
      %vm2223 = vcmp.gt.s32.totalorder %v1130, %v2222
      %v2224 = vsel %vm2223, 1, 0
      %2225 = vset.pattern.permute.xlu0 0
      %2226 = vperm.xlu0 %2225, %v2224
      %v2227 = vpop.permute.xlu0 %2226
      %vm2228 = vcmp.eq.s32.totalorder %v2227, 1
      %v2229 = vsel %vm2228, %v2220, %v2025
      %v2230 = vsel %vm2228, %v2220, 0.0
      %s2231 = scalar_lea.vmem %s488, 24
      %2232 = vst [vmem:[%s2231] sm:$0xff] %v2230
      %s2233 = ssub.s32 4, %s1182
      %v2234 = vld [vmem:[#allocation4] sm:$0xff]
      %v2235 = vld [vmem:[#allocation4 + $0x8] sm:$0xff]
      %v2236 = vld [vmem:[#allocation4 + $0x10] sm:$0xff]
      %v2237 = vadd.f32 %v2234, %v2193
      %v2238 = vxor.u32 %v2237, 2147483648
      %v2239 = vmul.f32 %v2238, 1.442695
      %v2240 = vpow.pop %v2239
      %v2241 = vadd.f32 %v2240, 1.0
      %v2242 = vrcp.pop %v2241
      %v2243 = vmul.f32 1.0, %v2242
      %v2244 = vadd.f32 %v2235, %v2194
      %v2245 = vxor.u32 %v2244, 2147483648
      %v2246 = vmul.f32 %v2245, 1.442695
      %v2247 = vpow.pop %v2246
      %v2248 = vadd.f32 %v2247, 1.0
      %v2249 = vrcp.pop %v2248
      %v2250 = vmul.f32 1.0, %v2249
      %v2251 = vmul.f32 %v2243, %v2195
      %v2252 = vadd.f32 %v2236, %v2251
      %v2253 = vtanh.pop %v2252
      %v2254 = vsub.f32 1.0, %v2250
      %v2255 = vmul.f32 %v2254, %v2253
      %v2256 = vmul.f32 %v2250, %v2062
      %v2257 = vadd.f32 %v2255, %v2256
      %v2258 = vstv %s2233
      %vm2259 = vcmp.gt.s32.totalorder %v1130, %v2258
      %v2260 = vsel %vm2259, 1, 0
      %2261 = vset.pattern.permute.xlu0 0
      %2262 = vperm.xlu0 %2261, %v2260
      %v2263 = vpop.permute.xlu0 %2262
      %vm2264 = vcmp.eq.s32.totalorder %v2263, 1
      %v2265 = vsel %vm2264, %v2257, %v2062
      %v2266 = vsel %vm2264, %v2257, 0.0
      %2267 = vst [vmem:[%s498] sm:$0xff] %v2266
      %2268 = vst [vmem:[#allocation2] sm:$0xff] %v2229
      %2269 = vst [vmem:[#allocation2 + $0x8] sm:$0xff] %v2265
      %p2270 = scmp.eq.s32.totalorder %s27, 1
      // Predicated region
      $region57: #{gru_block_forward.1} parent=51 // pred_check
        %p2271 = pneg %p2270
      $region58: #{gru_block_forward.1} parent=51 // pred_check_branch
        %2273 = sbr.rel (%p2271) target = $region60
      $region59: #{gru_block_forward.1} parent=51 // pred_region
        %2274 = vst [vmem:[%s504] sm:$0xff] %v2229
        %2275 = vst [vmem:[%s504 + $0x8] sm:$0xff] %v2265
      $region60: #{gru_block_forward.1} parent=51 // pred_fallthru
        _
      %s2276 = smul.u32 4, %s27
      %p2277 = scmp.lt.s32.totalorder %s2276, 7
      %s2278 = scalar_select %p2277, %s2276, 7
      %p2279 = scmp.lt.s32.totalorder %s26, 0
      %s2280 = scalar_select %p2279, %s26, 0
      %s2281 = sadd.s32 %s2280, %s2278
      %s2282 = smul.addr %s2281, 8
      %s2283 = scalar_lea.vmem %s8, %s2282
      %s2284 = ssub.s32 1, %s27
      %s2285 = smul.u32 4, %s2284
      %p2286 = scmp.lt.s32.totalorder %s2285, 7
      %s2287 = scalar_select %p2286, %s2285, 7
      %p2288 = scmp.lt.s32.totalorder %s26, 0
      %s2289 = scalar_select %p2288, %s26, 0
      %s2290 = sadd.s32 %s2289, %s2287
      %s2291 = smul.addr %s2290, 8
      %s2292 = scalar_lea.vmem %s9, %s2291
      %p2293 = scmp.lt.s32.totalorder %s26, 0
      %s2294 = scalar_select %p2293, %s26, 0
      %s2295 = smul.addr %s2294, 8
      %s2296 = scalar_lea.vmem %s10, %s2295
      // Predicated region
      $region61: #{gru_block_forward.1} parent=51 // pred_check
        %p2297 = pneg %p248
      $region62: #{gru_block_forward.1} parent=51 // pred_check_branch
        %2299 = sbr.rel (%p2297) target = $region64
      $region63: #{gru_block_forward.1} parent=51 // pred_region
        %s2300 = smul.u32 4, %s27
      $region64: #{gru_block_forward.1} parent=51 // pred_fallthru
        _
      // Predicated region
      $region65: #{gru_block_forward.1} parent=51 // pred_check
        %p2301 = pneg %p278
      $region66: #{gru_block_forward.1} parent=51 // pred_check_branch
        %2303 = sbr.rel (%p2301) target = $region68
      $region67: #{gru_block_forward.1} parent=51 // pred_region
        %s2304 = ssub.s32 1, %s27
        %s2305 = smul.u32 4, %s2304
      $region68: #{gru_block_forward.1} parent=51 // pred_fallthru
        _
      // Predicated region
      $region69: #{gru_block_forward.1} parent=51 // pred_check
        %p2306 = pneg %p304
      $region70: #{gru_block_forward.1} parent=51 // pred_check_branch
        %2308 = sbr.rel (%p2306) target = $region72
      $region71: #{gru_block_forward.1} parent=51 // pred_region
        _
      $region72: #{gru_block_forward.1} parent=51 // pred_fallthru
        _
      // Predicated region
      $region73: #{gru_block_forward.1} parent=51 // pred_check
        %p2309 = pneg %p304
      $region74: #{gru_block_forward.1} parent=51 // pred_check_branch
        %2311 = sbr.rel (%p2309) target = $region76
      $region75: #{gru_block_forward.1} parent=51 // pred_region
        %p2312 = scmp.lt.s32.totalorder %s26, 0
        %s2313 = scalar_select %p2312, %s26, 0
        %s2314 = smul.addr %s2313, 8
        %s2315 = scalar_lea.vmem %s10, %s2314
      $region76: #{gru_block_forward.1} parent=51 // pred_fallthru
        _
    $region52: #{gru_block_forward.1} parent=5 // pred_fallthru
      _
    %p2316 = scmp.le.s32.totalorder 2, %s17
    // Predicated region
    $region77: #{gru_block_forward.1} parent=5 // pred_check
      %p2317 = pneg %p2316
    $region78: #{gru_block_forward.1} parent=5 // pred_check_branch
      %2319 = sbr.rel (%p2317) target = $region80
    $region79: #{gru_block_forward.1} parent=5 // pred_region
      %s2320 = ssub.s32 %s17, 2
      // Predicated region
      $region81: #{gru_block_forward.1} parent=79 // pred_check
        %p2321 = pneg %p254
      $region82: #{gru_block_forward.1} parent=79 // pred_check_branch
        %2323 = sbr.rel (%p2321) target = $region84
      $region83: #{gru_block_forward.1} parent=79 // pred_region
        %s2324 = smul.u32 4, %s29
        %p2325 = scmp.lt.s32.totalorder %s2324, 7
        %s2326 = scalar_select %p2325, %s2324, 7
        %p2327 = scmp.lt.s32.totalorder %s28, 0
        %s2328 = scalar_select %p2327, %s28, 0
        %s2329 = sadd.s32 %s2328, %s2326
        %s2330 = smul.addr %s2329, 8
        %s2331 = scalar_lea.vmem %s8, %s2330
      $region84: #{gru_block_forward.1} parent=79 // pred_fallthru
        _
      // Predicated region
      $region85: #{gru_block_forward.1} parent=79 // pred_check
        %p2332 = pneg %p284
      $region86: #{gru_block_forward.1} parent=79 // pred_check_branch
        %2334 = sbr.rel (%p2332) target = $region88
      $region87: #{gru_block_forward.1} parent=79 // pred_region
        %s2335 = ssub.s32 1, %s29
        %s2336 = smul.u32 4, %s2335
        %p2337 = scmp.lt.s32.totalorder %s2336, 7
        %s2338 = scalar_select %p2337, %s2336, 7
        %p2339 = scmp.lt.s32.totalorder %s28, 0
        %s2340 = scalar_select %p2339, %s28, 0
        %s2341 = sadd.s32 %s2340, %s2338
        %s2342 = smul.addr %s2341, 8
        %s2343 = scalar_lea.vmem %s9, %s2342
      $region88: #{gru_block_forward.1} parent=79 // pred_fallthru
        _
    $region80: #{gru_block_forward.1} parent=5 // pred_fallthru
      _
  $region6: #{gru_block_forward.1} parent=0 // loop_footer
    %s21 = sadd.s32 1, %s17
  $region7: #{gru_block_forward.1} parent=0 // loop_footer_branch
    %16 = sbr.rel target = $region3
  $region8: #{gru_block_forward.1} parent=0 // loop_exit
    _

</llo_original>
